<compile_context>
chip_gen: v7x
topology: tpu7x:2x2x1
jax: 0.10.0
libtpu: 0.0.40
codegen_flags: <defaults>
</compile_context>

<pallas_src>
import jax
import jax.numpy as jnp
from jax.experimental import pallas as pl
from jax.experimental.pallas import tpu as pltpu

EPS = 1e-5  # nn.BatchNorm2d default eps


# ----------------------------- helpers -----------------------------
def _slabs_per_step(num_slabs, max_slabs=8, min_steps=4):
    """Largest divisor of num_slabs (<= max_slabs) that still leaves at least
    min_steps grid steps, so both v7x TensorCores get work on a parallel axis."""
    target_steps = min(min_steps, num_slabs)
    for c in range(min(max_slabs, num_slabs), 0, -1):
        if num_slabs % c == 0 and num_slabs // c >= target_steps:
            return c
    return 1


def fold_fc_params(params, extra_scale=1.0):
    """Fold eval-mode BN (and an optional positive constant scale) into the
    1x1-conv weight/bias.  Returns (W^T, b) laid out for the kernels:
      W^T: (Dout, Din),  b: (Dout, 1)."""
    w, b, gamma, beta, mean, var = params
    s = gamma * jax.lax.rsqrt(var + EPS)                 # (1, Dout)
    w_f = (w * s) * extra_scale                          # (Din, Dout)
    b_f = ((b - mean) * s + beta) * extra_scale          # (1, Dout)
    wt = jnp.transpose(w_f).astype(jnp.float32)          # (Dout, Din)
    b_col = jnp.transpose(b_f).astype(jnp.float32)       # (Dout, 1)
    return wt, b_col


# ------------------- FC for q/k/v: (B,T,N,Din) -> (B,T,Dout,N) -------------------
def fc_in_kernel(x_ref, wt_ref, b_ref, o_ref):
    # x_ref:  (tt, N, Din)   channels-last input slabs (natural layout)
    # wt_ref: (Dout, Din)    BN-folded, transposed weight
    # b_ref:  (Dout, 1)      BN-folded bias (column, broadcasts over lanes)
    # o_ref:  (tt, Dout, N)  channels-on-sublanes / nodes-on-lanes output
    wt = wt_ref[...]
    b = b_ref[...]
    for t in range(x_ref.shape[0]):                       # static unrolled loop
        x = x_ref[t].astype(jnp.float32)                  # (N, Din)
        z = jax.lax.dot_general(                          # W^T @ x^T -> (Dout, N)
            wt, x, (((1,), (1,)), ((), ())),
            preferred_element_type=jnp.float32)
        o_ref[t] = jnp.maximum(z + b, 0.0).astype(o_ref.dtype)


def fc_in_apply(x, wt, b, out_dtype=jnp.bfloat16):
    """relu(BN(x @ W + bias)) over the channel axis; output transposed to
    (B, T, Dout, N) so nodes sit on the lane dimension."""
    B, T, N, Din = x.shape
    Dout = wt.shape[0]
    BT = B * T
    tt = _slabs_per_step(BT)
    x3 = x.reshape(BT, N, Din)                            # free reshape
    out = pl.pallas_call(
        fc_in_kernel,
        out_shape=jax.ShapeDtypeStruct((BT, Dout, N), out_dtype),
        grid=(BT // tt,),
        in_specs=[
            pl.BlockSpec((tt, N, Din), lambda i: (i, 0, 0)),
            pl.BlockSpec((Dout, Din), lambda i: (0, 0)),
            pl.BlockSpec((Dout, 1), lambda i: (0, 0)),
        ],
        out_specs=pl.BlockSpec((tt, Dout, N), lambda i: (i, 0, 0)),
        compiler_params=pltpu.CompilerParams(dimension_semantics=("parallel",)),
    )(x3, wt, b)
    return out.reshape(B, T, Dout, N)


# ------------------- final FC: (B,T,Din,N) -> (B,T,N,Dout) -------------------
def fc_out_kernel(x_ref, wt_ref, b_ref, o_ref):
    # x_ref:  (tt, Din, N)   channels-on-sublanes input slabs
    # o_ref:  (tt, N, Dout)  channels-last output (module's native layout)
    wt = wt_ref[...]
    b = b_ref[...]
    for t in range(x_ref.shape[0]):
        x = x_ref[t].astype(jnp.float32)                  # (Din, N)
        z = jnp.dot(wt, x, preferred_element_type=jnp.float32)  # (Dout, N)
        z = jnp.maximum(z + b, 0.0)
        o_ref[t] = jnp.transpose(z).astype(o_ref.dtype)   # (N, Dout)


def fc_out_apply(x, wt, b, out_dtype=jnp.float32):
    B, T, Din, N = x.shape
    Dout = wt.shape[0]
    BT = B * T
    tt = _slabs_per_step(BT)
    x3 = x.reshape(BT, Din, N)
    out = pl.pallas_call(
        fc_out_kernel,
        out_shape=jax.ShapeDtypeStruct((BT, N, Dout), out_dtype),
        grid=(BT // tt,),
        in_specs=[
            pl.BlockSpec((tt, Din, N), lambda i: (i, 0, 0)),
            pl.BlockSpec((Dout, Din), lambda i: (0, 0)),
            pl.BlockSpec((Dout, 1), lambda i: (0, 0)),
        ],
        out_specs=pl.BlockSpec((tt, N, Dout), lambda i: (i, 0, 0)),
        compiler_params=pltpu.CompilerParams(dimension_semantics=("parallel",)),
    )(x3, wt, b)
    return out.reshape(B, T, N, Dout)


# ----------------------------- Attention core -----------------------------
def attn_kernel(q_ref, k_ref, v_ref, o_ref):
    # q_ref: (1, P, K, N);  k_ref/v_ref: (1, H, K, N);  o_ref: (1, P, K, N)
    # The 1/sqrt(d) scale is already folded into the q projection weights.
    q = q_ref[0].astype(jnp.float32)      # (P, K, N)
    key = k_ref[0].astype(jnp.float32)    # (H, K, N)
    val = v_ref[0].astype(jnp.float32)    # (H, K, N)
    # scores[p, h, n] = sum_k q[p, k, n] * key[h, k, n]   (lane-dense over N)
    s = jnp.sum(q[:, None, :, :] * key[None, :, :, :], axis=2)        # (P, H, N)
    # softmax over the history axis (numerically stable)
    s = s - jnp.max(s, axis=1, keepdims=True)
    e = jnp.exp(s)
    prob = e * pl.reciprocal(jnp.sum(e, axis=1, keepdims=True), approx=True)
    # out[p, k, n] = sum_h prob[p, h, n] * val[h, k, n]
    o = jnp.sum(prob[:, :, None, :] * val[None, :, :, :], axis=1)     # (P, K, N)
    o_ref[0] = o.astype(o_ref.dtype)


def attention_apply(q, k, v, K, out_dtype=jnp.bfloat16):
    """q: (B, P, D, N), k/v: (B, H, D, N) -> (B, P, D, N).
    Per-head attention over history; the head split (chunks of K channels) and
    the final head re-concat along channels are done by the BlockSpecs."""
    B, P, D, N = q.shape
    H = k.shape[1]
    if D % K != 0:
        raise ValueError("channel dim must be a multiple of head size K")
    if K % 8 != 0 and K != D:
        # TODO(synk): K not a multiple of the 8-sublane tile would need padding.
        raise ValueError("head size K must be a multiple of 8 (TPU sublane) or == D")
    nheads = D // K
    return pl.pallas_call(
        attn_kernel,
        out_shape=jax.ShapeDtypeStruct((B, P, D, N), out_dtype),
        grid=(B, nheads),
        in_specs=[
            pl.BlockSpec((1, P, K, N), lambda b, h: (b, 0, h, 0)),
            pl.BlockSpec((1, H, K, N), lambda b, h: (b, 0, h, 0)),
            pl.BlockSpec((1, H, K, N), lambda b, h: (b, 0, h, 0)),
        ],
        out_specs=pl.BlockSpec((1, P, K, N), lambda b, h: (b, 0, h, 0)),
        compiler_params=pltpu.CompilerParams(
            dimension_semantics=("parallel", "parallel")),
    )(q, k, v)


# ----------------------------- TransformAttention forward -----------------------------
def transform_attention(X, STE_his, STE_pred, params, K, d):
    """X, STE_his: (B, H, N, D);  STE_pred: (B, P, N, D);  D = K*d.
    Returns (B, P, N, D), matching the PyTorch module's forward."""
    scale = 1.0 / (float(d) ** 0.5)   # matches `attention /= self.d ** 0.5`

    # Fold eval-mode BN into the 1x1-conv weights; fold the attention scale
    # into FC_q (exact because relu is positively homogeneous).
    wq, bq = fold_fc_params(params["fc_q"], extra_scale=scale)
    wk, bk = fold_fc_params(params["fc_k"])
    wv, bv = fold_fc_params(params["fc_v"])
    wo, bo = fold_fc_params(params["fc_out"])

    # (B, T, N, D) -> (B, T, D, N): channels on sublanes, nodes on lanes.
    query = fc_in_apply(STE_pred, wq, bq)   # (B, P, D, N) bf16
    key = fc_in_apply(STE_his, wk, bk)      # (B, H, D, N) bf16
    value = fc_in_apply(X, wv, bv)          # (B, H, D, N) bf16

    # torch.cat(torch.split(., K, dim=-1), dim=0) + permutes + matmuls +
    # softmax + the final head re-concat — all inside one attention kernel,
    # with the head slicing expressed via BlockSpec index_maps.
    att = attention_apply(query, key, value, K)     # (B, P, D, N) bf16

    return fc_out_apply(att, wo, bo)                # (B, P, N, D) f32


# ----------------------------- Parameter init -----------------------------
def make_fc_params(key, d_in, d_out):
    # xavier_uniform_ for the 1x1 conv weight, zero bias, identity BN stats.
    bound = (6.0 / (d_in + d_out)) ** 0.5
    w = jax.random.uniform(key, (d_in, d_out), jnp.float32, -bound, bound)
    b = jnp.zeros((1, d_out), jnp.float32)
    gamma = jnp.ones((1, d_out), jnp.float32)
    beta = jnp.zeros((1, d_out), jnp.float32)
    mean = jnp.zeros((1, d_out), jnp.float32)
    var = jnp.ones((1, d_out), jnp.float32)
    return (w, b, gamma, beta, mean, var)


if __name__ == "__main__":
    K, d = 8, 4                 # D = K*d = 32 channels; d heads of size K
    D = K * d
    B, num_his, num_pred, N = 2, 8, 8, 128   # N sits on the lane axis

    root = jax.random.PRNGKey(0)
    kx, kh, kp, kq, kk, kv, ko = jax.random.split(root, 7)

    X = jax.random.normal(kx, (B, num_his, N, D), jnp.float32)
    STE_his = jax.random.normal(kh, (B, num_his, N, D), jnp.float32)
    STE_pred = jax.random.normal(kp, (B, num_pred, N, D), jnp.float32)

    params = {
        "fc_q": make_fc_params(kq, D, D),
        "fc_k": make_fc_params(kk, D, D),
        "fc_v": make_fc_params(kv, D, D),
        "fc_out": make_fc_params(ko, D, D),
    }

    fwd = jax.jit(transform_attention, static_argnames=("K", "d"))
    out = fwd(X, STE_his, STE_pred, params, K=K, d=d)
    out = jax.block_until_ready(out)
    assert out.shape == (B, num_pred, N, D), out.shape
    assert bool(jnp.all(jnp.isfinite(out)))
    print("KERNEL_OK")
</pallas_src>

<mosaic_0001>
module attributes {stable_mosaic.version = 11 : i64} {
  func.func @fc_in_kernel(%arg0: i32, %arg1: memref<4x128x32xf32, #tpu.memory_space<vmem>>, %arg2: memref<32x32xf32, #tpu.memory_space<vmem>>, %arg3: memref<32x1xf32, #tpu.memory_space<vmem>>, %arg4: memref<4x32x128xbf16, #tpu.memory_space<vmem>>) attributes {dimension_semantics = [#tpu.dimension_semantics<parallel>], iteration_bounds = array<i64: 4>, scalar_prefetch = 0 : i64, scratch_operands = 0 : i64, tpu.core_type = #tpu.core_type<tc>, window_params = [{transform_indices = @transform_0, window_bounds = array<i64: 4, 128, 32>}, {pipeline_mode = #tpu.pipeline_mode<synchronous>, transform_indices = @transform_1, window_bounds = array<i64: 32, 32>}, {pipeline_mode = #tpu.pipeline_mode<synchronous>, transform_indices = @transform_2, window_bounds = array<i64: 32, 1>}, {transform_indices = @transform_3, window_bounds = array<i64: 4, 32, 128>}]} {
    %c0 = arith.constant 0 : index
    %c0_0 = arith.constant 0 : index
    %0 = vector.load %arg2[%c0, %c0_0] : memref<32x32xf32, #tpu.memory_space<vmem>>, vector<32x32xf32>
    %c0_1 = arith.constant 0 : index
    %c0_2 = arith.constant 0 : index
    %1 = vector.load %arg3[%c0_1, %c0_2] : memref<32x1xf32, #tpu.memory_space<vmem>>, vector<32x1xf32>
    %c0_3 = arith.constant 0 : index
    %c0_4 = arith.constant 0 : index
    %c0_5 = arith.constant 0 : index
    %2 = vector.load %arg1[%c0_3, %c0_4, %c0_5] : memref<4x128x32xf32, #tpu.memory_space<vmem>>, vector<1x128x32xf32>
    %3 = vector.shape_cast %2 : vector<1x128x32xf32> to vector<128x32xf32>
    %cst = arith.constant dense<0.000000e+00> : vector<32x128xf32>
    %4 = tpu.matmul %0, %3, %cst {dimension_numbers = #tpu.dot_dimension_numbers<[1], [1], [0], [0], [0, 0, 1, 0], [], []>} : vector<32x32xf32>, vector<128x32xf32>, vector<32x128xf32> -> vector<32x128xf32>
    %5 = vector.broadcast %1 : vector<32x1xf32> to vector<32x128xf32>
    %6 = arith.addf %4, %5 : vector<32x128xf32>
    %cst_6 = arith.constant 0.000000e+00 : f32
    %7 = vector.broadcast %cst_6 : f32 to vector<32x128xf32>
    %8 = arith.maximumf %6, %7 : vector<32x128xf32>
    %9 = arith.truncf %8 : vector<32x128xf32> to vector<32x128xbf16>
    %c0_7 = arith.constant 0 : index
    %c0_8 = arith.constant 0 : index
    %c0_9 = arith.constant 0 : index
    %10 = vector.load %arg4[%c0_7, %c0_8, %c0_9] : memref<4x32x128xbf16, #tpu.memory_space<vmem>>, vector<1x32x128xbf16>
    %11 = vector.shape_cast %10 : vector<1x32x128xbf16> to vector<32x128xbf16>
    %12 = vector.shape_cast %9 : vector<32x128xbf16> to vector<1x32x128xbf16>
    tpu.vector_store %arg4[%c0_7, %c0_8, %c0_9], %12 {strides = array<i32>} : memref<4x32x128xbf16, #tpu.memory_space<vmem>>, vector<1x32x128xbf16>,
    %c1 = arith.constant 1 : index
    %c0_10 = arith.constant 0 : index
    %c0_11 = arith.constant 0 : index
    %13 = vector.load %arg1[%c1, %c0_10, %c0_11] : memref<4x128x32xf32, #tpu.memory_space<vmem>>, vector<1x128x32xf32>
    %14 = vector.shape_cast %13 : vector<1x128x32xf32> to vector<128x32xf32>
    %cst_12 = arith.constant dense<0.000000e+00> : vector<32x128xf32>
    %15 = tpu.matmul %0, %14, %cst_12 {dimension_numbers = #tpu.dot_dimension_numbers<[1], [1], [0], [0], [0, 0, 1, 0], [], []>} : vector<32x32xf32>, vector<128x32xf32>, vector<32x128xf32> -> vector<32x128xf32>
    %16 = vector.broadcast %1 : vector<32x1xf32> to vector<32x128xf32>
    %17 = arith.addf %15, %16 : vector<32x128xf32>
    %cst_13 = arith.constant 0.000000e+00 : f32
    %18 = vector.broadcast %cst_13 : f32 to vector<32x128xf32>
    %19 = arith.maximumf %17, %18 : vector<32x128xf32>
    %20 = arith.truncf %19 : vector<32x128xf32> to vector<32x128xbf16>
    %c1_14 = arith.constant 1 : index
    %c0_15 = arith.constant 0 : index
    %c0_16 = arith.constant 0 : index
    %21 = vector.load %arg4[%c1_14, %c0_15, %c0_16] : memref<4x32x128xbf16, #tpu.memory_space<vmem>>, vector<1x32x128xbf16>
    %22 = vector.shape_cast %21 : vector<1x32x128xbf16> to vector<32x128xbf16>
    %23 = vector.shape_cast %20 : vector<32x128xbf16> to vector<1x32x128xbf16>
    tpu.vector_store %arg4[%c1_14, %c0_15, %c0_16], %23 {strides = array<i32>} : memref<4x32x128xbf16, #tpu.memory_space<vmem>>, vector<1x32x128xbf16>,
    %c2 = arith.constant 2 : index
    %c0_17 = arith.constant 0 : index
    %c0_18 = arith.constant 0 : index
    %24 = vector.load %arg1[%c2, %c0_17, %c0_18] : memref<4x128x32xf32, #tpu.memory_space<vmem>>, vector<1x128x32xf32>
    %25 = vector.shape_cast %24 : vector<1x128x32xf32> to vector<128x32xf32>
    %cst_19 = arith.constant dense<0.000000e+00> : vector<32x128xf32>
    %26 = tpu.matmul %0, %25, %cst_19 {dimension_numbers = #tpu.dot_dimension_numbers<[1], [1], [0], [0], [0, 0, 1, 0], [], []>} : vector<32x32xf32>, vector<128x32xf32>, vector<32x128xf32> -> vector<32x128xf32>
    %27 = vector.broadcast %1 : vector<32x1xf32> to vector<32x128xf32>
    %28 = arith.addf %26, %27 : vector<32x128xf32>
    %cst_20 = arith.constant 0.000000e+00 : f32
    %29 = vector.broadcast %cst_20 : f32 to vector<32x128xf32>
    %30 = arith.maximumf %28, %29 : vector<32x128xf32>
    %31 = arith.truncf %30 : vector<32x128xf32> to vector<32x128xbf16>
    %c2_21 = arith.constant 2 : index
    %c0_22 = arith.constant 0 : index
    %c0_23 = arith.constant 0 : index
    %32 = vector.load %arg4[%c2_21, %c0_22, %c0_23] : memref<4x32x128xbf16, #tpu.memory_space<vmem>>, vector<1x32x128xbf16>
    %33 = vector.shape_cast %32 : vector<1x32x128xbf16> to vector<32x128xbf16>
    %34 = vector.shape_cast %31 : vector<32x128xbf16> to vector<1x32x128xbf16>
    tpu.vector_store %arg4[%c2_21, %c0_22, %c0_23], %34 {strides = array<i32>} : memref<4x32x128xbf16, #tpu.memory_space<vmem>>, vector<1x32x128xbf16>,
    %c3 = arith.constant 3 : index
    %c0_24 = arith.constant 0 : index
    %c0_25 = arith.constant 0 : index
    %35 = vector.load %arg1[%c3, %c0_24, %c0_25] : memref<4x128x32xf32, #tpu.memory_space<vmem>>, vector<1x128x32xf32>
    %36 = vector.shape_cast %35 : vector<1x128x32xf32> to vector<128x32xf32>
    %cst_26 = arith.constant dense<0.000000e+00> : vector<32x128xf32>
    %37 = tpu.matmul %0, %36, %cst_26 {dimension_numbers = #tpu.dot_dimension_numbers<[1], [1], [0], [0], [0, 0, 1, 0], [], []>} : vector<32x32xf32>, vector<128x32xf32>, vector<32x128xf32> -> vector<32x128xf32>
    %38 = vector.broadcast %1 : vector<32x1xf32> to vector<32x128xf32>
    %39 = arith.addf %37, %38 : vector<32x128xf32>
    %cst_27 = arith.constant 0.000000e+00 : f32
    %40 = vector.broadcast %cst_27 : f32 to vector<32x128xf32>
    %41 = arith.maximumf %39, %40 : vector<32x128xf32>
    %42 = arith.truncf %41 : vector<32x128xf32> to vector<32x128xbf16>
    %c3_28 = arith.constant 3 : index
    %c0_29 = arith.constant 0 : index
    %c0_30 = arith.constant 0 : index
    %43 = vector.load %arg4[%c3_28, %c0_29, %c0_30] : memref<4x32x128xbf16, #tpu.memory_space<vmem>>, vector<1x32x128xbf16>
    %44 = vector.shape_cast %43 : vector<1x32x128xbf16> to vector<32x128xbf16>
    %45 = vector.shape_cast %42 : vector<32x128xbf16> to vector<1x32x128xbf16>
    tpu.vector_store %arg4[%c3_28, %c0_29, %c0_30], %45 {strides = array<i32>} : memref<4x32x128xbf16, #tpu.memory_space<vmem>>, vector<1x32x128xbf16>,
    return
  }
  func.func @transform_0(%arg0: i32) -> (i32, i32, i32) {
    %c0_i32 = arith.constant 0 : i32
    %c0_i32_0 = arith.constant 0 : i32
    %c0_i32_1 = arith.constant 0 : i32
    return %arg0, %c0_i32, %c0_i32_0 : i32, i32, i32
  }
  func.func @transform_1(%arg0: i32) -> (i32, i32) {
    %c0_i32 = arith.constant 0 : i32
    %c0_i32_0 = arith.constant 0 : i32
    %c0_i32_1 = arith.constant 0 : i32
    return %c0_i32, %c0_i32_0 : i32, i32
  }
  func.func @transform_2(%arg0: i32) -> (i32, i32) {
    %c0_i32 = arith.constant 0 : i32
    %c0_i32_0 = arith.constant 0 : i32
    %c0_i32_1 = arith.constant 0 : i32
    return %c0_i32, %c0_i32_0 : i32, i32
  }
  func.func @transform_3(%arg0: i32) -> (i32, i32, i32) {
    %c0_i32 = arith.constant 0 : i32
    %c0_i32_0 = arith.constant 0 : i32
    %c0_i32_1 = arith.constant 0 : i32
    return %arg0, %c0_i32, %c0_i32_0 : i32, i32, i32
  }
}

module attributes {stable_mosaic.version = 11 : i64} {
  func.func @attn_kernel(%arg0: i32, %arg1: i32, %arg2: memref<1x8x8x128xbf16, #tpu.memory_space<vmem>>, %arg3: memref<1x8x8x128xbf16, #tpu.memory_space<vmem>>, %arg4: memref<1x8x8x128xbf16, #tpu.memory_space<vmem>>, %arg5: memref<1x8x8x128xbf16, #tpu.memory_space<vmem>>) attributes {dimension_semantics = [#tpu.dimension_semantics<parallel>, #tpu.dimension_semantics<parallel>], iteration_bounds = array<i64: 2, 4>, scalar_prefetch = 0 : i64, scratch_operands = 0 : i64, tpu.core_type = #tpu.core_type<tc>, window_params = [{transform_indices = @transform_0, window_bounds = array<i64: 1, 8, 8, 128>}, {transform_indices = @transform_1, window_bounds = array<i64: 1, 8, 8, 128>}, {transform_indices = @transform_2, window_bounds = array<i64: 1, 8, 8, 128>}, {transform_indices = @transform_3, window_bounds = array<i64: 1, 8, 8, 128>}]} {
    %c0 = arith.constant 0 : index
    %c0_0 = arith.constant 0 : index
    %c0_1 = arith.constant 0 : index
    %c0_2 = arith.constant 0 : index
    %0 = vector.load %arg2[%c0, %c0_0, %c0_1, %c0_2] : memref<1x8x8x128xbf16, #tpu.memory_space<vmem>>, vector<1x8x8x128xbf16>
    %1 = vector.shape_cast %0 : vector<1x8x8x128xbf16> to vector<8x8x128xbf16>
    %2 = arith.extf %1 : vector<8x8x128xbf16> to vector<8x8x128xf32>
    %c0_3 = arith.constant 0 : index
    %c0_4 = arith.constant 0 : index
    %c0_5 = arith.constant 0 : index
    %c0_6 = arith.constant 0 : index
    %3 = vector.load %arg3[%c0_3, %c0_4, %c0_5, %c0_6] : memref<1x8x8x128xbf16, #tpu.memory_space<vmem>>, vector<1x8x8x128xbf16>
    %4 = vector.shape_cast %3 : vector<1x8x8x128xbf16> to vector<8x8x128xbf16>
    %5 = arith.extf %4 : vector<8x8x128xbf16> to vector<8x8x128xf32>
    %c0_7 = arith.constant 0 : index
    %c0_8 = arith.constant 0 : index
    %c0_9 = arith.constant 0 : index
    %c0_10 = arith.constant 0 : index
    %6 = vector.load %arg4[%c0_7, %c0_8, %c0_9, %c0_10] : memref<1x8x8x128xbf16, #tpu.memory_space<vmem>>, vector<1x8x8x128xbf16>
    %7 = vector.shape_cast %6 : vector<1x8x8x128xbf16> to vector<8x8x128xbf16>
    %8 = arith.extf %7 : vector<8x8x128xbf16> to vector<8x8x128xf32>
    %9 = vector.shape_cast %2 : vector<8x8x128xf32> to vector<8x1x8x128xf32>
    %10 = vector.shape_cast %5 : vector<8x8x128xf32> to vector<1x8x8x128xf32>
    %11 = vector.broadcast %9 : vector<8x1x8x128xf32> to vector<8x8x8x128xf32>
    %12 = vector.broadcast %10 : vector<1x8x8x128xf32> to vector<8x8x8x128xf32>
    %13 = arith.mulf %11, %12 : vector<8x8x8x128xf32>
    %cst = arith.constant dense<0.000000e+00> : vector<8x8x128xf32>
    %14 = vector.multi_reduction <add>, %13, %cst [2] : vector<8x8x8x128xf32> to vector<8x8x128xf32>
    %cst_11 = arith.constant dense<0xFF800000> : vector<8x128xf32>
    %15 = vector.multi_reduction <maximumf>, %14, %cst_11 [1] : vector<8x8x128xf32> to vector<8x128xf32>
    %16 = vector.shape_cast %15 : vector<8x128xf32> to vector<8x1x128xf32>
    %17 = vector.broadcast %16 : vector<8x1x128xf32> to vector<8x8x128xf32>
    %18 = arith.subf %14, %17 : vector<8x8x128xf32>
    %19 = math.exp %18 : vector<8x8x128xf32>
    %cst_12 = arith.constant dense<0.000000e+00> : vector<8x128xf32>
    %20 = vector.multi_reduction <add>, %19, %cst_12 [1] : vector<8x8x128xf32> to vector<8x128xf32>
    %21 = vector.shape_cast %20 : vector<8x128xf32> to vector<8x1x128xf32>
    %22 = tpu.reciprocal %21 {approx = true} : vector<8x1x128xf32> -> vector<8x1x128xf32>
    %23 = vector.broadcast %22 : vector<8x1x128xf32> to vector<8x8x128xf32>
    %24 = arith.mulf %19, %23 : vector<8x8x128xf32>
    %25 = vector.shape_cast %24 : vector<8x8x128xf32> to vector<8x8x1x128xf32>
    %26 = vector.shape_cast %8 : vector<8x8x128xf32> to vector<1x8x8x128xf32>
    %27 = vector.broadcast %25 : vector<8x8x1x128xf32> to vector<8x8x8x128xf32>
    %28 = vector.broadcast %26 : vector<1x8x8x128xf32> to vector<8x8x8x128xf32>
    %29 = arith.mulf %27, %28 : vector<8x8x8x128xf32>
    %cst_13 = arith.constant dense<0.000000e+00> : vector<8x8x128xf32>
    %30 = vector.multi_reduction <add>, %29, %cst_13 [1] : vector<8x8x8x128xf32> to vector<8x8x128xf32>
    %31 = arith.truncf %30 : vector<8x8x128xf32> to vector<8x8x128xbf16>
    %c0_14 = arith.constant 0 : index
    %c0_15 = arith.constant 0 : index
    %c0_16 = arith.constant 0 : index
    %c0_17 = arith.constant 0 : index
    %32 = vector.load %arg5[%c0_14, %c0_15, %c0_16, %c0_17] : memref<1x8x8x128xbf16, #tpu.memory_space<vmem>>, vector<1x8x8x128xbf16>
    %33 = vector.shape_cast %32 : vector<1x8x8x128xbf16> to vector<8x8x128xbf16>
    %34 = vector.shape_cast %31 : vector<8x8x128xbf16> to vector<1x8x8x128xbf16>
    tpu.vector_store %arg5[%c0_14, %c0_15, %c0_16, %c0_17], %34 {strides = array<i32>} : memref<1x8x8x128xbf16, #tpu.memory_space<vmem>>, vector<1x8x8x128xbf16>,
    return
  }
  func.func @transform_0(%arg0: i32, %arg1: i32) -> (i32, i32, i32, i32) {
    %c0_i32 = arith.constant 0 : i32
    %c0_i32_0 = arith.constant 0 : i32
    %c0_i32_1 = arith.constant 0 : i32
    return %arg0, %c0_i32, %arg1, %c0_i32_0 : i32, i32, i32, i32
  }
  func.func @transform_1(%arg0: i32, %arg1: i32) -> (i32, i32, i32, i32) {
    %c0_i32 = arith.constant 0 : i32
    %c0_i32_0 = arith.constant 0 : i32
    %c0_i32_1 = arith.constant 0 : i32
    return %arg0, %c0_i32, %arg1, %c0_i32_0 : i32, i32, i32, i32
  }
  func.func @transform_2(%arg0: i32, %arg1: i32) -> (i32, i32, i32, i32) {
    %c0_i32 = arith.constant 0 : i32
    %c0_i32_0 = arith.constant 0 : i32
    %c0_i32_1 = arith.constant 0 : i32
    return %arg0, %c0_i32, %arg1, %c0_i32_0 : i32, i32, i32, i32
  }
  func.func @transform_3(%arg0: i32, %arg1: i32) -> (i32, i32, i32, i32) {
    %c0_i32 = arith.constant 0 : i32
    %c0_i32_0 = arith.constant 0 : i32
    %c0_i32_1 = arith.constant 0 : i32
    return %arg0, %c0_i32, %arg1, %c0_i32_0 : i32, i32, i32, i32
  }
}

module attributes {stable_mosaic.version = 11 : i64} {
  func.func @fc_out_kernel(%arg0: i32, %arg1: memref<4x32x128xbf16, #tpu.memory_space<vmem>>, %arg2: memref<32x32xf32, #tpu.memory_space<vmem>>, %arg3: memref<32x1xf32, #tpu.memory_space<vmem>>, %arg4: memref<4x128x32xf32, #tpu.memory_space<vmem>>) attributes {dimension_semantics = [#tpu.dimension_semantics<parallel>], iteration_bounds = array<i64: 4>, scalar_prefetch = 0 : i64, scratch_operands = 0 : i64, tpu.core_type = #tpu.core_type<tc>, window_params = [{transform_indices = @transform_0, window_bounds = array<i64: 4, 32, 128>}, {pipeline_mode = #tpu.pipeline_mode<synchronous>, transform_indices = @transform_1, window_bounds = array<i64: 32, 32>}, {pipeline_mode = #tpu.pipeline_mode<synchronous>, transform_indices = @transform_2, window_bounds = array<i64: 32, 1>}, {transform_indices = @transform_3, window_bounds = array<i64: 4, 128, 32>}]} {
    %c0 = arith.constant 0 : index
    %c0_0 = arith.constant 0 : index
    %0 = vector.load %arg2[%c0, %c0_0] : memref<32x32xf32, #tpu.memory_space<vmem>>, vector<32x32xf32>
    %c0_1 = arith.constant 0 : index
    %c0_2 = arith.constant 0 : index
    %1 = vector.load %arg3[%c0_1, %c0_2] : memref<32x1xf32, #tpu.memory_space<vmem>>, vector<32x1xf32>
    %c0_3 = arith.constant 0 : index
    %c0_4 = arith.constant 0 : index
    %c0_5 = arith.constant 0 : index
    %2 = vector.load %arg1[%c0_3, %c0_4, %c0_5] : memref<4x32x128xbf16, #tpu.memory_space<vmem>>, vector<1x32x128xbf16>
    %3 = vector.shape_cast %2 : vector<1x32x128xbf16> to vector<32x128xbf16>
    %4 = arith.extf %3 : vector<32x128xbf16> to vector<32x128xf32>
    %cst = arith.constant dense<0.000000e+00> : vector<32x128xf32>
    %5 = tpu.matmul %0, %4, %cst {dimension_numbers = #tpu.dot_dimension_numbers<[1], [0], [0], [1], [0, 0, 1, 1], [], []>} : vector<32x32xf32>, vector<32x128xf32>, vector<32x128xf32> -> vector<32x128xf32>
    %6 = vector.broadcast %1 : vector<32x1xf32> to vector<32x128xf32>
    %7 = arith.addf %5, %6 : vector<32x128xf32>
    %cst_6 = arith.constant 0.000000e+00 : f32
    %8 = vector.broadcast %cst_6 : f32 to vector<32x128xf32>
    %9 = arith.maximumf %7, %8 : vector<32x128xf32>
    %10 = tpu.transpose %9, [1, 0] : vector<32x128xf32> -> vector<128x32xf32>
    %c0_7 = arith.constant 0 : index
    %c0_8 = arith.constant 0 : index
    %c0_9 = arith.constant 0 : index
    %11 = vector.load %arg4[%c0_7, %c0_8, %c0_9] : memref<4x128x32xf32, #tpu.memory_space<vmem>>, vector<1x128x32xf32>
    %12 = vector.shape_cast %11 : vector<1x128x32xf32> to vector<128x32xf32>
    %13 = vector.shape_cast %10 : vector<128x32xf32> to vector<1x128x32xf32>
    tpu.vector_store %arg4[%c0_7, %c0_8, %c0_9], %13 {strides = array<i32>} : memref<4x128x32xf32, #tpu.memory_space<vmem>>, vector<1x128x32xf32>,
    %c1 = arith.constant 1 : index
    %c0_10 = arith.constant 0 : index
    %c0_11 = arith.constant 0 : index
    %14 = vector.load %arg1[%c1, %c0_10, %c0_11] : memref<4x32x128xbf16, #tpu.memory_space<vmem>>, vector<1x32x128xbf16>
    %15 = vector.shape_cast %14 : vector<1x32x128xbf16> to vector<32x128xbf16>
    %16 = arith.extf %15 : vector<32x128xbf16> to vector<32x128xf32>
    %cst_12 = arith.constant dense<0.000000e+00> : vector<32x128xf32>
    %17 = tpu.matmul %0, %16, %cst_12 {dimension_numbers = #tpu.dot_dimension_numbers<[1], [0], [0], [1], [0, 0, 1, 1], [], []>} : vector<32x32xf32>, vector<32x128xf32>, vector<32x128xf32> -> vector<32x128xf32>
    %18 = vector.broadcast %1 : vector<32x1xf32> to vector<32x128xf32>
    %19 = arith.addf %17, %18 : vector<32x128xf32>
    %cst_13 = arith.constant 0.000000e+00 : f32
    %20 = vector.broadcast %cst_13 : f32 to vector<32x128xf32>
    %21 = arith.maximumf %19, %20 : vector<32x128xf32>
    %22 = tpu.transpose %21, [1, 0] : vector<32x128xf32> -> vector<128x32xf32>
    %c1_14 = arith.constant 1 : index
    %c0_15 = arith.constant 0 : index
    %c0_16 = arith.constant 0 : index
    %23 = vector.load %arg4[%c1_14, %c0_15, %c0_16] : memref<4x128x32xf32, #tpu.memory_space<vmem>>, vector<1x128x32xf32>
    %24 = vector.shape_cast %23 : vector<1x128x32xf32> to vector<128x32xf32>
    %25 = vector.shape_cast %22 : vector<128x32xf32> to vector<1x128x32xf32>
    tpu.vector_store %arg4[%c1_14, %c0_15, %c0_16], %25 {strides = array<i32>} : memref<4x128x32xf32, #tpu.memory_space<vmem>>, vector<1x128x32xf32>,
    %c2 = arith.constant 2 : index
    %c0_17 = arith.constant 0 : index
    %c0_18 = arith.constant 0 : index
    %26 = vector.load %arg1[%c2, %c0_17, %c0_18] : memref<4x32x128xbf16, #tpu.memory_space<vmem>>, vector<1x32x128xbf16>
    %27 = vector.shape_cast %26 : vector<1x32x128xbf16> to vector<32x128xbf16>
    %28 = arith.extf %27 : vector<32x128xbf16> to vector<32x128xf32>
    %cst_19 = arith.constant dense<0.000000e+00> : vector<32x128xf32>
    %29 = tpu.matmul %0, %28, %cst_19 {dimension_numbers = #tpu.dot_dimension_numbers<[1], [0], [0], [1], [0, 0, 1, 1], [], []>} : vector<32x32xf32>, vector<32x128xf32>, vector<32x128xf32> -> vector<32x128xf32>
    %30 = vector.broadcast %1 : vector<32x1xf32> to vector<32x128xf32>
    %31 = arith.addf %29, %30 : vector<32x128xf32>
    %cst_20 = arith.constant 0.000000e+00 : f32
    %32 = vector.broadcast %cst_20 : f32 to vector<32x128xf32>
    %33 = arith.maximumf %31, %32 : vector<32x128xf32>
    %34 = tpu.transpose %33, [1, 0] : vector<32x128xf32> -> vector<128x32xf32>
    %c2_21 = arith.constant 2 : index
    %c0_22 = arith.constant 0 : index
    %c0_23 = arith.constant 0 : index
    %35 = vector.load %arg4[%c2_21, %c0_22, %c0_23] : memref<4x128x32xf32, #tpu.memory_space<vmem>>, vector<1x128x32xf32>
    %36 = vector.shape_cast %35 : vector<1x128x32xf32> to vector<128x32xf32>
    %37 = vector.shape_cast %34 : vector<128x32xf32> to vector<1x128x32xf32>
    tpu.vector_store %arg4[%c2_21, %c0_22, %c0_23], %37 {strides = array<i32>} : memref<4x128x32xf32, #tpu.memory_space<vmem>>, vector<1x128x32xf32>,
    %c3 = arith.constant 3 : index
    %c0_24 = arith.constant 0 : index
    %c0_25 = arith.constant 0 : index
    %38 = vector.load %arg1[%c3, %c0_24, %c0_25] : memref<4x32x128xbf16, #tpu.memory_space<vmem>>, vector<1x32x128xbf16>
    %39 = vector.shape_cast %38 : vector<1x32x128xbf16> to vector<32x128xbf16>
    %40 = arith.extf %39 : vector<32x128xbf16> to vector<32x128xf32>
    %cst_26 = arith.constant dense<0.000000e+00> : vector<32x128xf32>
    %41 = tpu.matmul %0, %40, %cst_26 {dimension_numbers = #tpu.dot_dimension_numbers<[1], [0], [0], [1], [0, 0, 1, 1], [], []>} : vector<32x32xf32>, vector<32x128xf32>, vector<32x128xf32> -> vector<32x128xf32>
    %42 = vector.broadcast %1 : vector<32x1xf32> to vector<32x128xf32>
    %43 = arith.addf %41, %42 : vector<32x128xf32>
    %cst_27 = arith.constant 0.000000e+00 : f32
    %44 = vector.broadcast %cst_27 : f32 to vector<32x128xf32>
    %45 = arith.maximumf %43, %44 : vector<32x128xf32>
    %46 = tpu.transpose %45, [1, 0] : vector<32x128xf32> -> vector<128x32xf32>
    %c3_28 = arith.constant 3 : index
    %c0_29 = arith.constant 0 : index
    %c0_30 = arith.constant 0 : index
    %47 = vector.load %arg4[%c3_28, %c0_29, %c0_30] : memref<4x128x32xf32, #tpu.memory_space<vmem>>, vector<1x128x32xf32>
    %48 = vector.shape_cast %47 : vector<1x128x32xf32> to vector<128x32xf32>
    %49 = vector.shape_cast %46 : vector<128x32xf32> to vector<1x128x32xf32>
    tpu.vector_store %arg4[%c3_28, %c0_29, %c0_30], %49 {strides = array<i32>} : memref<4x128x32xf32, #tpu.memory_space<vmem>>, vector<1x128x32xf32>,
    return
  }
  func.func @transform_0(%arg0: i32) -> (i32, i32, i32) {
    %c0_i32 = arith.constant 0 : i32
    %c0_i32_0 = arith.constant 0 : i32
    %c0_i32_1 = arith.constant 0 : i32
    return %arg0, %c0_i32, %c0_i32_0 : i32, i32, i32
  }
  func.func @transform_1(%arg0: i32) -> (i32, i32) {
    %c0_i32 = arith.constant 0 : i32
    %c0_i32_0 = arith.constant 0 : i32
    %c0_i32_1 = arith.constant 0 : i32
    return %c0_i32, %c0_i32_0 : i32, i32
  }
  func.func @transform_2(%arg0: i32) -> (i32, i32) {
    %c0_i32 = arith.constant 0 : i32
    %c0_i32_0 = arith.constant 0 : i32
    %c0_i32_1 = arith.constant 0 : i32
    return %c0_i32, %c0_i32_0 : i32, i32
  }
  func.func @transform_3(%arg0: i32) -> (i32, i32, i32) {
    %c0_i32 = arith.constant 0 : i32
    %c0_i32_0 = arith.constant 0 : i32
    %c0_i32_1 = arith.constant 0 : i32
    return %arg0, %c0_i32, %c0_i32_0 : i32, i32, i32
  }
}

</mosaic_0001>

<llo_original>
// kernel: transform_attention.8
$region0: #{transform_attention.8}
  #allocation0 [shape = 'u32[]', space=smem, size = 0x4, offset = 0x4, fixed_abs, tag = 'smem constant byte address 0x4 - core index']
  #allocation1 [shape = 'u32[144,128]{1,0:T(1,128)}', space=vmem, size = 0x12000, scoped, tag = 'internal scratch']
  %s0 = inlined_call_operand.vmem [shape: bf16[2,8,32,128], index: 0, kind: input, shape index: {}]
  %s1 = inlined_call_operand.vmem [shape: bf16[2,8,32,128], index: 1, kind: input, shape index: {}]
  %s2 = inlined_call_operand.vmem [shape: bf16[2,8,32,128], index: 2, kind: input, shape index: {}]
  %s3 = inlined_call_operand.vmem [shape: bf16[2,8,32,128], index: 3, kind: output, shape index: {}]
  %s4 = sld [smem:[#allocation0]]
  $region205: #{transform_attention.8} parent=0
    _
  %s6 = ssub.s32 1, %s4
  %s7 = scalar_select 0, %s6, %s4
  $region1: #{transform_attention.8} parent=0
    #allocation2 [shape = 'u8[32768]{0}', space=vmem, size = 0x8000, scoped, tag = 'input window, operand 0']
    #allocation3 [shape = 'u8[32768]{0}', space=vmem, size = 0x8000, scoped, tag = 'input window, operand 1']
    #allocation4 [shape = 'u8[32768]{0}', space=vmem, size = 0x8000, scoped, tag = 'input window, operand 2']
    #allocation5 [shape = 'u8[32768]{0}', space=vmem, size = 0x8000, scoped, tag = 'output window, operand 0']
    loop: start=0, step=1, limit=10
    $region2: #{transform_attention.8} parent=1 // loop_pre_header
      _
    $region3: #{transform_attention.8} parent=1 // loop_header
      %s9 = sphi 0, %s13
      %p10 = scmp.ge.s32.totalorder %s9, 10
      %s16 = sphi 0, %s28
      %s17 = sphi 0, %s24
      %s18 = sphi 0, %s16
      %s19 = sphi 0, %s17
      %s20 = sphi 0, %s18
      %s21 = sphi 0, %s19
      %s33 = sphi 0, %s35
      %s36 = sphi 0, %s33
      %s37 = sphi 0, %s36
      %s53 = sphi 0, %s37
      %s61 = sphi 0, %s63
      %s64 = sphi 0, %s61
      %s65 = sphi 0, %s64
      %s81 = sphi 0, %s65
      %s89 = sphi 0, %s91
      %s92 = sphi 0, %s89
      %s93 = sphi 0, %s92
      %s109 = sphi 0, %s93
      %s117 = sphi 0, %s119
      %s120 = sphi 0, %s117
      %s121 = sphi 0, %s120
      %s137 = sphi 0, %s121
    $region4: #{transform_attention.8} parent=1 // loop_header_branch
      %12 = sbr.rel (%p10) target = $region8
    $region5: #{transform_attention.8} parent=1 // loop_body
      %s14 = ssub.s32 %s9, 1
      %s15 = ssub.s32 %s9, 2
      %s22 = sadd.s32 1, %s17
      %p23 = scmp.ge.s32.totalorder %s22, 4
      %s24 = scalar_select %p23, 0, %s22
      %s25 = sadd.s32 1, %s16
      %s26 = scalar_select %p23, %s25, %s16
      %p27 = scmp.ge.s32.totalorder %s26, 2
      %s28 = scalar_select %p27, 0, %s26
      %s29 = ssub.s32 %s16, %s28
      %s30 = ssub.s32 %s17, %s24
      %s31 = sor.u32 %s29, %s30
      %p32 = scmp.eq.s32.totalorder %s31, 0
      %s34 = sadd.s32 %s33, 1
      %s35 = scalar_select %p32, %s33, %s34
      %p38 = pneg %p32
      %p39 = scmp.eq.s32.totalorder %s9, 7
      %p40 = por %p38, %p39
      %p41 = scmp.ne.s32.totalorder %s33, %s36
      %p42 = scmp.eq.s32.totalorder %s9, 0
      %p43 = por %p41, %p42
      %p44 = scmp.ne.s32.totalorder %s33, %s36
      %p45 = scmp.eq.s32.totalorder %s14, 7
      %p46 = por %p44, %p45
      %p47 = scmp.ne.s32.totalorder %s36, %s37
      %p48 = scmp.eq.s32.totalorder %s14, 0
      %p49 = por %p47, %p48
      %p50 = scmp.ne.s32.totalorder %s36, %s37
      %p51 = scmp.eq.s32.totalorder %s15, 7
      %p52 = por %p50, %p51
      %p54 = scmp.ne.s32.totalorder %s37, %s53
      %p55 = scmp.eq.s32.totalorder %s15, 0
      %p56 = por %p54, %p55
      %s57 = ssub.s32 %s16, %s28
      %s58 = ssub.s32 %s17, %s24
      %s59 = sor.u32 %s57, %s58
      %p60 = scmp.eq.s32.totalorder %s59, 0
      %s62 = sadd.s32 %s61, 1
      %s63 = scalar_select %p60, %s61, %s62
      %p66 = pneg %p60
      %p67 = scmp.eq.s32.totalorder %s9, 7
      %p68 = por %p66, %p67
      %p69 = scmp.ne.s32.totalorder %s61, %s64
      %p70 = scmp.eq.s32.totalorder %s9, 0
      %p71 = por %p69, %p70
      %p72 = scmp.ne.s32.totalorder %s61, %s64
      %p73 = scmp.eq.s32.totalorder %s14, 7
      %p74 = por %p72, %p73
      %p75 = scmp.ne.s32.totalorder %s64, %s65
      %p76 = scmp.eq.s32.totalorder %s14, 0
      %p77 = por %p75, %p76
      %p78 = scmp.ne.s32.totalorder %s64, %s65
      %p79 = scmp.eq.s32.totalorder %s15, 7
      %p80 = por %p78, %p79
      %p82 = scmp.ne.s32.totalorder %s65, %s81
      %p83 = scmp.eq.s32.totalorder %s15, 0
      %p84 = por %p82, %p83
      %s85 = ssub.s32 %s16, %s28
      %s86 = ssub.s32 %s17, %s24
      %s87 = sor.u32 %s85, %s86
      %p88 = scmp.eq.s32.totalorder %s87, 0
      %s90 = sadd.s32 %s89, 1
      %s91 = scalar_select %p88, %s89, %s90
      %p94 = pneg %p88
      %p95 = scmp.eq.s32.totalorder %s9, 7
      %p96 = por %p94, %p95
      %p97 = scmp.ne.s32.totalorder %s89, %s92
      %p98 = scmp.eq.s32.totalorder %s9, 0
      %p99 = por %p97, %p98
      %p100 = scmp.ne.s32.totalorder %s89, %s92
      %p101 = scmp.eq.s32.totalorder %s14, 7
      %p102 = por %p100, %p101
      %p103 = scmp.ne.s32.totalorder %s92, %s93
      %p104 = scmp.eq.s32.totalorder %s14, 0
      %p105 = por %p103, %p104
      %p106 = scmp.ne.s32.totalorder %s92, %s93
      %p107 = scmp.eq.s32.totalorder %s15, 7
      %p108 = por %p106, %p107
      %p110 = scmp.ne.s32.totalorder %s93, %s109
      %p111 = scmp.eq.s32.totalorder %s15, 0
      %p112 = por %p110, %p111
      %s113 = ssub.s32 %s16, %s28
      %s114 = ssub.s32 %s17, %s24
      %s115 = sor.u32 %s113, %s114
      %p116 = scmp.eq.s32.totalorder %s115, 0
      %s118 = sadd.s32 %s117, 1
      %s119 = scalar_select %p116, %s117, %s118
      %p122 = pneg %p116
      %p123 = scmp.eq.s32.totalorder %s9, 7
      %p124 = por %p122, %p123
      %p125 = scmp.ne.s32.totalorder %s117, %s120
      %p126 = scmp.eq.s32.totalorder %s9, 0
      %p127 = por %p125, %p126
      %p128 = scmp.ne.s32.totalorder %s117, %s120
      %p129 = scmp.eq.s32.totalorder %s14, 7
      %p130 = por %p128, %p129
      %p131 = scmp.ne.s32.totalorder %s120, %s121
      %p132 = scmp.eq.s32.totalorder %s14, 0
      %p133 = por %p131, %p132
      %p134 = scmp.ne.s32.totalorder %s120, %s121
      %p135 = scmp.eq.s32.totalorder %s15, 7
      %p136 = por %p134, %p135
      %p138 = scmp.ne.s32.totalorder %s121, %s137
      %p139 = scmp.eq.s32.totalorder %s15, 0
      %p140 = por %p138, %p139
      %p141 = scmp.le.s32.totalorder 1, %s9
      %p142 = scmp.lt.s32.totalorder %s9, 9
      %p143 = pnand %p141, %p142
      %p144 = pneg %p143
      // Predicated region
      $region9: #{transform_attention.8} parent=5 // pred_check
        _
      $region10: #{transform_attention.8} parent=5 // pred_check_branch
        %146 = sbr.rel (%p143) target = $region12
      $region11: #{transform_attention.8} parent=5 // pred_region
        %s147 = ssub.s32 %s9, 1
      $region12: #{transform_attention.8} parent=5 // pred_fallthru
        _
      %p148 = scmp.lt.s32.totalorder %s9, 8
      // Predicated region
      $region13: #{transform_attention.8} parent=5 // pred_check
        %p149 = pneg %p148
      $region14: #{transform_attention.8} parent=5 // pred_check_branch
        %151 = sbr.rel (%p149) target = $region16
      $region15: #{transform_attention.8} parent=5 // pred_region
        // Predicated region
        $region17: #{transform_attention.8} parent=15 // pred_check
          %p152 = pneg %p43
        $region18: #{transform_attention.8} parent=15 // pred_check_branch
          %154 = sbr.rel (%p152) target = $region20
        $region19: #{transform_attention.8} parent=15 // pred_region
          %s155 = sand.u32 %s33, 1
          %s156 = sand.u32 %s33, 1
          %s157 = smul.addr %s156, 32
          %s158 = scalar_lea.vmem [#allocation2], %s157
          %s159 = smul.addr %s16, 32
          %s160 = sadd.s32 %s17, %s159
          %s161 = smul.addr %s160, 4
          %s162 = scalar_lea.vmem %s0, %s161
          // Predicated region
          $region21: #{transform_attention.8} parent=19 // pred_check
            _
          $region22: #{transform_attention.8} parent=19 // pred_check_branch
            %164 = sbr.rel (0) target = $region24
          $region23: #{transform_attention.8} parent=19 // pred_region
            // Predicated region
            $region25: #{transform_attention.8} parent=23 // pred_check
              _
            $region26: #{transform_attention.8} parent=23 // pred_check_branch
              %166 = sbr.rel target = $region28
            $region27: #{transform_attention.8} parent=23 // pred_region
              // Predicated region
              $region40: #{transform_attention.8} parent=27 // pred_check
                _
              $region41: #{transform_attention.8} parent=27 // pred_check_branch
                %195 = sbr.rel (0) target = $region43
              $region42: #{transform_attention.8} parent=27 // pred_region
                loop: start=0, step=1, limit=1
                $region44: #{transform_attention.8} parent=42 // loop_pre_header
                  _
                $region45: #{transform_attention.8} parent=42 // loop_header
                  %s197 = sphi 0, %s201
                  %p198 = scmp.ge.s32.totalorder %s197, 1
                  %s202 = sphi %s162, %s162
                  %s203 = sphi %s158, %s158
                $region46: #{transform_attention.8} parent=42 // loop_header_branch
                  %200 = sbr.rel (%p198) target = $region50
                $region47: #{transform_attention.8} parent=42 // loop_body
                  _
                $region48: #{transform_attention.8} parent=42 // loop_footer
                  %s201 = sadd.s32 1, %s197
                $region49: #{transform_attention.8} parent=42 // loop_footer_branch
                  %196 = sbr.rel target = $region45
                $region50: #{transform_attention.8} parent=42 // loop_exit
                  _
                loop: start=0, step=1, limit=1
                $region51: #{transform_attention.8} parent=42 // loop_pre_header
                  _
                $region52: #{transform_attention.8} parent=42 // loop_header
                  %s206 = sphi 0, %s210
                  %p207 = scmp.ge.s32.totalorder %s206, 1
                  %s211 = sphi %s162, %s162
                  %s212 = sphi %s158, %s158
                $region53: #{transform_attention.8} parent=42 // loop_header_branch
                  %209 = sbr.rel (%p207) target = $region57
                $region54: #{transform_attention.8} parent=42 // loop_body
                  %v213 = vld [vmem:[%s211] sm:$0xf]
                  %214 = vst [vmem:[%s212] sm:$0xf] %v213
                  %v215 = vld [vmem:[%s211 + $0x10] sm:$0xf]
                  %216 = vst [vmem:[%s212 + $0x4] sm:$0xf] %v215
                  %v217 = vld [vmem:[%s211 + $0x20] sm:$0xf]
                  %218 = vst [vmem:[%s212 + $0x8] sm:$0xf] %v217
                  %v219 = vld [vmem:[%s211 + $0x30] sm:$0xf]
                  %220 = vst [vmem:[%s212 + $0xc] sm:$0xf] %v219
                  %v221 = vld [vmem:[%s211 + $0x40] sm:$0xf]
                  %222 = vst [vmem:[%s212 + $0x10] sm:$0xf] %v221
                  %v223 = vld [vmem:[%s211 + $0x50] sm:$0xf]
                  %224 = vst [vmem:[%s212 + $0x14] sm:$0xf] %v223
                  %v225 = vld [vmem:[%s211 + $0x60] sm:$0xf]
                  %226 = vst [vmem:[%s212 + $0x18] sm:$0xf] %v225
                  %v227 = vld [vmem:[%s211 + $0x70] sm:$0xf]
                  %228 = vst [vmem:[%s212 + $0x1c] sm:$0xf] %v227
                $region55: #{transform_attention.8} parent=42 // loop_footer
                  %s210 = sadd.s32 1, %s206
                $region56: #{transform_attention.8} parent=42 // loop_footer_branch
                  %205 = sbr.rel target = $region52
                $region57: #{transform_attention.8} parent=42 // loop_exit
                  _
              $region43: #{transform_attention.8} parent=27 // pred_fallthru
                _
            $region28: #{transform_attention.8} parent=23 // pred_fallthru
              _
            // Predicated region
            $region29: #{transform_attention.8} parent=23 // pred_check
              _
            $region30: #{transform_attention.8} parent=23 // pred_check_branch
              %168 = sbr.rel (0) target = $region32
            $region31: #{transform_attention.8} parent=23 // pred_region
              loop: start=0, step=1, limit=1
              $region33: #{transform_attention.8} parent=31 // loop_pre_header
                _
              $region34: #{transform_attention.8} parent=31 // loop_header
                %s171 = sphi 0, %s175
                %p172 = scmp.ge.s32.totalorder %s171, 1
                %s176 = sphi %s162, %s162
                %s177 = sphi %s158, %s158
              $region35: #{transform_attention.8} parent=31 // loop_header_branch
                %174 = sbr.rel (%p172) target = $region39
              $region36: #{transform_attention.8} parent=31 // loop_body
                %v178 = vld [vmem:[%s176] sm:$0xf]
                %179 = vst [vmem:[%s177] sm:$0xf] %v178
                %v180 = vld [vmem:[%s176 + $0x10] sm:$0xf]
                %181 = vst [vmem:[%s177 + $0x4] sm:$0xf] %v180
                %v182 = vld [vmem:[%s176 + $0x20] sm:$0xf]
                %183 = vst [vmem:[%s177 + $0x8] sm:$0xf] %v182
                %v184 = vld [vmem:[%s176 + $0x30] sm:$0xf]
                %185 = vst [vmem:[%s177 + $0xc] sm:$0xf] %v184
                %v186 = vld [vmem:[%s176 + $0x40] sm:$0xf]
                %187 = vst [vmem:[%s177 + $0x10] sm:$0xf] %v186
                %v188 = vld [vmem:[%s176 + $0x50] sm:$0xf]
                %189 = vst [vmem:[%s177 + $0x14] sm:$0xf] %v188
                %v190 = vld [vmem:[%s176 + $0x60] sm:$0xf]
                %191 = vst [vmem:[%s177 + $0x18] sm:$0xf] %v190
                %v192 = vld [vmem:[%s176 + $0x70] sm:$0xf]
                %193 = vst [vmem:[%s177 + $0x1c] sm:$0xf] %v192
              $region37: #{transform_attention.8} parent=31 // loop_footer
                %s175 = sadd.s32 1, %s171
              $region38: #{transform_attention.8} parent=31 // loop_footer_branch
                %170 = sbr.rel target = $region34
              $region39: #{transform_attention.8} parent=31 // loop_exit
                _
            $region32: #{transform_attention.8} parent=23 // pred_fallthru
              _
          $region24: #{transform_attention.8} parent=19 // pred_fallthru
            _
          %229 = vnop
        $region20: #{transform_attention.8} parent=15 // pred_fallthru
          _
        // Predicated region
        $region58: #{transform_attention.8} parent=15 // pred_check
          %p230 = pneg %p71
        $region59: #{transform_attention.8} parent=15 // pred_check_branch
          %232 = sbr.rel (%p230) target = $region61
        $region60: #{transform_attention.8} parent=15 // pred_region
          %s233 = sand.u32 %s61, 1
          %s234 = sand.u32 %s61, 1
          %s235 = smul.addr %s234, 32
          %s236 = scalar_lea.vmem [#allocation3], %s235
          %s237 = smul.addr %s16, 32
          %s238 = sadd.s32 %s17, %s237
          %s239 = smul.addr %s238, 4
          %s240 = scalar_lea.vmem %s1, %s239
          // Predicated region
          $region62: #{transform_attention.8} parent=60 // pred_check
            _
          $region63: #{transform_attention.8} parent=60 // pred_check_branch
            %242 = sbr.rel (0) target = $region65
          $region64: #{transform_attention.8} parent=60 // pred_region
            // Predicated region
            $region66: #{transform_attention.8} parent=64 // pred_check
              _
            $region67: #{transform_attention.8} parent=64 // pred_check_branch
              %244 = sbr.rel target = $region69
            $region68: #{transform_attention.8} parent=64 // pred_region
              // Predicated region
              $region81: #{transform_attention.8} parent=68 // pred_check
                _
              $region82: #{transform_attention.8} parent=68 // pred_check_branch
                %273 = sbr.rel (0) target = $region84
              $region83: #{transform_attention.8} parent=68 // pred_region
                loop: start=0, step=1, limit=1
                $region85: #{transform_attention.8} parent=83 // loop_pre_header
                  _
                $region86: #{transform_attention.8} parent=83 // loop_header
                  %s275 = sphi 0, %s279
                  %p276 = scmp.ge.s32.totalorder %s275, 1
                  %s280 = sphi %s240, %s240
                  %s281 = sphi %s236, %s236
                $region87: #{transform_attention.8} parent=83 // loop_header_branch
                  %278 = sbr.rel (%p276) target = $region91
                $region88: #{transform_attention.8} parent=83 // loop_body
                  _
                $region89: #{transform_attention.8} parent=83 // loop_footer
                  %s279 = sadd.s32 1, %s275
                $region90: #{transform_attention.8} parent=83 // loop_footer_branch
                  %274 = sbr.rel target = $region86
                $region91: #{transform_attention.8} parent=83 // loop_exit
                  _
                loop: start=0, step=1, limit=1
                $region92: #{transform_attention.8} parent=83 // loop_pre_header
                  _
                $region93: #{transform_attention.8} parent=83 // loop_header
                  %s284 = sphi 0, %s288
                  %p285 = scmp.ge.s32.totalorder %s284, 1
                  %s289 = sphi %s240, %s240
                  %s290 = sphi %s236, %s236
                $region94: #{transform_attention.8} parent=83 // loop_header_branch
                  %287 = sbr.rel (%p285) target = $region98
                $region95: #{transform_attention.8} parent=83 // loop_body
                  %v291 = vld [vmem:[%s289] sm:$0xf]
                  %292 = vst [vmem:[%s290] sm:$0xf] %v291
                  %v293 = vld [vmem:[%s289 + $0x10] sm:$0xf]
                  %294 = vst [vmem:[%s290 + $0x4] sm:$0xf] %v293
                  %v295 = vld [vmem:[%s289 + $0x20] sm:$0xf]
                  %296 = vst [vmem:[%s290 + $0x8] sm:$0xf] %v295
                  %v297 = vld [vmem:[%s289 + $0x30] sm:$0xf]
                  %298 = vst [vmem:[%s290 + $0xc] sm:$0xf] %v297
                  %v299 = vld [vmem:[%s289 + $0x40] sm:$0xf]
                  %300 = vst [vmem:[%s290 + $0x10] sm:$0xf] %v299
                  %v301 = vld [vmem:[%s289 + $0x50] sm:$0xf]
                  %302 = vst [vmem:[%s290 + $0x14] sm:$0xf] %v301
                  %v303 = vld [vmem:[%s289 + $0x60] sm:$0xf]
                  %304 = vst [vmem:[%s290 + $0x18] sm:$0xf] %v303
                  %v305 = vld [vmem:[%s289 + $0x70] sm:$0xf]
                  %306 = vst [vmem:[%s290 + $0x1c] sm:$0xf] %v305
                $region96: #{transform_attention.8} parent=83 // loop_footer
                  %s288 = sadd.s32 1, %s284
                $region97: #{transform_attention.8} parent=83 // loop_footer_branch
                  %283 = sbr.rel target = $region93
                $region98: #{transform_attention.8} parent=83 // loop_exit
                  _
              $region84: #{transform_attention.8} parent=68 // pred_fallthru
                _
            $region69: #{transform_attention.8} parent=64 // pred_fallthru
              _
            // Predicated region
            $region70: #{transform_attention.8} parent=64 // pred_check
              _
            $region71: #{transform_attention.8} parent=64 // pred_check_branch
              %246 = sbr.rel (0) target = $region73
            $region72: #{transform_attention.8} parent=64 // pred_region
              loop: start=0, step=1, limit=1
              $region74: #{transform_attention.8} parent=72 // loop_pre_header
                _
              $region75: #{transform_attention.8} parent=72 // loop_header
                %s249 = sphi 0, %s253
                %p250 = scmp.ge.s32.totalorder %s249, 1
                %s254 = sphi %s240, %s240
                %s255 = sphi %s236, %s236
              $region76: #{transform_attention.8} parent=72 // loop_header_branch
                %252 = sbr.rel (%p250) target = $region80
              $region77: #{transform_attention.8} parent=72 // loop_body
                %v256 = vld [vmem:[%s254] sm:$0xf]
                %257 = vst [vmem:[%s255] sm:$0xf] %v256
                %v258 = vld [vmem:[%s254 + $0x10] sm:$0xf]
                %259 = vst [vmem:[%s255 + $0x4] sm:$0xf] %v258
                %v260 = vld [vmem:[%s254 + $0x20] sm:$0xf]
                %261 = vst [vmem:[%s255 + $0x8] sm:$0xf] %v260
                %v262 = vld [vmem:[%s254 + $0x30] sm:$0xf]
                %263 = vst [vmem:[%s255 + $0xc] sm:$0xf] %v262
                %v264 = vld [vmem:[%s254 + $0x40] sm:$0xf]
                %265 = vst [vmem:[%s255 + $0x10] sm:$0xf] %v264
                %v266 = vld [vmem:[%s254 + $0x50] sm:$0xf]
                %267 = vst [vmem:[%s255 + $0x14] sm:$0xf] %v266
                %v268 = vld [vmem:[%s254 + $0x60] sm:$0xf]
                %269 = vst [vmem:[%s255 + $0x18] sm:$0xf] %v268
                %v270 = vld [vmem:[%s254 + $0x70] sm:$0xf]
                %271 = vst [vmem:[%s255 + $0x1c] sm:$0xf] %v270
              $region78: #{transform_attention.8} parent=72 // loop_footer
                %s253 = sadd.s32 1, %s249
              $region79: #{transform_attention.8} parent=72 // loop_footer_branch
                %248 = sbr.rel target = $region75
              $region80: #{transform_attention.8} parent=72 // loop_exit
                _
            $region73: #{transform_attention.8} parent=64 // pred_fallthru
              _
          $region65: #{transform_attention.8} parent=60 // pred_fallthru
            _
          %307 = vnop
        $region61: #{transform_attention.8} parent=15 // pred_fallthru
          _
        // Predicated region
        $region99: #{transform_attention.8} parent=15 // pred_check
          %p308 = pneg %p99
        $region100: #{transform_attention.8} parent=15 // pred_check_branch
          %310 = sbr.rel (%p308) target = $region102
        $region101: #{transform_attention.8} parent=15 // pred_region
          %s311 = sand.u32 %s89, 1
          %s312 = sand.u32 %s89, 1
          %s313 = smul.addr %s312, 32
          %s314 = scalar_lea.vmem [#allocation4], %s313
          %s315 = smul.addr %s16, 32
          %s316 = sadd.s32 %s17, %s315
          %s317 = smul.addr %s316, 4
          %s318 = scalar_lea.vmem %s2, %s317
          // Predicated region
          $region103: #{transform_attention.8} parent=101 // pred_check
            _
          $region104: #{transform_attention.8} parent=101 // pred_check_branch
            %320 = sbr.rel (0) target = $region106
          $region105: #{transform_attention.8} parent=101 // pred_region
            // Predicated region
            $region107: #{transform_attention.8} parent=105 // pred_check
              _
            $region108: #{transform_attention.8} parent=105 // pred_check_branch
              %322 = sbr.rel target = $region110
            $region109: #{transform_attention.8} parent=105 // pred_region
              // Predicated region
              $region122: #{transform_attention.8} parent=109 // pred_check
                _
              $region123: #{transform_attention.8} parent=109 // pred_check_branch
                %351 = sbr.rel (0) target = $region125
              $region124: #{transform_attention.8} parent=109 // pred_region
                loop: start=0, step=1, limit=1
                $region126: #{transform_attention.8} parent=124 // loop_pre_header
                  _
                $region127: #{transform_attention.8} parent=124 // loop_header
                  %s353 = sphi 0, %s357
                  %p354 = scmp.ge.s32.totalorder %s353, 1
                  %s358 = sphi %s318, %s318
                  %s359 = sphi %s314, %s314
                $region128: #{transform_attention.8} parent=124 // loop_header_branch
                  %356 = sbr.rel (%p354) target = $region132
                $region129: #{transform_attention.8} parent=124 // loop_body
                  _
                $region130: #{transform_attention.8} parent=124 // loop_footer
                  %s357 = sadd.s32 1, %s353
                $region131: #{transform_attention.8} parent=124 // loop_footer_branch
                  %352 = sbr.rel target = $region127
                $region132: #{transform_attention.8} parent=124 // loop_exit
                  _
                loop: start=0, step=1, limit=1
                $region133: #{transform_attention.8} parent=124 // loop_pre_header
                  _
                $region134: #{transform_attention.8} parent=124 // loop_header
                  %s362 = sphi 0, %s366
                  %p363 = scmp.ge.s32.totalorder %s362, 1
                  %s367 = sphi %s318, %s318
                  %s368 = sphi %s314, %s314
                $region135: #{transform_attention.8} parent=124 // loop_header_branch
                  %365 = sbr.rel (%p363) target = $region139
                $region136: #{transform_attention.8} parent=124 // loop_body
                  %v369 = vld [vmem:[%s367] sm:$0xf]
                  %370 = vst [vmem:[%s368] sm:$0xf] %v369
                  %v371 = vld [vmem:[%s367 + $0x10] sm:$0xf]
                  %372 = vst [vmem:[%s368 + $0x4] sm:$0xf] %v371
                  %v373 = vld [vmem:[%s367 + $0x20] sm:$0xf]
                  %374 = vst [vmem:[%s368 + $0x8] sm:$0xf] %v373
                  %v375 = vld [vmem:[%s367 + $0x30] sm:$0xf]
                  %376 = vst [vmem:[%s368 + $0xc] sm:$0xf] %v375
                  %v377 = vld [vmem:[%s367 + $0x40] sm:$0xf]
                  %378 = vst [vmem:[%s368 + $0x10] sm:$0xf] %v377
                  %v379 = vld [vmem:[%s367 + $0x50] sm:$0xf]
                  %380 = vst [vmem:[%s368 + $0x14] sm:$0xf] %v379
                  %v381 = vld [vmem:[%s367 + $0x60] sm:$0xf]
                  %382 = vst [vmem:[%s368 + $0x18] sm:$0xf] %v381
                  %v383 = vld [vmem:[%s367 + $0x70] sm:$0xf]
                  %384 = vst [vmem:[%s368 + $0x1c] sm:$0xf] %v383
                $region137: #{transform_attention.8} parent=124 // loop_footer
                  %s366 = sadd.s32 1, %s362
                $region138: #{transform_attention.8} parent=124 // loop_footer_branch
                  %361 = sbr.rel target = $region134
                $region139: #{transform_attention.8} parent=124 // loop_exit
                  _
              $region125: #{transform_attention.8} parent=109 // pred_fallthru
                _
            $region110: #{transform_attention.8} parent=105 // pred_fallthru
              _
            // Predicated region
            $region111: #{transform_attention.8} parent=105 // pred_check
              _
            $region112: #{transform_attention.8} parent=105 // pred_check_branch
              %324 = sbr.rel (0) target = $region114
            $region113: #{transform_attention.8} parent=105 // pred_region
              loop: start=0, step=1, limit=1
              $region115: #{transform_attention.8} parent=113 // loop_pre_header
                _
              $region116: #{transform_attention.8} parent=113 // loop_header
                %s327 = sphi 0, %s331
                %p328 = scmp.ge.s32.totalorder %s327, 1
                %s332 = sphi %s318, %s318
                %s333 = sphi %s314, %s314
              $region117: #{transform_attention.8} parent=113 // loop_header_branch
                %330 = sbr.rel (%p328) target = $region121
              $region118: #{transform_attention.8} parent=113 // loop_body
                %v334 = vld [vmem:[%s332] sm:$0xf]
                %335 = vst [vmem:[%s333] sm:$0xf] %v334
                %v336 = vld [vmem:[%s332 + $0x10] sm:$0xf]
                %337 = vst [vmem:[%s333 + $0x4] sm:$0xf] %v336
                %v338 = vld [vmem:[%s332 + $0x20] sm:$0xf]
                %339 = vst [vmem:[%s333 + $0x8] sm:$0xf] %v338
                %v340 = vld [vmem:[%s332 + $0x30] sm:$0xf]
                %341 = vst [vmem:[%s333 + $0xc] sm:$0xf] %v340
                %v342 = vld [vmem:[%s332 + $0x40] sm:$0xf]
                %343 = vst [vmem:[%s333 + $0x10] sm:$0xf] %v342
                %v344 = vld [vmem:[%s332 + $0x50] sm:$0xf]
                %345 = vst [vmem:[%s333 + $0x14] sm:$0xf] %v344
                %v346 = vld [vmem:[%s332 + $0x60] sm:$0xf]
                %347 = vst [vmem:[%s333 + $0x18] sm:$0xf] %v346
                %v348 = vld [vmem:[%s332 + $0x70] sm:$0xf]
                %349 = vst [vmem:[%s333 + $0x1c] sm:$0xf] %v348
              $region119: #{transform_attention.8} parent=113 // loop_footer
                %s331 = sadd.s32 1, %s327
              $region120: #{transform_attention.8} parent=113 // loop_footer_branch
                %326 = sbr.rel target = $region116
              $region121: #{transform_attention.8} parent=113 // loop_exit
                _
            $region114: #{transform_attention.8} parent=105 // pred_fallthru
              _
          $region106: #{transform_attention.8} parent=101 // pred_fallthru
            _
          %385 = vnop
        $region102: #{transform_attention.8} parent=15 // pred_fallthru
          _
      $region16: #{transform_attention.8} parent=5 // pred_fallthru
        _
      %p386 = scmp.le.s32.totalorder 1, %s9
      %p387 = scmp.lt.s32.totalorder %s9, 9
      %p388 = pnand %p386, %p387
      %p389 = pneg %p388
      // Predicated region
      $region140: #{transform_attention.8} parent=5 // pred_check
        _
      $region141: #{transform_attention.8} parent=5 // pred_check_branch
        %391 = sbr.rel (%p388) target = $region143
      $region142: #{transform_attention.8} parent=5 // pred_region
        %s392 = ssub.s32 %s9, 1
        %s393 = sand.u32 %s36, 1
        %s394 = sand.u32 %s36, 1
        %s395 = smul.addr %s394, 32
        %s396 = scalar_lea.vmem [#allocation2], %s395
        // Predicated region
        $region144: #{transform_attention.8} parent=142 // pred_check
          %p397 = pneg %p49
        $region145: #{transform_attention.8} parent=142 // pred_check_branch
          %399 = sbr.rel (%p397) target = $region147
        $region146: #{transform_attention.8} parent=142 // pred_region
          _
        $region147: #{transform_attention.8} parent=142 // pred_fallthru
          _
        %s400 = sand.u32 %s64, 1
        %s401 = sand.u32 %s64, 1
        %s402 = smul.addr %s401, 32
        %s403 = scalar_lea.vmem [#allocation3], %s402
        // Predicated region
        $region148: #{transform_attention.8} parent=142 // pred_check
          %p404 = pneg %p77
        $region149: #{transform_attention.8} parent=142 // pred_check_branch
          %406 = sbr.rel (%p404) target = $region151
        $region150: #{transform_attention.8} parent=142 // pred_region
          _
        $region151: #{transform_attention.8} parent=142 // pred_fallthru
          _
        %s407 = sand.u32 %s92, 1
        %s408 = sand.u32 %s92, 1
        %s409 = smul.addr %s408, 32
        %s410 = scalar_lea.vmem [#allocation4], %s409
        // Predicated region
        $region152: #{transform_attention.8} parent=142 // pred_check
          %p411 = pneg %p105
        $region153: #{transform_attention.8} parent=142 // pred_check_branch
          %413 = sbr.rel (%p411) target = $region155
        $region154: #{transform_attention.8} parent=142 // pred_region
          _
        $region155: #{transform_attention.8} parent=142 // pred_fallthru
          _
        %s414 = sand.u32 %s36, 1
        %s415 = sand.u32 %s36, 1
        %s416 = smul.addr %s415, 32
        %s417 = scalar_lea.vmem [#allocation2], %s416
        %p418 = pneg %p49
        %p419 = pneg %p46
        %s420 = sand.u32 %s64, 1
        %s421 = sand.u32 %s64, 1
        %s422 = smul.addr %s421, 32
        %s423 = scalar_lea.vmem [#allocation3], %s422
        %p424 = pneg %p77
        %p425 = pneg %p74
        %s426 = sand.u32 %s92, 1
        %s427 = sand.u32 %s92, 1
        %s428 = smul.addr %s427, 32
        %s429 = scalar_lea.vmem [#allocation4], %s428
        %p430 = pneg %p105
        %p431 = pneg %p102
        %p432 = pneg %p133
        %p433 = pneg %p130
        %s434 = sand.u32 %s120, 1
        %s435 = sand.u32 %s120, 1
        %s436 = smul.addr %s435, 32
        %s437 = scalar_lea.vmem [#allocation5], %s436
        %v438 = vld [vmem:[%s396] sm:$0xf]
        %v439 = vld [vmem:[%s396 + $0x4] sm:$0xf]
        %v440 = vld [vmem:[%s396 + $0x8] sm:$0xf]
        %v441 = vld [vmem:[%s396 + $0xc] sm:$0xf]
        %v442 = vld [vmem:[%s396 + $0x10] sm:$0xf]
        %v443 = vld [vmem:[%s396 + $0x14] sm:$0xf]
        %v444 = vld [vmem:[%s396 + $0x18] sm:$0xf]
        %v445 = vld [vmem:[%s396 + $0x1c] sm:$0xf]
        %v446 = vunpack.c.l.bf16 %v438
        %v447 = vunpack.c.l.bf16 %v439
        %v448 = vunpack.c.l.bf16 %v440
        %v449 = vunpack.c.l.bf16 %v441
        %v450 = vunpack.c.l.bf16 %v442
        %v451 = vunpack.c.l.bf16 %v443
        %v452 = vunpack.c.l.bf16 %v444
        %v453 = vunpack.c.l.bf16 %v445
        %v454 = vld [vmem:[%s403] sm:$0xf]
        %v455 = vld [vmem:[%s403 + $0x4] sm:$0xf]
        %v456 = vld [vmem:[%s403 + $0x8] sm:$0xf]
        %v457 = vld [vmem:[%s403 + $0xc] sm:$0xf]
        %v458 = vld [vmem:[%s403 + $0x10] sm:$0xf]
        %v459 = vld [vmem:[%s403 + $0x14] sm:$0xf]
        %v460 = vld [vmem:[%s403 + $0x18] sm:$0xf]
        %v461 = vld [vmem:[%s403 + $0x1c] sm:$0xf]
        %v462 = vunpack.c.l.bf16 %v454
        %v463 = vunpack.c.l.bf16 %v455
        %v464 = vunpack.c.l.bf16 %v456
        %v465 = vunpack.c.l.bf16 %v457
        %v466 = vunpack.c.l.bf16 %v458
        %v467 = vunpack.c.l.bf16 %v459
        %v468 = vunpack.c.l.bf16 %v460
        %v469 = vunpack.c.l.bf16 %v461
        %v470 = vld [vmem:[%s410] sm:$0xf]
        %v471 = vld [vmem:[%s410 + $0x4] sm:$0xf]
        %v472 = vld [vmem:[%s410 + $0x8] sm:$0xf]
        %v473 = vld [vmem:[%s410 + $0xc] sm:$0xf]
        %v474 = vld [vmem:[%s410 + $0x10] sm:$0xf]
        %v475 = vld [vmem:[%s410 + $0x14] sm:$0xf]
        %v476 = vld [vmem:[%s410 + $0x18] sm:$0xf]
        %v477 = vld [vmem:[%s410 + $0x1c] sm:$0xf]
        %v478 = vunpack.c.l.bf16 %v470
        %v479 = vunpack.c.l.bf16 %v471
        %v480 = vunpack.c.l.bf16 %v472
        %v481 = vunpack.c.l.bf16 %v473
        %v482 = vunpack.c.l.bf16 %v474
        %v483 = vunpack.c.l.bf16 %v475
        %v484 = vunpack.c.l.bf16 %v476
        %v485 = vunpack.c.l.bf16 %v477
        %v486 = vmul.f32 %v446, %v462
        %v487 = vmul.f32 %v446, %v463
        %v488 = vmul.f32 %v446, %v464
        %v489 = vmul.f32 %v446, %v465
        %v490 = vmul.f32 %v446, %v466
        %v491 = vmul.f32 %v446, %v467
        %v492 = vmul.f32 %v446, %v468
        %v493 = vmul.f32 %v446, %v469
        %v494 = vmul.f32 %v447, %v462
        %v495 = vmul.f32 %v447, %v463
        %v496 = vmul.f32 %v447, %v464
        %v497 = vmul.f32 %v447, %v465
        %v498 = vmul.f32 %v447, %v466
        %v499 = vmul.f32 %v447, %v467
        %v500 = vmul.f32 %v447, %v468
        %v501 = vmul.f32 %v447, %v469
        %v502 = vmul.f32 %v448, %v462
        %v503 = vmul.f32 %v448, %v463
        %v504 = vmul.f32 %v448, %v464
        %v505 = vmul.f32 %v448, %v465
        %v506 = vmul.f32 %v448, %v466
        %v507 = vmul.f32 %v448, %v467
        %v508 = vmul.f32 %v448, %v468
        %v509 = vmul.f32 %v448, %v469
        %v510 = vmul.f32 %v449, %v462
        %v511 = vmul.f32 %v449, %v463
        %v512 = vmul.f32 %v449, %v464
        %v513 = vmul.f32 %v449, %v465
        %v514 = vmul.f32 %v449, %v466
        %v515 = vmul.f32 %v449, %v467
        %v516 = vmul.f32 %v449, %v468
        %v517 = vmul.f32 %v449, %v469
        %v518 = vmul.f32 %v450, %v462
        %v519 = vmul.f32 %v450, %v463
        %v520 = vmul.f32 %v450, %v464
        %v521 = vmul.f32 %v450, %v465
        %v522 = vmul.f32 %v450, %v466
        %v523 = vmul.f32 %v450, %v467
        %v524 = vmul.f32 %v450, %v468
        %v525 = vmul.f32 %v450, %v469
        %v526 = vmul.f32 %v451, %v462
        %v527 = vmul.f32 %v451, %v463
        %v528 = vmul.f32 %v451, %v464
        %v529 = vmul.f32 %v451, %v465
        %v530 = vmul.f32 %v451, %v466
        %v531 = vmul.f32 %v451, %v467
        %v532 = vmul.f32 %v451, %v468
        %v533 = vmul.f32 %v451, %v469
        %v534 = vmul.f32 %v452, %v462
        %v535 = vmul.f32 %v452, %v463
        %v536 = vmul.f32 %v452, %v464
        %v537 = vmul.f32 %v452, %v465
        %v538 = vmul.f32 %v452, %v466
        %v539 = vmul.f32 %v452, %v467
        %v540 = vmul.f32 %v452, %v468
        %v541 = vmul.f32 %v452, %v469
        %v542 = vmul.f32 %v453, %v462
        %v543 = vmul.f32 %v453, %v463
        %v544 = vmul.f32 %v453, %v464
        %v545 = vmul.f32 %v453, %v465
        %v546 = vmul.f32 %v453, %v466
        %v547 = vmul.f32 %v453, %v467
        %v548 = vmul.f32 %v453, %v468
        %v549 = vmul.f32 %v453, %v469
        %v550 = vrot.slane %v486, 4
        %v551 = vadd.f32 %v486, %v550
        %v552 = vrot.slane %v551, 2
        %v553 = vadd.f32 %v551, %v552
        %v554 = vrot.slane %v553, 1
        %v555 = vadd.f32 %v553, %v554
        %v556 = vrot.slane %v487, 4
        %v557 = vadd.f32 %v487, %v556
        %v558 = vrot.slane %v557, 2
        %v559 = vadd.f32 %v557, %v558
        %v560 = vrot.slane %v559, 1
        %v561 = vadd.f32 %v559, %v560
        %v562 = vrot.slane %v488, 4
        %v563 = vadd.f32 %v488, %v562
        %v564 = vrot.slane %v563, 2
        %v565 = vadd.f32 %v563, %v564
        %v566 = vrot.slane %v565, 1
        %v567 = vadd.f32 %v565, %v566
        %v568 = vrot.slane %v489, 4
        %v569 = vadd.f32 %v489, %v568
        %v570 = vrot.slane %v569, 2
        %v571 = vadd.f32 %v569, %v570
        %v572 = vrot.slane %v571, 1
        %v573 = vadd.f32 %v571, %v572
        %v574 = vrot.slane %v490, 4
        %v575 = vadd.f32 %v490, %v574
        %v576 = vrot.slane %v575, 2
        %v577 = vadd.f32 %v575, %v576
        %v578 = vrot.slane %v577, 1
        %v579 = vadd.f32 %v577, %v578
        %v580 = vrot.slane %v491, 4
        %v581 = vadd.f32 %v491, %v580
        %v582 = vrot.slane %v581, 2
        %v583 = vadd.f32 %v581, %v582
        %v584 = vrot.slane %v583, 1
        %v585 = vadd.f32 %v583, %v584
        %v586 = vrot.slane %v492, 4
        %v587 = vadd.f32 %v492, %v586
        %v588 = vrot.slane %v587, 2
        %v589 = vadd.f32 %v587, %v588
        %v590 = vrot.slane %v589, 1
        %v591 = vadd.f32 %v589, %v590
        %v592 = vrot.slane %v493, 4
        %v593 = vadd.f32 %v493, %v592
        %v594 = vrot.slane %v593, 2
        %v595 = vadd.f32 %v593, %v594
        %v596 = vrot.slane %v595, 1
        %v597 = vadd.f32 %v595, %v596
        %v598 = vrot.slane %v494, 4
        %v599 = vadd.f32 %v494, %v598
        %v600 = vrot.slane %v599, 2
        %v601 = vadd.f32 %v599, %v600
        %v602 = vrot.slane %v601, 1
        %v603 = vadd.f32 %v601, %v602
        %v604 = vrot.slane %v495, 4
        %v605 = vadd.f32 %v495, %v604
        %v606 = vrot.slane %v605, 2
        %v607 = vadd.f32 %v605, %v606
        %v608 = vrot.slane %v607, 1
        %v609 = vadd.f32 %v607, %v608
        %v610 = vrot.slane %v496, 4
        %v611 = vadd.f32 %v496, %v610
        %v612 = vrot.slane %v611, 2
        %v613 = vadd.f32 %v611, %v612
        %v614 = vrot.slane %v613, 1
        %v615 = vadd.f32 %v613, %v614
        %v616 = vrot.slane %v497, 4
        %v617 = vadd.f32 %v497, %v616
        %v618 = vrot.slane %v617, 2
        %v619 = vadd.f32 %v617, %v618
        %v620 = vrot.slane %v619, 1
        %v621 = vadd.f32 %v619, %v620
        %v622 = vrot.slane %v498, 4
        %v623 = vadd.f32 %v498, %v622
        %v624 = vrot.slane %v623, 2
        %v625 = vadd.f32 %v623, %v624
        %v626 = vrot.slane %v625, 1
        %v627 = vadd.f32 %v625, %v626
        %v628 = vrot.slane %v499, 4
        %v629 = vadd.f32 %v499, %v628
        %v630 = vrot.slane %v629, 2
        %v631 = vadd.f32 %v629, %v630
        %v632 = vrot.slane %v631, 1
        %v633 = vadd.f32 %v631, %v632
        %v634 = vrot.slane %v500, 4
        %v635 = vadd.f32 %v500, %v634
        %v636 = vrot.slane %v635, 2
        %v637 = vadd.f32 %v635, %v636
        %v638 = vrot.slane %v637, 1
        %v639 = vadd.f32 %v637, %v638
        %v640 = vrot.slane %v501, 4
        %v641 = vadd.f32 %v501, %v640
        %v642 = vrot.slane %v641, 2
        %v643 = vadd.f32 %v641, %v642
        %v644 = vrot.slane %v643, 1
        %v645 = vadd.f32 %v643, %v644
        %v646 = vrot.slane %v502, 4
        %v647 = vadd.f32 %v502, %v646
        %v648 = vrot.slane %v647, 2
        %v649 = vadd.f32 %v647, %v648
        %v650 = vrot.slane %v649, 1
        %v651 = vadd.f32 %v649, %v650
        %v652 = vrot.slane %v503, 4
        %v653 = vadd.f32 %v503, %v652
        %v654 = vrot.slane %v653, 2
        %v655 = vadd.f32 %v653, %v654
        %v656 = vrot.slane %v655, 1
        %v657 = vadd.f32 %v655, %v656
        %v658 = vrot.slane %v504, 4
        %v659 = vadd.f32 %v504, %v658
        %v660 = vrot.slane %v659, 2
        %v661 = vadd.f32 %v659, %v660
        %v662 = vrot.slane %v661, 1
        %v663 = vadd.f32 %v661, %v662
        %v664 = vrot.slane %v505, 4
        %v665 = vadd.f32 %v505, %v664
        %v666 = vrot.slane %v665, 2
        %v667 = vadd.f32 %v665, %v666
        %v668 = vrot.slane %v667, 1
        %v669 = vadd.f32 %v667, %v668
        %v670 = vrot.slane %v506, 4
        %v671 = vadd.f32 %v506, %v670
        %v672 = vrot.slane %v671, 2
        %v673 = vadd.f32 %v671, %v672
        %v674 = vrot.slane %v673, 1
        %v675 = vadd.f32 %v673, %v674
        %v676 = vrot.slane %v507, 4
        %v677 = vadd.f32 %v507, %v676
        %v678 = vrot.slane %v677, 2
        %v679 = vadd.f32 %v677, %v678
        %v680 = vrot.slane %v679, 1
        %v681 = vadd.f32 %v679, %v680
        %v682 = vrot.slane %v508, 4
        %v683 = vadd.f32 %v508, %v682
        %v684 = vrot.slane %v683, 2
        %v685 = vadd.f32 %v683, %v684
        %v686 = vrot.slane %v685, 1
        %v687 = vadd.f32 %v685, %v686
        %v688 = vrot.slane %v509, 4
        %v689 = vadd.f32 %v509, %v688
        %v690 = vrot.slane %v689, 2
        %v691 = vadd.f32 %v689, %v690
        %v692 = vrot.slane %v691, 1
        %v693 = vadd.f32 %v691, %v692
        %v694 = vrot.slane %v510, 4
        %v695 = vadd.f32 %v510, %v694
        %v696 = vrot.slane %v695, 2
        %v697 = vadd.f32 %v695, %v696
        %v698 = vrot.slane %v697, 1
        %v699 = vadd.f32 %v697, %v698
        %v700 = vrot.slane %v511, 4
        %v701 = vadd.f32 %v511, %v700
        %v702 = vrot.slane %v701, 2
        %v703 = vadd.f32 %v701, %v702
        %v704 = vrot.slane %v703, 1
        %v705 = vadd.f32 %v703, %v704
        %v706 = vrot.slane %v512, 4
        %v707 = vadd.f32 %v512, %v706
        %v708 = vrot.slane %v707, 2
        %v709 = vadd.f32 %v707, %v708
        %v710 = vrot.slane %v709, 1
        %v711 = vadd.f32 %v709, %v710
        %v712 = vrot.slane %v513, 4
        %v713 = vadd.f32 %v513, %v712
        %v714 = vrot.slane %v713, 2
        %v715 = vadd.f32 %v713, %v714
        %v716 = vrot.slane %v715, 1
        %v717 = vadd.f32 %v715, %v716
        %v718 = vrot.slane %v514, 4
        %v719 = vadd.f32 %v514, %v718
        %v720 = vrot.slane %v719, 2
        %v721 = vadd.f32 %v719, %v720
        %v722 = vrot.slane %v721, 1
        %v723 = vadd.f32 %v721, %v722
        %v724 = vrot.slane %v515, 4
        %v725 = vadd.f32 %v515, %v724
        %v726 = vrot.slane %v725, 2
        %v727 = vadd.f32 %v725, %v726
        %v728 = vrot.slane %v727, 1
        %v729 = vadd.f32 %v727, %v728
        %v730 = vrot.slane %v516, 4
        %v731 = vadd.f32 %v516, %v730
        %v732 = vrot.slane %v731, 2
        %v733 = vadd.f32 %v731, %v732
        %v734 = vrot.slane %v733, 1
        %v735 = vadd.f32 %v733, %v734
        %v736 = vrot.slane %v517, 4
        %v737 = vadd.f32 %v517, %v736
        %v738 = vrot.slane %v737, 2
        %v739 = vadd.f32 %v737, %v738
        %v740 = vrot.slane %v739, 1
        %v741 = vadd.f32 %v739, %v740
        %v742 = vrot.slane %v518, 4
        %v743 = vadd.f32 %v518, %v742
        %v744 = vrot.slane %v743, 2
        %v745 = vadd.f32 %v743, %v744
        %v746 = vrot.slane %v745, 1
        %v747 = vadd.f32 %v745, %v746
        %v748 = vrot.slane %v519, 4
        %v749 = vadd.f32 %v519, %v748
        %v750 = vrot.slane %v749, 2
        %v751 = vadd.f32 %v749, %v750
        %v752 = vrot.slane %v751, 1
        %v753 = vadd.f32 %v751, %v752
        %v754 = vrot.slane %v520, 4
        %v755 = vadd.f32 %v520, %v754
        %v756 = vrot.slane %v755, 2
        %v757 = vadd.f32 %v755, %v756
        %v758 = vrot.slane %v757, 1
        %v759 = vadd.f32 %v757, %v758
        %v760 = vrot.slane %v521, 4
        %v761 = vadd.f32 %v521, %v760
        %v762 = vrot.slane %v761, 2
        %v763 = vadd.f32 %v761, %v762
        %v764 = vrot.slane %v763, 1
        %v765 = vadd.f32 %v763, %v764
        %v766 = vrot.slane %v522, 4
        %v767 = vadd.f32 %v522, %v766
        %v768 = vrot.slane %v767, 2
        %v769 = vadd.f32 %v767, %v768
        %v770 = vrot.slane %v769, 1
        %v771 = vadd.f32 %v769, %v770
        %v772 = vrot.slane %v523, 4
        %v773 = vadd.f32 %v523, %v772
        %v774 = vrot.slane %v773, 2
        %v775 = vadd.f32 %v773, %v774
        %v776 = vrot.slane %v775, 1
        %v777 = vadd.f32 %v775, %v776
        %v778 = vrot.slane %v524, 4
        %v779 = vadd.f32 %v524, %v778
        %v780 = vrot.slane %v779, 2
        %v781 = vadd.f32 %v779, %v780
        %v782 = vrot.slane %v781, 1
        %v783 = vadd.f32 %v781, %v782
        %v784 = vrot.slane %v525, 4
        %v785 = vadd.f32 %v525, %v784
        %v786 = vrot.slane %v785, 2
        %v787 = vadd.f32 %v785, %v786
        %v788 = vrot.slane %v787, 1
        %v789 = vadd.f32 %v787, %v788
        %v790 = vrot.slane %v526, 4
        %v791 = vadd.f32 %v526, %v790
        %v792 = vrot.slane %v791, 2
        %v793 = vadd.f32 %v791, %v792
        %v794 = vrot.slane %v793, 1
        %v795 = vadd.f32 %v793, %v794
        %v796 = vrot.slane %v527, 4
        %v797 = vadd.f32 %v527, %v796
        %v798 = vrot.slane %v797, 2
        %v799 = vadd.f32 %v797, %v798
        %v800 = vrot.slane %v799, 1
        %v801 = vadd.f32 %v799, %v800
        %v802 = vrot.slane %v528, 4
        %v803 = vadd.f32 %v528, %v802
        %v804 = vrot.slane %v803, 2
        %v805 = vadd.f32 %v803, %v804
        %v806 = vrot.slane %v805, 1
        %v807 = vadd.f32 %v805, %v806
        %v808 = vrot.slane %v529, 4
        %v809 = vadd.f32 %v529, %v808
        %v810 = vrot.slane %v809, 2
        %v811 = vadd.f32 %v809, %v810
        %v812 = vrot.slane %v811, 1
        %v813 = vadd.f32 %v811, %v812
        %v814 = vrot.slane %v530, 4
        %v815 = vadd.f32 %v530, %v814
        %v816 = vrot.slane %v815, 2
        %v817 = vadd.f32 %v815, %v816
        %v818 = vrot.slane %v817, 1
        %v819 = vadd.f32 %v817, %v818
        %v820 = vrot.slane %v531, 4
        %v821 = vadd.f32 %v531, %v820
        %v822 = vrot.slane %v821, 2
        %v823 = vadd.f32 %v821, %v822
        %v824 = vrot.slane %v823, 1
        %v825 = vadd.f32 %v823, %v824
        %v826 = vrot.slane %v532, 4
        %v827 = vadd.f32 %v532, %v826
        %v828 = vrot.slane %v827, 2
        %v829 = vadd.f32 %v827, %v828
        %v830 = vrot.slane %v829, 1
        %v831 = vadd.f32 %v829, %v830
        %v832 = vrot.slane %v533, 4
        %v833 = vadd.f32 %v533, %v832
        %v834 = vrot.slane %v833, 2
        %v835 = vadd.f32 %v833, %v834
        %v836 = vrot.slane %v835, 1
        %v837 = vadd.f32 %v835, %v836
        %v838 = vrot.slane %v534, 4
        %v839 = vadd.f32 %v534, %v838
        %v840 = vrot.slane %v839, 2
        %v841 = vadd.f32 %v839, %v840
        %v842 = vrot.slane %v841, 1
        %v843 = vadd.f32 %v841, %v842
        %v844 = vrot.slane %v535, 4
        %v845 = vadd.f32 %v535, %v844
        %v846 = vrot.slane %v845, 2
        %v847 = vadd.f32 %v845, %v846
        %v848 = vrot.slane %v847, 1
        %v849 = vadd.f32 %v847, %v848
        %v850 = vrot.slane %v536, 4
        %v851 = vadd.f32 %v536, %v850
        %v852 = vrot.slane %v851, 2
        %v853 = vadd.f32 %v851, %v852
        %v854 = vrot.slane %v853, 1
        %v855 = vadd.f32 %v853, %v854
        %v856 = vrot.slane %v537, 4
        %v857 = vadd.f32 %v537, %v856
        %v858 = vrot.slane %v857, 2
        %v859 = vadd.f32 %v857, %v858
        %v860 = vrot.slane %v859, 1
        %v861 = vadd.f32 %v859, %v860
        %v862 = vrot.slane %v538, 4
        %v863 = vadd.f32 %v538, %v862
        %v864 = vrot.slane %v863, 2
        %v865 = vadd.f32 %v863, %v864
        %v866 = vrot.slane %v865, 1
        %v867 = vadd.f32 %v865, %v866
        %v868 = vrot.slane %v539, 4
        %v869 = vadd.f32 %v539, %v868
        %v870 = vrot.slane %v869, 2
        %v871 = vadd.f32 %v869, %v870
        %v872 = vrot.slane %v871, 1
        %v873 = vadd.f32 %v871, %v872
        %v874 = vrot.slane %v540, 4
        %v875 = vadd.f32 %v540, %v874
        %v876 = vrot.slane %v875, 2
        %v877 = vadd.f32 %v875, %v876
        %v878 = vrot.slane %v877, 1
        %v879 = vadd.f32 %v877, %v878
        %v880 = vrot.slane %v541, 4
        %v881 = vadd.f32 %v541, %v880
        %v882 = vrot.slane %v881, 2
        %v883 = vadd.f32 %v881, %v882
        %v884 = vrot.slane %v883, 1
        %v885 = vadd.f32 %v883, %v884
        %v886 = vrot.slane %v542, 4
        %v887 = vadd.f32 %v542, %v886
        %v888 = vrot.slane %v887, 2
        %v889 = vadd.f32 %v887, %v888
        %v890 = vrot.slane %v889, 1
        %v891 = vadd.f32 %v889, %v890
        %v892 = vrot.slane %v543, 4
        %v893 = vadd.f32 %v543, %v892
        %v894 = vrot.slane %v893, 2
        %v895 = vadd.f32 %v893, %v894
        %v896 = vrot.slane %v895, 1
        %v897 = vadd.f32 %v895, %v896
        %v898 = vrot.slane %v544, 4
        %v899 = vadd.f32 %v544, %v898
        %v900 = vrot.slane %v899, 2
        %v901 = vadd.f32 %v899, %v900
        %v902 = vrot.slane %v901, 1
        %v903 = vadd.f32 %v901, %v902
        %v904 = vrot.slane %v545, 4
        %v905 = vadd.f32 %v545, %v904
        %v906 = vrot.slane %v905, 2
        %v907 = vadd.f32 %v905, %v906
        %v908 = vrot.slane %v907, 1
        %v909 = vadd.f32 %v907, %v908
        %v910 = vrot.slane %v546, 4
        %v911 = vadd.f32 %v546, %v910
        %v912 = vrot.slane %v911, 2
        %v913 = vadd.f32 %v911, %v912
        %v914 = vrot.slane %v913, 1
        %v915 = vadd.f32 %v913, %v914
        %v916 = vrot.slane %v547, 4
        %v917 = vadd.f32 %v547, %v916
        %v918 = vrot.slane %v917, 2
        %v919 = vadd.f32 %v917, %v918
        %v920 = vrot.slane %v919, 1
        %v921 = vadd.f32 %v919, %v920
        %v922 = vrot.slane %v548, 4
        %v923 = vadd.f32 %v548, %v922
        %v924 = vrot.slane %v923, 2
        %v925 = vadd.f32 %v923, %v924
        %v926 = vrot.slane %v925, 1
        %v927 = vadd.f32 %v925, %v926
        %v928 = vrot.slane %v549, 4
        %v929 = vadd.f32 %v549, %v928
        %v930 = vrot.slane %v929, 2
        %v931 = vadd.f32 %v929, %v930
        %v932 = vrot.slane %v931, 1
        %v933 = vadd.f32 %v931, %v932
        %v934 = vmax.f32 %v555, %v561
        %v935 = vmax.f32 %v934, %v567
        %v936 = vmax.f32 %v935, %v573
        %v937 = vmax.f32 %v936, %v579
        %v938 = vmax.f32 %v937, %v585
        %v939 = vmax.f32 %v938, %v591
        %v940 = vmax.f32 %v939, %v597
        %v941 = vmax.f32 %v603, %v609
        %v942 = vmax.f32 %v941, %v615
        %v943 = vmax.f32 %v942, %v621
        %v944 = vmax.f32 %v943, %v627
        %v945 = vmax.f32 %v944, %v633
        %v946 = vmax.f32 %v945, %v639
        %v947 = vmax.f32 %v946, %v645
        %v948 = vmax.f32 %v651, %v657
        %v949 = vmax.f32 %v948, %v663
        %v950 = vmax.f32 %v949, %v669
        %v951 = vmax.f32 %v950, %v675
        %v952 = vmax.f32 %v951, %v681
        %v953 = vmax.f32 %v952, %v687
        %v954 = vmax.f32 %v953, %v693
        %v955 = vmax.f32 %v699, %v705
        %v956 = vmax.f32 %v955, %v711
        %v957 = vmax.f32 %v956, %v717
        %v958 = vmax.f32 %v957, %v723
        %v959 = vmax.f32 %v958, %v729
        %v960 = vmax.f32 %v959, %v735
        %v961 = vmax.f32 %v960, %v741
        %v962 = vmax.f32 %v747, %v753
        %v963 = vmax.f32 %v962, %v759
        %v964 = vmax.f32 %v963, %v765
        %v965 = vmax.f32 %v964, %v771
        %v966 = vmax.f32 %v965, %v777
        %v967 = vmax.f32 %v966, %v783
        %v968 = vmax.f32 %v967, %v789
        %v969 = vmax.f32 %v795, %v801
        %v970 = vmax.f32 %v969, %v807
        %v971 = vmax.f32 %v970, %v813
        %v972 = vmax.f32 %v971, %v819
        %v973 = vmax.f32 %v972, %v825
        %v974 = vmax.f32 %v973, %v831
        %v975 = vmax.f32 %v974, %v837
        %v976 = vmax.f32 %v843, %v849
        %v977 = vmax.f32 %v976, %v855
        %v978 = vmax.f32 %v977, %v861
        %v979 = vmax.f32 %v978, %v867
        %v980 = vmax.f32 %v979, %v873
        %v981 = vmax.f32 %v980, %v879
        %v982 = vmax.f32 %v981, %v885
        %v983 = vmax.f32 %v891, %v897
        %v984 = vmax.f32 %v983, %v903
        %v985 = vmax.f32 %v984, %v909
        %v986 = vmax.f32 %v985, %v915
        %v987 = vmax.f32 %v986, %v921
        %v988 = vmax.f32 %v987, %v927
        %v989 = vmax.f32 %v988, %v933
        %v990 = vsub.f32 %v555, %v940
        %v991 = vsub.f32 %v561, %v940
        %v992 = vsub.f32 %v567, %v940
        %v993 = vsub.f32 %v573, %v940
        %v994 = vsub.f32 %v579, %v940
        %v995 = vsub.f32 %v585, %v940
        %v996 = vsub.f32 %v591, %v940
        %v997 = vsub.f32 %v597, %v940
        %v998 = vsub.f32 %v603, %v947
        %v999 = vsub.f32 %v609, %v947
        %v1000 = vsub.f32 %v615, %v947
        %v1001 = vsub.f32 %v621, %v947
        %v1002 = vsub.f32 %v627, %v947
        %v1003 = vsub.f32 %v633, %v947
        %v1004 = vsub.f32 %v639, %v947
        %v1005 = vsub.f32 %v645, %v947
        %v1006 = vsub.f32 %v651, %v954
        %v1007 = vsub.f32 %v657, %v954
        %v1008 = vsub.f32 %v663, %v954
        %v1009 = vsub.f32 %v669, %v954
        %v1010 = vsub.f32 %v675, %v954
        %v1011 = vsub.f32 %v681, %v954
        %v1012 = vsub.f32 %v687, %v954
        %v1013 = vsub.f32 %v693, %v954
        %v1014 = vsub.f32 %v699, %v961
        %v1015 = vsub.f32 %v705, %v961
        %v1016 = vsub.f32 %v711, %v961
        %v1017 = vsub.f32 %v717, %v961
        %v1018 = vsub.f32 %v723, %v961
        %v1019 = vsub.f32 %v729, %v961
        %v1020 = vsub.f32 %v735, %v961
        %v1021 = vsub.f32 %v741, %v961
        %v1022 = vsub.f32 %v747, %v968
        %v1023 = vsub.f32 %v753, %v968
        %v1024 = vsub.f32 %v759, %v968
        %v1025 = vsub.f32 %v765, %v968
        %v1026 = vsub.f32 %v771, %v968
        %v1027 = vsub.f32 %v777, %v968
        %v1028 = vsub.f32 %v783, %v968
        %v1029 = vsub.f32 %v789, %v968
        %v1030 = vsub.f32 %v795, %v975
        %v1031 = vsub.f32 %v801, %v975
        %v1032 = vsub.f32 %v807, %v975
        %v1033 = vsub.f32 %v813, %v975
        %v1034 = vsub.f32 %v819, %v975
        %v1035 = vsub.f32 %v825, %v975
        %v1036 = vsub.f32 %v831, %v975
        %v1037 = vsub.f32 %v837, %v975
        %v1038 = vsub.f32 %v843, %v982
        %v1039 = vsub.f32 %v849, %v982
        %v1040 = vsub.f32 %v855, %v982
        %v1041 = vsub.f32 %v861, %v982
        %v1042 = vsub.f32 %v867, %v982
        %v1043 = vsub.f32 %v873, %v982
        %v1044 = vsub.f32 %v879, %v982
        %v1045 = vsub.f32 %v885, %v982
        %v1046 = vsub.f32 %v891, %v989
        %v1047 = vsub.f32 %v897, %v989
        %v1048 = vsub.f32 %v903, %v989
        %v1049 = vsub.f32 %v909, %v989
        %v1050 = vsub.f32 %v915, %v989
        %v1051 = vsub.f32 %v921, %v989
        %v1052 = vsub.f32 %v927, %v989
        %v1053 = vsub.f32 %v933, %v989
        %v1054 = vmul.f32 %v990, 1.442695
        %v1055 = vpow.pop %v1054
        %v1056 = vmul.f32 %v991, 1.442695
        %v1057 = vpow.pop %v1056
        %v1058 = vmul.f32 %v992, 1.442695
        %v1059 = vpow.pop %v1058
        %v1060 = vmul.f32 %v993, 1.442695
        %v1061 = vpow.pop %v1060
        %v1062 = vmul.f32 %v994, 1.442695
        %v1063 = vpow.pop %v1062
        %v1064 = vmul.f32 %v995, 1.442695
        %v1065 = vpow.pop %v1064
        %v1066 = vmul.f32 %v996, 1.442695
        %v1067 = vpow.pop %v1066
        %v1068 = vmul.f32 %v997, 1.442695
        %v1069 = vpow.pop %v1068
        %v1070 = vmul.f32 %v998, 1.442695
        %v1071 = vpow.pop %v1070
        %v1072 = vmul.f32 %v999, 1.442695
        %v1073 = vpow.pop %v1072
        %v1074 = vmul.f32 %v1000, 1.442695
        %v1075 = vpow.pop %v1074
        %v1076 = vmul.f32 %v1001, 1.442695
        %v1077 = vpow.pop %v1076
        %v1078 = vmul.f32 %v1002, 1.442695
        %v1079 = vpow.pop %v1078
        %v1080 = vmul.f32 %v1003, 1.442695
        %v1081 = vpow.pop %v1080
        %v1082 = vmul.f32 %v1004, 1.442695
        %v1083 = vpow.pop %v1082
        %v1084 = vmul.f32 %v1005, 1.442695
        %v1085 = vpow.pop %v1084
        %v1086 = vmul.f32 %v1006, 1.442695
        %v1087 = vpow.pop %v1086
        %v1088 = vmul.f32 %v1007, 1.442695
        %v1089 = vpow.pop %v1088
        %v1090 = vmul.f32 %v1008, 1.442695
        %v1091 = vpow.pop %v1090
        %v1092 = vmul.f32 %v1009, 1.442695
        %v1093 = vpow.pop %v1092
        %v1094 = vmul.f32 %v1010, 1.442695
        %v1095 = vpow.pop %v1094
        %v1096 = vmul.f32 %v1011, 1.442695
        %v1097 = vpow.pop %v1096
        %v1098 = vmul.f32 %v1012, 1.442695
        %v1099 = vpow.pop %v1098
        %v1100 = vmul.f32 %v1013, 1.442695
        %v1101 = vpow.pop %v1100
        %v1102 = vmul.f32 %v1014, 1.442695
        %v1103 = vpow.pop %v1102
        %v1104 = vmul.f32 %v1015, 1.442695
        %v1105 = vpow.pop %v1104
        %v1106 = vmul.f32 %v1016, 1.442695
        %v1107 = vpow.pop %v1106
        %v1108 = vmul.f32 %v1017, 1.442695
        %v1109 = vpow.pop %v1108
        %v1110 = vmul.f32 %v1018, 1.442695
        %v1111 = vpow.pop %v1110
        %v1112 = vmul.f32 %v1019, 1.442695
        %v1113 = vpow.pop %v1112
        %v1114 = vmul.f32 %v1020, 1.442695
        %v1115 = vpow.pop %v1114
        %v1116 = vmul.f32 %v1021, 1.442695
        %v1117 = vpow.pop %v1116
        %v1118 = vmul.f32 %v1022, 1.442695
        %v1119 = vpow.pop %v1118
        %v1120 = vmul.f32 %v1023, 1.442695
        %v1121 = vpow.pop %v1120
        %v1122 = vmul.f32 %v1024, 1.442695
        %v1123 = vpow.pop %v1122
        %v1124 = vmul.f32 %v1025, 1.442695
        %v1125 = vpow.pop %v1124
        %v1126 = vmul.f32 %v1026, 1.442695
        %v1127 = vpow.pop %v1126
        %v1128 = vmul.f32 %v1027, 1.442695
        %v1129 = vpow.pop %v1128
        %v1130 = vmul.f32 %v1028, 1.442695
        %v1131 = vpow.pop %v1130
        %v1132 = vmul.f32 %v1029, 1.442695
        %v1133 = vpow.pop %v1132
        %v1134 = vmul.f32 %v1030, 1.442695
        %v1135 = vpow.pop %v1134
        %v1136 = vmul.f32 %v1031, 1.442695
        %v1137 = vpow.pop %v1136
        %v1138 = vmul.f32 %v1032, 1.442695
        %v1139 = vpow.pop %v1138
        %v1140 = vmul.f32 %v1033, 1.442695
        %v1141 = vpow.pop %v1140
        %v1142 = vmul.f32 %v1034, 1.442695
        %v1143 = vpow.pop %v1142
        %v1144 = vmul.f32 %v1035, 1.442695
        %v1145 = vpow.pop %v1144
        %v1146 = vmul.f32 %v1036, 1.442695
        %v1147 = vpow.pop %v1146
        %v1148 = vmul.f32 %v1037, 1.442695
        %v1149 = vpow.pop %v1148
        %v1150 = vmul.f32 %v1038, 1.442695
        %v1151 = vpow.pop %v1150
        %v1152 = vmul.f32 %v1039, 1.442695
        %v1153 = vpow.pop %v1152
        %v1154 = vmul.f32 %v1040, 1.442695
        %v1155 = vpow.pop %v1154
        %v1156 = vmul.f32 %v1041, 1.442695
        %v1157 = vpow.pop %v1156
        %v1158 = vmul.f32 %v1042, 1.442695
        %v1159 = vpow.pop %v1158
        %v1160 = vmul.f32 %v1043, 1.442695
        %v1161 = vpow.pop %v1160
        %v1162 = vmul.f32 %v1044, 1.442695
        %v1163 = vpow.pop %v1162
        %v1164 = vmul.f32 %v1045, 1.442695
        %v1165 = vpow.pop %v1164
        %v1166 = vmul.f32 %v1046, 1.442695
        %v1167 = vpow.pop %v1166
        %v1168 = vmul.f32 %v1047, 1.442695
        %v1169 = vpow.pop %v1168
        %v1170 = vmul.f32 %v1048, 1.442695
        %v1171 = vpow.pop %v1170
        %v1172 = vmul.f32 %v1049, 1.442695
        %v1173 = vpow.pop %v1172
        %v1174 = vmul.f32 %v1050, 1.442695
        %v1175 = vpow.pop %v1174
        %v1176 = vmul.f32 %v1051, 1.442695
        %v1177 = vpow.pop %v1176
        %v1178 = vmul.f32 %v1052, 1.442695
        %v1179 = vpow.pop %v1178
        %v1180 = vmul.f32 %v1053, 1.442695
        %v1181 = vpow.pop %v1180
        %v1246 = vrot.slane %v1057, 7
        %vm1247 = vcmask 1041409
        %v1248 = vsel %vm1247, %v1246, %v1055
        %v1249 = vrot.slane %v1059, 6
        %vm1250 = vcmask 1042434
        %v1251 = vsel %vm1250, %v1249, %v1248
        %v1252 = vrot.slane %v1061, 5
        %vm1253 = vcmask 1043459
        %v1254 = vsel %vm1253, %v1252, %v1251
        %v1255 = vrot.slane %v1063, 4
        %vm1256 = vcmask 1044484
        %v1257 = vsel %vm1256, %v1255, %v1254
        %v1258 = vrot.slane %v1065, 3
        %vm1259 = vcmask 1045509
        %v1260 = vsel %vm1259, %v1258, %v1257
        %v1261 = vrot.slane %v1067, 2
        %vm1262 = vcmask 1046534
        %v1263 = vsel %vm1262, %v1261, %v1260
        %v1264 = vrot.slane %v1069, 1
        %vm1265 = vcmask 1047559
        %v1266 = vsel %vm1265, %v1264, %v1263
        %v1267 = vrot.slane %v1073, 7
        %v1268 = vsel %vm1247, %v1267, %v1071
        %v1269 = vrot.slane %v1075, 6
        %v1270 = vsel %vm1250, %v1269, %v1268
        %v1271 = vrot.slane %v1077, 5
        %v1272 = vsel %vm1253, %v1271, %v1270
        %v1273 = vrot.slane %v1079, 4
        %v1274 = vsel %vm1256, %v1273, %v1272
        %v1275 = vrot.slane %v1081, 3
        %v1276 = vsel %vm1259, %v1275, %v1274
        %v1277 = vrot.slane %v1083, 2
        %v1278 = vsel %vm1262, %v1277, %v1276
        %v1279 = vrot.slane %v1085, 1
        %v1280 = vsel %vm1265, %v1279, %v1278
        %v1281 = vrot.slane %v1089, 7
        %v1282 = vsel %vm1247, %v1281, %v1087
        %v1283 = vrot.slane %v1091, 6
        %v1284 = vsel %vm1250, %v1283, %v1282
        %v1285 = vrot.slane %v1093, 5
        %v1286 = vsel %vm1253, %v1285, %v1284
        %v1287 = vrot.slane %v1095, 4
        %v1288 = vsel %vm1256, %v1287, %v1286
        %v1289 = vrot.slane %v1097, 3
        %v1290 = vsel %vm1259, %v1289, %v1288
        %v1291 = vrot.slane %v1099, 2
        %v1292 = vsel %vm1262, %v1291, %v1290
        %v1293 = vrot.slane %v1101, 1
        %v1294 = vsel %vm1265, %v1293, %v1292
        %v1295 = vrot.slane %v1105, 7
        %v1296 = vsel %vm1247, %v1295, %v1103
        %v1297 = vrot.slane %v1107, 6
        %v1298 = vsel %vm1250, %v1297, %v1296
        %v1299 = vrot.slane %v1109, 5
        %v1300 = vsel %vm1253, %v1299, %v1298
        %v1301 = vrot.slane %v1111, 4
        %v1302 = vsel %vm1256, %v1301, %v1300
        %v1303 = vrot.slane %v1113, 3
        %v1304 = vsel %vm1259, %v1303, %v1302
        %v1305 = vrot.slane %v1115, 2
        %v1306 = vsel %vm1262, %v1305, %v1304
        %v1307 = vrot.slane %v1117, 1
        %v1308 = vsel %vm1265, %v1307, %v1306
        %v1309 = vrot.slane %v1121, 7
        %v1310 = vsel %vm1247, %v1309, %v1119
        %v1311 = vrot.slane %v1123, 6
        %v1312 = vsel %vm1250, %v1311, %v1310
        %v1313 = vrot.slane %v1125, 5
        %v1314 = vsel %vm1253, %v1313, %v1312
        %v1315 = vrot.slane %v1127, 4
        %v1316 = vsel %vm1256, %v1315, %v1314
        %v1317 = vrot.slane %v1129, 3
        %v1318 = vsel %vm1259, %v1317, %v1316
        %v1319 = vrot.slane %v1131, 2
        %v1320 = vsel %vm1262, %v1319, %v1318
        %v1321 = vrot.slane %v1133, 1
        %v1322 = vsel %vm1265, %v1321, %v1320
        %v1323 = vrot.slane %v1137, 7
        %v1324 = vsel %vm1247, %v1323, %v1135
        %v1325 = vrot.slane %v1139, 6
        %v1326 = vsel %vm1250, %v1325, %v1324
        %v1327 = vrot.slane %v1141, 5
        %v1328 = vsel %vm1253, %v1327, %v1326
        %v1329 = vrot.slane %v1143, 4
        %v1330 = vsel %vm1256, %v1329, %v1328
        %v1331 = vrot.slane %v1145, 3
        %v1332 = vsel %vm1259, %v1331, %v1330
        %v1333 = vrot.slane %v1147, 2
        %v1334 = vsel %vm1262, %v1333, %v1332
        %v1335 = vrot.slane %v1149, 1
        %v1336 = vsel %vm1265, %v1335, %v1334
        %v1337 = vrot.slane %v1153, 7
        %v1338 = vsel %vm1247, %v1337, %v1151
        %v1339 = vrot.slane %v1155, 6
        %v1340 = vsel %vm1250, %v1339, %v1338
        %v1341 = vrot.slane %v1157, 5
        %v1342 = vsel %vm1253, %v1341, %v1340
        %v1343 = vrot.slane %v1159, 4
        %v1344 = vsel %vm1256, %v1343, %v1342
        %v1345 = vrot.slane %v1161, 3
        %v1346 = vsel %vm1259, %v1345, %v1344
        %v1347 = vrot.slane %v1163, 2
        %v1348 = vsel %vm1262, %v1347, %v1346
        %v1349 = vrot.slane %v1165, 1
        %v1350 = vsel %vm1265, %v1349, %v1348
        %v1351 = vrot.slane %v1169, 7
        %v1352 = vsel %vm1247, %v1351, %v1167
        %v1353 = vrot.slane %v1171, 6
        %v1354 = vsel %vm1250, %v1353, %v1352
        %v1355 = vrot.slane %v1173, 5
        %v1356 = vsel %vm1253, %v1355, %v1354
        %v1357 = vrot.slane %v1175, 4
        %v1358 = vsel %vm1256, %v1357, %v1356
        %v1359 = vrot.slane %v1177, 3
        %v1360 = vsel %vm1259, %v1359, %v1358
        %v1361 = vrot.slane %v1179, 2
        %v1362 = vsel %vm1262, %v1361, %v1360
        %v1363 = vrot.slane %v1181, 1
        %v1364 = vsel %vm1265, %v1363, %v1362
        %v1373 = vrot.slane %v1266, 4
        %v1374 = vadd.f32 %v1266, %v1373
        %v1375 = vrot.slane %v1374, 2
        %v1376 = vadd.f32 %v1374, %v1375
        %v1377 = vrot.slane %v1376, 1
        %v1378 = vadd.f32 %v1376, %v1377
        %v1379 = vrot.slane %v1280, 4
        %v1380 = vadd.f32 %v1280, %v1379
        %v1381 = vrot.slane %v1380, 2
        %v1382 = vadd.f32 %v1380, %v1381
        %v1383 = vrot.slane %v1382, 1
        %v1384 = vadd.f32 %v1382, %v1383
        %v1385 = vrot.slane %v1294, 4
        %v1386 = vadd.f32 %v1294, %v1385
        %v1387 = vrot.slane %v1386, 2
        %v1388 = vadd.f32 %v1386, %v1387
        %v1389 = vrot.slane %v1388, 1
        %v1390 = vadd.f32 %v1388, %v1389
        %v1391 = vrot.slane %v1308, 4
        %v1392 = vadd.f32 %v1308, %v1391
        %v1393 = vrot.slane %v1392, 2
        %v1394 = vadd.f32 %v1392, %v1393
        %v1395 = vrot.slane %v1394, 1
        %v1396 = vadd.f32 %v1394, %v1395
        %v1397 = vrot.slane %v1322, 4
        %v1398 = vadd.f32 %v1322, %v1397
        %v1399 = vrot.slane %v1398, 2
        %v1400 = vadd.f32 %v1398, %v1399
        %v1401 = vrot.slane %v1400, 1
        %v1402 = vadd.f32 %v1400, %v1401
        %v1403 = vrot.slane %v1336, 4
        %v1404 = vadd.f32 %v1336, %v1403
        %v1405 = vrot.slane %v1404, 2
        %v1406 = vadd.f32 %v1404, %v1405
        %v1407 = vrot.slane %v1406, 1
        %v1408 = vadd.f32 %v1406, %v1407
        %v1409 = vrot.slane %v1350, 4
        %v1410 = vadd.f32 %v1350, %v1409
        %v1411 = vrot.slane %v1410, 2
        %v1412 = vadd.f32 %v1410, %v1411
        %v1413 = vrot.slane %v1412, 1
        %v1414 = vadd.f32 %v1412, %v1413
        %v1415 = vrot.slane %v1364, 4
        %v1416 = vadd.f32 %v1364, %v1415
        %v1417 = vrot.slane %v1416, 2
        %v1418 = vadd.f32 %v1416, %v1417
        %v1419 = vrot.slane %v1418, 1
        %v1420 = vadd.f32 %v1418, %v1419
        %v1421 = vrcp.pop %v1378
        %v1422 = vrcp.pop %v1384
        %v1423 = vrcp.pop %v1390
        %v1424 = vrcp.pop %v1396
        %v1425 = vrcp.pop %v1402
        %v1426 = vrcp.pop %v1408
        %v1427 = vrcp.pop %v1414
        %v1428 = vrcp.pop %v1420
        %v1429 = vlaneseq
        %v1430 = vshrl.u32 %v1429, 7
        %v1431 = vsub.s32 0, %v1430
        %v1432 = vrot.slane %v1421, %v1431
        %v1433 = vlaneseq
        %v1434 = vshrl.u32 %v1433, 7
        %v1435 = vsub.s32 0, %v1434
        %v1436 = vrot.slane %v1422, %v1435
        %v1437 = vlaneseq
        %v1438 = vshrl.u32 %v1437, 7
        %v1439 = vsub.s32 0, %v1438
        %v1440 = vrot.slane %v1423, %v1439
        %v1441 = vlaneseq
        %v1442 = vshrl.u32 %v1441, 7
        %v1443 = vsub.s32 0, %v1442
        %v1444 = vrot.slane %v1424, %v1443
        %v1445 = vlaneseq
        %v1446 = vshrl.u32 %v1445, 7
        %v1447 = vsub.s32 0, %v1446
        %v1448 = vrot.slane %v1425, %v1447
        %v1449 = vlaneseq
        %v1450 = vshrl.u32 %v1449, 7
        %v1451 = vsub.s32 0, %v1450
        %v1452 = vrot.slane %v1426, %v1451
        %v1453 = vlaneseq
        %v1454 = vshrl.u32 %v1453, 7
        %v1455 = vsub.s32 0, %v1454
        %v1456 = vrot.slane %v1427, %v1455
        %v1457 = vlaneseq
        %v1458 = vshrl.u32 %v1457, 7
        %v1459 = vsub.s32 0, %v1458
        %v1460 = vrot.slane %v1428, %v1459
        %v1461 = vmul.f32 %v1055, %v1432
        %v1462 = vmul.f32 %v1057, %v1432
        %v1463 = vmul.f32 %v1059, %v1432
        %v1464 = vmul.f32 %v1061, %v1432
        %v1465 = vmul.f32 %v1063, %v1432
        %v1466 = vmul.f32 %v1065, %v1432
        %v1467 = vmul.f32 %v1067, %v1432
        %v1468 = vmul.f32 %v1069, %v1432
        %v1469 = vmul.f32 %v1071, %v1436
        %v1470 = vmul.f32 %v1073, %v1436
        %v1471 = vmul.f32 %v1075, %v1436
        %v1472 = vmul.f32 %v1077, %v1436
        %v1473 = vmul.f32 %v1079, %v1436
        %v1474 = vmul.f32 %v1081, %v1436
        %v1475 = vmul.f32 %v1083, %v1436
        %v1476 = vmul.f32 %v1085, %v1436
        %v1477 = vmul.f32 %v1087, %v1440
        %v1478 = vmul.f32 %v1089, %v1440
        %v1479 = vmul.f32 %v1091, %v1440
        %v1480 = vmul.f32 %v1093, %v1440
        %v1481 = vmul.f32 %v1095, %v1440
        %v1482 = vmul.f32 %v1097, %v1440
        %v1483 = vmul.f32 %v1099, %v1440
        %v1484 = vmul.f32 %v1101, %v1440
        %v1485 = vmul.f32 %v1103, %v1444
        %v1486 = vmul.f32 %v1105, %v1444
        %v1487 = vmul.f32 %v1107, %v1444
        %v1488 = vmul.f32 %v1109, %v1444
        %v1489 = vmul.f32 %v1111, %v1444
        %v1490 = vmul.f32 %v1113, %v1444
        %v1491 = vmul.f32 %v1115, %v1444
        %v1492 = vmul.f32 %v1117, %v1444
        %v1493 = vmul.f32 %v1119, %v1448
        %v1494 = vmul.f32 %v1121, %v1448
        %v1495 = vmul.f32 %v1123, %v1448
        %v1496 = vmul.f32 %v1125, %v1448
        %v1497 = vmul.f32 %v1127, %v1448
        %v1498 = vmul.f32 %v1129, %v1448
        %v1499 = vmul.f32 %v1131, %v1448
        %v1500 = vmul.f32 %v1133, %v1448
        %v1501 = vmul.f32 %v1135, %v1452
        %v1502 = vmul.f32 %v1137, %v1452
        %v1503 = vmul.f32 %v1139, %v1452
        %v1504 = vmul.f32 %v1141, %v1452
        %v1505 = vmul.f32 %v1143, %v1452
        %v1506 = vmul.f32 %v1145, %v1452
        %v1507 = vmul.f32 %v1147, %v1452
        %v1508 = vmul.f32 %v1149, %v1452
        %v1509 = vmul.f32 %v1151, %v1456
        %v1510 = vmul.f32 %v1153, %v1456
        %v1511 = vmul.f32 %v1155, %v1456
        %v1512 = vmul.f32 %v1157, %v1456
        %v1513 = vmul.f32 %v1159, %v1456
        %v1514 = vmul.f32 %v1161, %v1456
        %v1515 = vmul.f32 %v1163, %v1456
        %v1516 = vmul.f32 %v1165, %v1456
        %v1517 = vmul.f32 %v1167, %v1460
        %v1518 = vmul.f32 %v1169, %v1460
        %v1519 = vmul.f32 %v1171, %v1460
        %v1520 = vmul.f32 %v1173, %v1460
        %v1521 = vmul.f32 %v1175, %v1460
        %v1522 = vmul.f32 %v1177, %v1460
        %v1523 = vmul.f32 %v1179, %v1460
        %v1524 = vmul.f32 %v1181, %v1460
        %v1525 = vlaneseq
        %v1526 = vshrl.u32 %v1525, 7
        %v1527 = vsub.s32 0, %v1526
        %v1528 = vrot.slane %v1461, %v1527
        %v1529 = vlaneseq
        %v1530 = vshrl.u32 %v1529, 7
        %v1531 = vsub.s32 0, %v1530
        %v1532 = vrot.slane %v1462, %v1531
        %v1533 = vlaneseq
        %v1534 = vshrl.u32 %v1533, 7
        %v1535 = vsub.s32 0, %v1534
        %v1536 = vrot.slane %v1463, %v1535
        %v1537 = vlaneseq
        %v1538 = vshrl.u32 %v1537, 7
        %v1539 = vsub.s32 0, %v1538
        %v1540 = vrot.slane %v1464, %v1539
        %v1541 = vlaneseq
        %v1542 = vshrl.u32 %v1541, 7
        %v1543 = vsub.s32 0, %v1542
        %v1544 = vrot.slane %v1465, %v1543
        %v1545 = vlaneseq
        %v1546 = vshrl.u32 %v1545, 7
        %v1547 = vsub.s32 0, %v1546
        %v1548 = vrot.slane %v1466, %v1547
        %v1549 = vlaneseq
        %v1550 = vshrl.u32 %v1549, 7
        %v1551 = vsub.s32 0, %v1550
        %v1552 = vrot.slane %v1467, %v1551
        %v1553 = vlaneseq
        %v1554 = vshrl.u32 %v1553, 7
        %v1555 = vsub.s32 0, %v1554
        %v1556 = vrot.slane %v1468, %v1555
        %v1557 = vlaneseq
        %v1558 = vshrl.u32 %v1557, 7
        %v1559 = vsub.s32 0, %v1558
        %v1560 = vrot.slane %v1469, %v1559
        %v1561 = vlaneseq
        %v1562 = vshrl.u32 %v1561, 7
        %v1563 = vsub.s32 0, %v1562
        %v1564 = vrot.slane %v1470, %v1563
        %v1565 = vlaneseq
        %v1566 = vshrl.u32 %v1565, 7
        %v1567 = vsub.s32 0, %v1566
        %v1568 = vrot.slane %v1471, %v1567
        %v1569 = vlaneseq
        %v1570 = vshrl.u32 %v1569, 7
        %v1571 = vsub.s32 0, %v1570
        %v1572 = vrot.slane %v1472, %v1571
        %v1573 = vlaneseq
        %v1574 = vshrl.u32 %v1573, 7
        %v1575 = vsub.s32 0, %v1574
        %v1576 = vrot.slane %v1473, %v1575
        %v1577 = vlaneseq
        %v1578 = vshrl.u32 %v1577, 7
        %v1579 = vsub.s32 0, %v1578
        %v1580 = vrot.slane %v1474, %v1579
        %v1581 = vlaneseq
        %v1582 = vshrl.u32 %v1581, 7
        %v1583 = vsub.s32 0, %v1582
        %v1584 = vrot.slane %v1475, %v1583
        %v1585 = vlaneseq
        %v1586 = vshrl.u32 %v1585, 7
        %v1587 = vsub.s32 0, %v1586
        %v1588 = vrot.slane %v1476, %v1587
        %v1589 = vlaneseq
        %v1590 = vshrl.u32 %v1589, 7
        %v1591 = vsub.s32 0, %v1590
        %v1592 = vrot.slane %v1477, %v1591
        %v1593 = vlaneseq
        %v1594 = vshrl.u32 %v1593, 7
        %v1595 = vsub.s32 0, %v1594
        %v1596 = vrot.slane %v1478, %v1595
        %v1597 = vlaneseq
        %v1598 = vshrl.u32 %v1597, 7
        %v1599 = vsub.s32 0, %v1598
        %v1600 = vrot.slane %v1479, %v1599
        %v1601 = vlaneseq
        %v1602 = vshrl.u32 %v1601, 7
        %v1603 = vsub.s32 0, %v1602
        %v1604 = vrot.slane %v1480, %v1603
        %v1605 = vlaneseq
        %v1606 = vshrl.u32 %v1605, 7
        %v1607 = vsub.s32 0, %v1606
        %v1608 = vrot.slane %v1481, %v1607
        %v1609 = vlaneseq
        %v1610 = vshrl.u32 %v1609, 7
        %v1611 = vsub.s32 0, %v1610
        %v1612 = vrot.slane %v1482, %v1611
        %v1613 = vlaneseq
        %v1614 = vshrl.u32 %v1613, 7
        %v1615 = vsub.s32 0, %v1614
        %v1616 = vrot.slane %v1483, %v1615
        %v1617 = vlaneseq
        %v1618 = vshrl.u32 %v1617, 7
        %v1619 = vsub.s32 0, %v1618
        %v1620 = vrot.slane %v1484, %v1619
        %v1621 = vlaneseq
        %v1622 = vshrl.u32 %v1621, 7
        %v1623 = vsub.s32 0, %v1622
        %v1624 = vrot.slane %v1485, %v1623
        %v1625 = vlaneseq
        %v1626 = vshrl.u32 %v1625, 7
        %v1627 = vsub.s32 0, %v1626
        %v1628 = vrot.slane %v1486, %v1627
        %v1629 = vlaneseq
        %v1630 = vshrl.u32 %v1629, 7
        %v1631 = vsub.s32 0, %v1630
        %v1632 = vrot.slane %v1487, %v1631
        %v1633 = vlaneseq
        %v1634 = vshrl.u32 %v1633, 7
        %v1635 = vsub.s32 0, %v1634
        %v1636 = vrot.slane %v1488, %v1635
        %v1637 = vlaneseq
        %v1638 = vshrl.u32 %v1637, 7
        %v1639 = vsub.s32 0, %v1638
        %v1640 = vrot.slane %v1489, %v1639
        %v1641 = vlaneseq
        %v1642 = vshrl.u32 %v1641, 7
        %v1643 = vsub.s32 0, %v1642
        %v1644 = vrot.slane %v1490, %v1643
        %v1645 = vlaneseq
        %v1646 = vshrl.u32 %v1645, 7
        %v1647 = vsub.s32 0, %v1646
        %v1648 = vrot.slane %v1491, %v1647
        %v1649 = vlaneseq
        %v1650 = vshrl.u32 %v1649, 7
        %v1651 = vsub.s32 0, %v1650
        %v1652 = vrot.slane %v1492, %v1651
        %v1653 = vlaneseq
        %v1654 = vshrl.u32 %v1653, 7
        %v1655 = vsub.s32 0, %v1654
        %v1656 = vrot.slane %v1493, %v1655
        %v1657 = vlaneseq
        %v1658 = vshrl.u32 %v1657, 7
        %v1659 = vsub.s32 0, %v1658
        %v1660 = vrot.slane %v1494, %v1659
        %v1661 = vlaneseq
        %v1662 = vshrl.u32 %v1661, 7
        %v1663 = vsub.s32 0, %v1662
        %v1664 = vrot.slane %v1495, %v1663
        %v1665 = vlaneseq
        %v1666 = vshrl.u32 %v1665, 7
        %v1667 = vsub.s32 0, %v1666
        %v1668 = vrot.slane %v1496, %v1667
        %v1669 = vlaneseq
        %v1670 = vshrl.u32 %v1669, 7
        %v1671 = vsub.s32 0, %v1670
        %v1672 = vrot.slane %v1497, %v1671
        %v1673 = vlaneseq
        %v1674 = vshrl.u32 %v1673, 7
        %v1675 = vsub.s32 0, %v1674
        %v1676 = vrot.slane %v1498, %v1675
        %v1677 = vlaneseq
        %v1678 = vshrl.u32 %v1677, 7
        %v1679 = vsub.s32 0, %v1678
        %v1680 = vrot.slane %v1499, %v1679
        %v1681 = vlaneseq
        %v1682 = vshrl.u32 %v1681, 7
        %v1683 = vsub.s32 0, %v1682
        %v1684 = vrot.slane %v1500, %v1683
        %v1685 = vlaneseq
        %v1686 = vshrl.u32 %v1685, 7
        %v1687 = vsub.s32 0, %v1686
        %v1688 = vrot.slane %v1501, %v1687
        %v1689 = vlaneseq
        %v1690 = vshrl.u32 %v1689, 7
        %v1691 = vsub.s32 0, %v1690
        %v1692 = vrot.slane %v1502, %v1691
        %v1693 = vlaneseq
        %v1694 = vshrl.u32 %v1693, 7
        %v1695 = vsub.s32 0, %v1694
        %v1696 = vrot.slane %v1503, %v1695
        %v1697 = vlaneseq
        %v1698 = vshrl.u32 %v1697, 7
        %v1699 = vsub.s32 0, %v1698
        %v1700 = vrot.slane %v1504, %v1699
        %v1701 = vlaneseq
        %v1702 = vshrl.u32 %v1701, 7
        %v1703 = vsub.s32 0, %v1702
        %v1704 = vrot.slane %v1505, %v1703
        %v1705 = vlaneseq
        %v1706 = vshrl.u32 %v1705, 7
        %v1707 = vsub.s32 0, %v1706
        %v1708 = vrot.slane %v1506, %v1707
        %v1709 = vlaneseq
        %v1710 = vshrl.u32 %v1709, 7
        %v1711 = vsub.s32 0, %v1710
        %v1712 = vrot.slane %v1507, %v1711
        %v1713 = vlaneseq
        %v1714 = vshrl.u32 %v1713, 7
        %v1715 = vsub.s32 0, %v1714
        %v1716 = vrot.slane %v1508, %v1715
        %v1717 = vlaneseq
        %v1718 = vshrl.u32 %v1717, 7
        %v1719 = vsub.s32 0, %v1718
        %v1720 = vrot.slane %v1509, %v1719
        %v1721 = vlaneseq
        %v1722 = vshrl.u32 %v1721, 7
        %v1723 = vsub.s32 0, %v1722
        %v1724 = vrot.slane %v1510, %v1723
        %v1725 = vlaneseq
        %v1726 = vshrl.u32 %v1725, 7
        %v1727 = vsub.s32 0, %v1726
        %v1728 = vrot.slane %v1511, %v1727
        %v1729 = vlaneseq
        %v1730 = vshrl.u32 %v1729, 7
        %v1731 = vsub.s32 0, %v1730
        %v1732 = vrot.slane %v1512, %v1731
        %v1733 = vlaneseq
        %v1734 = vshrl.u32 %v1733, 7
        %v1735 = vsub.s32 0, %v1734
        %v1736 = vrot.slane %v1513, %v1735
        %v1737 = vlaneseq
        %v1738 = vshrl.u32 %v1737, 7
        %v1739 = vsub.s32 0, %v1738
        %v1740 = vrot.slane %v1514, %v1739
        %v1741 = vlaneseq
        %v1742 = vshrl.u32 %v1741, 7
        %v1743 = vsub.s32 0, %v1742
        %v1744 = vrot.slane %v1515, %v1743
        %v1745 = vlaneseq
        %v1746 = vshrl.u32 %v1745, 7
        %v1747 = vsub.s32 0, %v1746
        %v1748 = vrot.slane %v1516, %v1747
        %v1749 = vlaneseq
        %v1750 = vshrl.u32 %v1749, 7
        %v1751 = vsub.s32 0, %v1750
        %v1752 = vrot.slane %v1517, %v1751
        %v1753 = vlaneseq
        %v1754 = vshrl.u32 %v1753, 7
        %v1755 = vsub.s32 0, %v1754
        %v1756 = vrot.slane %v1518, %v1755
        %v1757 = vlaneseq
        %v1758 = vshrl.u32 %v1757, 7
        %v1759 = vsub.s32 0, %v1758
        %v1760 = vrot.slane %v1519, %v1759
        %v1761 = vlaneseq
        %v1762 = vshrl.u32 %v1761, 7
        %v1763 = vsub.s32 0, %v1762
        %v1764 = vrot.slane %v1520, %v1763
        %v1765 = vlaneseq
        %v1766 = vshrl.u32 %v1765, 7
        %v1767 = vsub.s32 0, %v1766
        %v1768 = vrot.slane %v1521, %v1767
        %v1769 = vlaneseq
        %v1770 = vshrl.u32 %v1769, 7
        %v1771 = vsub.s32 0, %v1770
        %v1772 = vrot.slane %v1522, %v1771
        %v1773 = vlaneseq
        %v1774 = vshrl.u32 %v1773, 7
        %v1775 = vsub.s32 0, %v1774
        %v1776 = vrot.slane %v1523, %v1775
        %v1777 = vlaneseq
        %v1778 = vshrl.u32 %v1777, 7
        %v1779 = vsub.s32 0, %v1778
        %v1780 = vrot.slane %v1524, %v1779
        %v1781 = vmul.f32 %v1528, %v478
        %v1782 = vmul.f32 %v1532, %v479
        %v1783 = vmul.f32 %v1536, %v480
        %v1784 = vmul.f32 %v1540, %v481
        %v1785 = vmul.f32 %v1544, %v482
        %v1786 = vmul.f32 %v1548, %v483
        %v1787 = vmul.f32 %v1552, %v484
        %v1788 = vmul.f32 %v1556, %v485
        %v1789 = vmul.f32 %v1560, %v478
        %v1790 = vmul.f32 %v1564, %v479
        %v1791 = vmul.f32 %v1568, %v480
        %v1792 = vmul.f32 %v1572, %v481
        %v1793 = vmul.f32 %v1576, %v482
        %v1794 = vmul.f32 %v1580, %v483
        %v1795 = vmul.f32 %v1584, %v484
        %v1796 = vmul.f32 %v1588, %v485
        %v1797 = vmul.f32 %v1592, %v478
        %v1798 = vmul.f32 %v1596, %v479
        %v1799 = vmul.f32 %v1600, %v480
        %v1800 = vmul.f32 %v1604, %v481
        %v1801 = vmul.f32 %v1608, %v482
        %v1802 = vmul.f32 %v1612, %v483
        %v1803 = vmul.f32 %v1616, %v484
        %v1804 = vmul.f32 %v1620, %v485
        %v1805 = vmul.f32 %v1624, %v478
        %v1806 = vmul.f32 %v1628, %v479
        %v1807 = vmul.f32 %v1632, %v480
        %v1808 = vmul.f32 %v1636, %v481
        %v1809 = vmul.f32 %v1640, %v482
        %v1810 = vmul.f32 %v1644, %v483
        %v1811 = vmul.f32 %v1648, %v484
        %v1812 = vmul.f32 %v1652, %v485
        %v1813 = vmul.f32 %v1656, %v478
        %v1814 = vmul.f32 %v1660, %v479
        %v1815 = vmul.f32 %v1664, %v480
        %v1816 = vmul.f32 %v1668, %v481
        %v1817 = vmul.f32 %v1672, %v482
        %v1818 = vmul.f32 %v1676, %v483
        %v1819 = vmul.f32 %v1680, %v484
        %v1820 = vmul.f32 %v1684, %v485
        %v1821 = vmul.f32 %v1688, %v478
        %v1822 = vmul.f32 %v1692, %v479
        %v1823 = vmul.f32 %v1696, %v480
        %v1824 = vmul.f32 %v1700, %v481
        %v1825 = vmul.f32 %v1704, %v482
        %v1826 = vmul.f32 %v1708, %v483
        %v1827 = vmul.f32 %v1712, %v484
        %v1828 = vmul.f32 %v1716, %v485
        %v1829 = vmul.f32 %v1720, %v478
        %v1830 = vmul.f32 %v1724, %v479
        %v1831 = vmul.f32 %v1728, %v480
        %v1832 = vmul.f32 %v1732, %v481
        %v1833 = vmul.f32 %v1736, %v482
        %v1834 = vmul.f32 %v1740, %v483
        %v1835 = vmul.f32 %v1744, %v484
        %v1836 = vmul.f32 %v1748, %v485
        %v1837 = vmul.f32 %v1752, %v478
        %v1838 = vmul.f32 %v1756, %v479
        %v1839 = vmul.f32 %v1760, %v480
        %v1840 = vmul.f32 %v1764, %v481
        %v1841 = vmul.f32 %v1768, %v482
        %v1842 = vmul.f32 %v1772, %v483
        %v1843 = vmul.f32 %v1776, %v484
        %v1844 = vmul.f32 %v1780, %v485
        %v1845 = vadd.f32 %v1781, %v1782
        %v1846 = vadd.f32 %v1845, %v1783
        %v1847 = vadd.f32 %v1846, %v1784
        %v1848 = vadd.f32 %v1847, %v1785
        %v1849 = vadd.f32 %v1848, %v1786
        %v1850 = vadd.f32 %v1849, %v1787
        %v1851 = vadd.f32 %v1850, %v1788
        %v1852 = vadd.f32 %v1789, %v1790
        %v1853 = vadd.f32 %v1852, %v1791
        %v1854 = vadd.f32 %v1853, %v1792
        %v1855 = vadd.f32 %v1854, %v1793
        %v1856 = vadd.f32 %v1855, %v1794
        %v1857 = vadd.f32 %v1856, %v1795
        %v1858 = vadd.f32 %v1857, %v1796
        %v1859 = vadd.f32 %v1797, %v1798
        %v1860 = vadd.f32 %v1859, %v1799
        %v1861 = vadd.f32 %v1860, %v1800
        %v1862 = vadd.f32 %v1861, %v1801
        %v1863 = vadd.f32 %v1862, %v1802
        %v1864 = vadd.f32 %v1863, %v1803
        %v1865 = vadd.f32 %v1864, %v1804
        %v1866 = vadd.f32 %v1805, %v1806
        %v1867 = vadd.f32 %v1866, %v1807
        %v1868 = vadd.f32 %v1867, %v1808
        %v1869 = vadd.f32 %v1868, %v1809
        %v1870 = vadd.f32 %v1869, %v1810
        %v1871 = vadd.f32 %v1870, %v1811
        %v1872 = vadd.f32 %v1871, %v1812
        %v1873 = vadd.f32 %v1813, %v1814
        %v1874 = vadd.f32 %v1873, %v1815
        %v1875 = vadd.f32 %v1874, %v1816
        %v1876 = vadd.f32 %v1875, %v1817
        %v1877 = vadd.f32 %v1876, %v1818
        %v1878 = vadd.f32 %v1877, %v1819
        %v1879 = vadd.f32 %v1878, %v1820
        %v1880 = vadd.f32 %v1821, %v1822
        %v1881 = vadd.f32 %v1880, %v1823
        %v1882 = vadd.f32 %v1881, %v1824
        %v1883 = vadd.f32 %v1882, %v1825
        %v1884 = vadd.f32 %v1883, %v1826
        %v1885 = vadd.f32 %v1884, %v1827
        %v1886 = vadd.f32 %v1885, %v1828
        %v1887 = vadd.f32 %v1829, %v1830
        %v1888 = vadd.f32 %v1887, %v1831
        %v1889 = vadd.f32 %v1888, %v1832
        %v1890 = vadd.f32 %v1889, %v1833
        %v1891 = vadd.f32 %v1890, %v1834
        %v1892 = vadd.f32 %v1891, %v1835
        %v1893 = vadd.f32 %v1892, %v1836
        %v1894 = vadd.f32 %v1837, %v1838
        %v1895 = vadd.f32 %v1894, %v1839
        %v1896 = vadd.f32 %v1895, %v1840
        %v1897 = vadd.f32 %v1896, %v1841
        %v1898 = vadd.f32 %v1897, %v1842
        %v1899 = vadd.f32 %v1898, %v1843
        %v1900 = vadd.f32 %v1899, %v1844
        %v1901 = vpack.c.bf16 %v1851, %v1851
        %v1902 = vpack.c.bf16 %v1858, %v1858
        %v1903 = vpack.c.bf16 %v1865, %v1865
        %v1904 = vpack.c.bf16 %v1872, %v1872
        %v1905 = vpack.c.bf16 %v1879, %v1879
        %v1906 = vpack.c.bf16 %v1886, %v1886
        %v1907 = vpack.c.bf16 %v1893, %v1893
        %v1908 = vpack.c.bf16 %v1900, %v1900
        %1909 = vst [vmem:[%s437] sm:$0xf] %v1901
        %1910 = vst [vmem:[%s437 + $0x4] sm:$0xf] %v1902
        %1911 = vst [vmem:[%s437 + $0x8] sm:$0xf] %v1903
        %1912 = vst [vmem:[%s437 + $0xc] sm:$0xf] %v1904
        %1913 = vst [vmem:[%s437 + $0x10] sm:$0xf] %v1905
        %1914 = vst [vmem:[%s437 + $0x14] sm:$0xf] %v1906
        %1915 = vst [vmem:[%s437 + $0x18] sm:$0xf] %v1907
        %1916 = vst [vmem:[%s437 + $0x1c] sm:$0xf] %v1908
        %s1917 = sand.u32 %s120, 1
        %s1918 = sand.u32 %s120, 1
        %s1919 = smul.addr %s1918, 32
        %s1920 = scalar_lea.vmem [#allocation5], %s1919
        // Predicated region
        $region156: #{transform_attention.8} parent=142 // pred_check
          %p1921 = pneg %p130
        $region157: #{transform_attention.8} parent=142 // pred_check_branch
          %1923 = sbr.rel (%p1921) target = $region159
        $region158: #{transform_attention.8} parent=142 // pred_region
          %s1924 = smul.addr %s18, 32
          %s1925 = sadd.s32 %s19, %s1924
          %s1926 = smul.addr %s1925, 4
          %s1927 = scalar_lea.vmem %s3, %s1926
          // Predicated region
          $region160: #{transform_attention.8} parent=158 // pred_check
            _
          $region161: #{transform_attention.8} parent=158 // pred_check_branch
            %1929 = sbr.rel (0) target = $region163
          $region162: #{transform_attention.8} parent=158 // pred_region
            // Predicated region
            $region164: #{transform_attention.8} parent=162 // pred_check
              _
            $region165: #{transform_attention.8} parent=162 // pred_check_branch
              %1931 = sbr.rel target = $region167
            $region166: #{transform_attention.8} parent=162 // pred_region
              // Predicated region
              $region179: #{transform_attention.8} parent=166 // pred_check
                _
              $region180: #{transform_attention.8} parent=166 // pred_check_branch
                %1960 = sbr.rel (0) target = $region182
              $region181: #{transform_attention.8} parent=166 // pred_region
                loop: start=0, step=1, limit=1
                $region183: #{transform_attention.8} parent=181 // loop_pre_header
                  _
                $region184: #{transform_attention.8} parent=181 // loop_header
                  %s1962 = sphi 0, %s1966
                  %p1963 = scmp.ge.s32.totalorder %s1962, 1
                  %s1967 = sphi %s1920, %s1920
                  %s1968 = sphi %s1927, %s1927
                $region185: #{transform_attention.8} parent=181 // loop_header_branch
                  %1965 = sbr.rel (%p1963) target = $region189
                $region186: #{transform_attention.8} parent=181 // loop_body
                  _
                $region187: #{transform_attention.8} parent=181 // loop_footer
                  %s1966 = sadd.s32 1, %s1962
                $region188: #{transform_attention.8} parent=181 // loop_footer_branch
                  %1961 = sbr.rel target = $region184
                $region189: #{transform_attention.8} parent=181 // loop_exit
                  _
                loop: start=0, step=1, limit=1
                $region190: #{transform_attention.8} parent=181 // loop_pre_header
                  _
                $region191: #{transform_attention.8} parent=181 // loop_header
                  %s1971 = sphi 0, %s1975
                  %p1972 = scmp.ge.s32.totalorder %s1971, 1
                  %s1976 = sphi %s1920, %s1920
                  %s1977 = sphi %s1927, %s1927
                $region192: #{transform_attention.8} parent=181 // loop_header_branch
                  %1974 = sbr.rel (%p1972) target = $region196
                $region193: #{transform_attention.8} parent=181 // loop_body
                  %v1978 = vld [vmem:[%s1976] sm:$0xf]
                  %1979 = vst [vmem:[%s1977] sm:$0xf] %v1978
                  %v1980 = vld [vmem:[%s1976 + $0x4] sm:$0xf]
                  %1981 = vst [vmem:[%s1977 + $0x10] sm:$0xf] %v1980
                  %v1982 = vld [vmem:[%s1976 + $0x8] sm:$0xf]
                  %1983 = vst [vmem:[%s1977 + $0x20] sm:$0xf] %v1982
                  %v1984 = vld [vmem:[%s1976 + $0xc] sm:$0xf]
                  %1985 = vst [vmem:[%s1977 + $0x30] sm:$0xf] %v1984
                  %v1986 = vld [vmem:[%s1976 + $0x10] sm:$0xf]
                  %1987 = vst [vmem:[%s1977 + $0x40] sm:$0xf] %v1986
                  %v1988 = vld [vmem:[%s1976 + $0x14] sm:$0xf]
                  %1989 = vst [vmem:[%s1977 + $0x50] sm:$0xf] %v1988
                  %v1990 = vld [vmem:[%s1976 + $0x18] sm:$0xf]
                  %1991 = vst [vmem:[%s1977 + $0x60] sm:$0xf] %v1990
                  %v1992 = vld [vmem:[%s1976 + $0x1c] sm:$0xf]
                  %1993 = vst [vmem:[%s1977 + $0x70] sm:$0xf] %v1992
                $region194: #{transform_attention.8} parent=181 // loop_footer
                  %s1975 = sadd.s32 1, %s1971
                $region195: #{transform_attention.8} parent=181 // loop_footer_branch
                  %1970 = sbr.rel target = $region191
                $region196: #{transform_attention.8} parent=181 // loop_exit
                  _
              $region182: #{transform_attention.8} parent=166 // pred_fallthru
                _
            $region167: #{transform_attention.8} parent=162 // pred_fallthru
              _
            // Predicated region
            $region168: #{transform_attention.8} parent=162 // pred_check
              _
            $region169: #{transform_attention.8} parent=162 // pred_check_branch
              %1933 = sbr.rel (0) target = $region171
            $region170: #{transform_attention.8} parent=162 // pred_region
              loop: start=0, step=1, limit=1
              $region172: #{transform_attention.8} parent=170 // loop_pre_header
                _
              $region173: #{transform_attention.8} parent=170 // loop_header
                %s1936 = sphi 0, %s1940
                %p1937 = scmp.ge.s32.totalorder %s1936, 1
                %s1941 = sphi %s1920, %s1920
                %s1942 = sphi %s1927, %s1927
              $region174: #{transform_attention.8} parent=170 // loop_header_branch
                %1939 = sbr.rel (%p1937) target = $region178
              $region175: #{transform_attention.8} parent=170 // loop_body
                %v1943 = vld [vmem:[%s1941] sm:$0xf]
                %1944 = vst [vmem:[%s1942] sm:$0xf] %v1943
                %v1945 = vld [vmem:[%s1941 + $0x4] sm:$0xf]
                %1946 = vst [vmem:[%s1942 + $0x10] sm:$0xf] %v1945
                %v1947 = vld [vmem:[%s1941 + $0x8] sm:$0xf]
                %1948 = vst [vmem:[%s1942 + $0x20] sm:$0xf] %v1947
                %v1949 = vld [vmem:[%s1941 + $0xc] sm:$0xf]
                %1950 = vst [vmem:[%s1942 + $0x30] sm:$0xf] %v1949
                %v1951 = vld [vmem:[%s1941 + $0x10] sm:$0xf]
                %1952 = vst [vmem:[%s1942 + $0x40] sm:$0xf] %v1951
                %v1953 = vld [vmem:[%s1941 + $0x14] sm:$0xf]
                %1954 = vst [vmem:[%s1942 + $0x50] sm:$0xf] %v1953
                %v1955 = vld [vmem:[%s1941 + $0x18] sm:$0xf]
                %1956 = vst [vmem:[%s1942 + $0x60] sm:$0xf] %v1955
                %v1957 = vld [vmem:[%s1941 + $0x1c] sm:$0xf]
                %1958 = vst [vmem:[%s1942 + $0x70] sm:$0xf] %v1957
              $region176: #{transform_attention.8} parent=170 // loop_footer
                %s1940 = sadd.s32 1, %s1936
              $region177: #{transform_attention.8} parent=170 // loop_footer_branch
                %1935 = sbr.rel target = $region173
              $region178: #{transform_attention.8} parent=170 // loop_exit
                _
            $region171: #{transform_attention.8} parent=162 // pred_fallthru
              _
          $region163: #{transform_attention.8} parent=158 // pred_fallthru
            _
          %1994 = vnop
        $region159: #{transform_attention.8} parent=142 // pred_fallthru
          _
      $region143: #{transform_attention.8} parent=5 // pred_fallthru
        _
      %p1995 = scmp.le.s32.totalorder 2, %s9
      // Predicated region
      $region197: #{transform_attention.8} parent=5 // pred_check
        %p1996 = pneg %p1995
      $region198: #{transform_attention.8} parent=5 // pred_check_branch
        %1998 = sbr.rel (%p1996) target = $region200
      $region199: #{transform_attention.8} parent=5 // pred_region
        %s1999 = ssub.s32 %s9, 2
        // Predicated region
        $region201: #{transform_attention.8} parent=199 // pred_check
          %p2000 = pneg %p136
        $region202: #{transform_attention.8} parent=199 // pred_check_branch
          %2002 = sbr.rel (%p2000) target = $region204
        $region203: #{transform_attention.8} parent=199 // pred_region
          %s2003 = sand.u32 %s121, 1
          %s2004 = sand.u32 %s121, 1
          %s2005 = smul.addr %s2004, 32
          %s2006 = scalar_lea.vmem [#allocation5], %s2005
        $region204: #{transform_attention.8} parent=199 // pred_fallthru
          _
      $region200: #{transform_attention.8} parent=5 // pred_fallthru
        _
    $region6: #{transform_attention.8} parent=1 // loop_footer
      %s13 = sadd.s32 1, %s9
    $region7: #{transform_attention.8} parent=1 // loop_footer_branch
      %8 = sbr.rel target = $region3
    $region8: #{transform_attention.8} parent=1 // loop_exit
      _

// kernel: transform_attention.7
$region0: #{transform_attention.7}
  #allocation0 [shape = 'u32[]', space=smem, size = 0x4, offset = 0x4, fixed_abs, tag = 'smem constant byte address 0x4 - core index']
  #allocation1 [shape = 'u32[144,128]{1,0:T(1,128)}', space=vmem, size = 0x12000, scoped, tag = 'internal scratch']
  %s0 = inlined_call_operand.vmem [shape: f32[16,128,32], index: 0, kind: input, shape index: {}]
  %s1 = inlined_call_operand.vmem [shape: f32[32,32], index: 1, kind: input, shape index: {}]
  %s2 = inlined_call_operand.vmem [shape: f32[32,1], index: 2, kind: input, shape index: {}]
  %s3 = inlined_call_operand.vmem [shape: bf16[16,32,128], index: 3, kind: output, shape index: {}]
  %s4 = sld [smem:[#allocation0]]
  $region45: #{transform_attention.7} parent=0
    _
  %s6 = ssub.s32 1, %s4
  %s7 = scalar_select 0, %s6, %s4
  loop: start=0, step=1, limit=6
  $region2: #{transform_attention.7} parent=0 // loop_pre_header
    _
  $region3: #{transform_attention.7} parent=0 // loop_header
    %s9 = sphi 0, %s13
    %p10 = scmp.ge.s32.totalorder %s9, 6
    %s19 = sphi 0, %s21
    %s22 = sphi 0, %s19
    %s23 = sphi 0, %s22
    %s39 = sphi 0, %s23
    %s43 = sphi 0, %s43
    %s45 = sphi 0, %s43
    %s46 = sphi 0, %s45
    %s60 = sphi 0, %s46
    %s64 = sphi 0, %s64
    %s66 = sphi 0, %s64
    %s67 = sphi 0, %s66
    %s81 = sphi 0, %s67
    %s87 = sphi 0, %s89
    %s90 = sphi 0, %s87
    %s91 = sphi 0, %s90
    %s107 = sphi 0, %s91
  $region4: #{transform_attention.7} parent=0 // loop_header_branch
    %12 = sbr.rel (%p10) target = $region8
  $region5: #{transform_attention.7} parent=0 // loop_body
    %s14 = ssub.s32 %s9, 1
    %s15 = ssub.s32 %s9, 2
    %s16 = sadd.s32 %s9, 1
    %s17 = ssub.s32 %s9, %s16
    %p18 = scmp.eq.s32.totalorder %s17, 0
    %s20 = sadd.s32 %s19, 1
    %s21 = scalar_select %p18, %s19, %s20
    %p24 = pneg %p18
    %p25 = scmp.eq.s32.totalorder %s9, 3
    %p26 = por %p24, %p25
    %p27 = scmp.ne.s32.totalorder %s19, %s22
    %p28 = scmp.eq.s32.totalorder %s9, 0
    %p29 = por %p27, %p28
    %p30 = scmp.ne.s32.totalorder %s19, %s22
    %p31 = scmp.eq.s32.totalorder %s14, 3
    %p32 = por %p30, %p31
    %p33 = scmp.ne.s32.totalorder %s22, %s23
    %p34 = scmp.eq.s32.totalorder %s14, 0
    %p35 = por %p33, %p34
    %p36 = scmp.ne.s32.totalorder %s22, %s23
    %p37 = scmp.eq.s32.totalorder %s15, 3
    %p38 = por %p36, %p37
    %p40 = scmp.ne.s32.totalorder %s23, %s39
    %p41 = scmp.eq.s32.totalorder %s15, 0
    %p42 = por %p40, %p41
    %s44 = sadd.s32 %s43, 1
    %p47 = scmp.eq.s32.totalorder %s9, 3
    %p48 = scmp.ne.s32.totalorder %s43, %s45
    %p49 = scmp.eq.s32.totalorder %s9, 0
    %p50 = por %p48, %p49
    %p51 = scmp.ne.s32.totalorder %s43, %s45
    %p52 = scmp.eq.s32.totalorder %s14, 3
    %p53 = por %p51, %p52
    %p54 = scmp.ne.s32.totalorder %s45, %s46
    %p55 = scmp.eq.s32.totalorder %s14, 0
    %p56 = por %p54, %p55
    %p57 = scmp.ne.s32.totalorder %s45, %s46
    %p58 = scmp.eq.s32.totalorder %s15, 3
    %p59 = por %p57, %p58
    %p61 = scmp.ne.s32.totalorder %s46, %s60
    %p62 = scmp.eq.s32.totalorder %s15, 0
    %p63 = por %p61, %p62
    %s65 = sadd.s32 %s64, 1
    %p68 = scmp.eq.s32.totalorder %s9, 3
    %p69 = scmp.ne.s32.totalorder %s64, %s66
    %p70 = scmp.eq.s32.totalorder %s9, 0
    %p71 = por %p69, %p70
    %p72 = scmp.ne.s32.totalorder %s64, %s66
    %p73 = scmp.eq.s32.totalorder %s14, 3
    %p74 = por %p72, %p73
    %p75 = scmp.ne.s32.totalorder %s66, %s67
    %p76 = scmp.eq.s32.totalorder %s14, 0
    %p77 = por %p75, %p76
    %p78 = scmp.ne.s32.totalorder %s66, %s67
    %p79 = scmp.eq.s32.totalorder %s15, 3
    %p80 = por %p78, %p79
    %p82 = scmp.ne.s32.totalorder %s67, %s81
    %p83 = scmp.eq.s32.totalorder %s15, 0
    %p84 = por %p82, %p83
    %s85 = ssub.s32 %s9, %s16
    %p86 = scmp.eq.s32.totalorder %s85, 0
    %s88 = sadd.s32 %s87, 1
    %s89 = scalar_select %p86, %s87, %s88
    %p92 = pneg %p86
    %p93 = scmp.eq.s32.totalorder %s9, 3
    %p94 = por %p92, %p93
    %p95 = scmp.ne.s32.totalorder %s87, %s90
    %p96 = scmp.eq.s32.totalorder %s9, 0
    %p97 = por %p95, %p96
    %p98 = scmp.ne.s32.totalorder %s87, %s90
    %p99 = scmp.eq.s32.totalorder %s14, 3
    %p100 = por %p98, %p99
    %p101 = scmp.ne.s32.totalorder %s90, %s91
    %p102 = scmp.eq.s32.totalorder %s14, 0
    %p103 = por %p101, %p102
    %p104 = scmp.ne.s32.totalorder %s90, %s91
    %p105 = scmp.eq.s32.totalorder %s15, 3
    %p106 = por %p104, %p105
    %p108 = scmp.ne.s32.totalorder %s91, %s107
    %p109 = scmp.eq.s32.totalorder %s15, 0
    %p110 = por %p108, %p109
    %p111 = scmp.le.s32.totalorder 1, %s9
    %p112 = scmp.lt.s32.totalorder %s9, 5
    %p113 = pnand %p111, %p112
    %p114 = pneg %p113
    // Predicated region
    $region9: #{transform_attention.7} parent=5 // pred_check
      _
    $region10: #{transform_attention.7} parent=5 // pred_check_branch
      %116 = sbr.rel (%p113) target = $region12
    $region11: #{transform_attention.7} parent=5 // pred_region
      %s117 = ssub.s32 %s9, 1
      // Predicated region
      $region13: #{transform_attention.7} parent=11 // pred_check
        %p118 = pneg %p56
      $region14: #{transform_attention.7} parent=11 // pred_check_branch
        %120 = sbr.rel (%p118) target = $region16
      $region15: #{transform_attention.7} parent=11 // pred_region
        _
      $region16: #{transform_attention.7} parent=11 // pred_fallthru
        _
      // Predicated region
      $region17: #{transform_attention.7} parent=11 // pred_check
        %p121 = pneg %p77
      $region18: #{transform_attention.7} parent=11 // pred_check_branch
        %123 = sbr.rel (%p121) target = $region20
      $region19: #{transform_attention.7} parent=11 // pred_region
        _
      $region20: #{transform_attention.7} parent=11 // pred_fallthru
        _
    $region12: #{transform_attention.7} parent=5 // pred_fallthru
      _
    %p124 = scmp.lt.s32.totalorder %s9, 4
    // Predicated region
    $region21: #{transform_attention.7} parent=5 // pred_check
      %p125 = pneg %p124
    $region22: #{transform_attention.7} parent=5 // pred_check_branch
      %127 = sbr.rel (%p125) target = $region24
    $region23: #{transform_attention.7} parent=5 // pred_region
      // Predicated region
      $region25: #{transform_attention.7} parent=23 // pred_check
        %p128 = pneg %p29
      $region26: #{transform_attention.7} parent=23 // pred_check_branch
        %130 = sbr.rel (%p128) target = $region28
      $region27: #{transform_attention.7} parent=23 // pred_region
        %s131 = smul.u32 4, %s9
        %p132 = scmp.lt.s32.totalorder %s131, 15
        %s133 = scalar_select %p132, %s131, 15
        %s134 = smul.addr %s133, 16
        %s135 = smul.addr %s134, 8
        %s136 = scalar_lea.vmem %s0, %s135
        %s137 = smul.u32 4, %s9
      $region28: #{transform_attention.7} parent=23 // pred_fallthru
        _
    $region24: #{transform_attention.7} parent=5 // pred_fallthru
      _
    %p138 = scmp.le.s32.totalorder 1, %s9
    %p139 = scmp.lt.s32.totalorder %s9, 5
    %p140 = pnand %p138, %p139
    %p141 = pneg %p140
    // Predicated region
    $region29: #{transform_attention.7} parent=5 // pred_check
      _
    $region30: #{transform_attention.7} parent=5 // pred_check_branch
      %143 = sbr.rel (%p140) target = $region32
    $region31: #{transform_attention.7} parent=5 // pred_region
      %s144 = ssub.s32 %s9, 1
      %s145 = smul.u32 4, %s14
      %p146 = scmp.lt.s32.totalorder %s145, 15
      %s147 = scalar_select %p146, %s145, 15
      %s148 = smul.addr %s147, 16
      %s149 = smul.addr %s148, 8
      %s150 = scalar_lea.vmem %s0, %s149
      %p151 = pneg %p35
      %p152 = pneg %p32
      %p153 = pneg %p56
      %p154 = pneg %p53
      %p155 = pneg %p77
      %p156 = pneg %p74
      %p157 = pneg %p103
      %p158 = pneg %p100
      %s159 = smul.u32 4, %s14
      %p160 = scmp.lt.s32.totalorder %s159, 15
      %s161 = scalar_select %p160, %s159, 15
      %s162 = smul.addr %s161, 4
      %s163 = smul.addr %s162, 4
      %s164 = scalar_lea.vmem %s3, %s163
      %s165 = smul.u32 4, %s14
      %p166 = scmp.lt.s32.totalorder %s165, 15
      %s167 = scalar_select %p166, %s165, 15
      %s168 = smul.addr %s167, 16
      %s169 = smul.addr %s168, 8
      %s170 = scalar_lea.vmem %s0, %s169
      %s171 = smul.u32 4, %s14
      %s172 = smul.u32 4, %s14
      %p173 = scmp.lt.s32.totalorder %s172, 15
      %s174 = scalar_select %p173, %s172, 15
      %s175 = smul.addr %s174, 4
      %s176 = smul.addr %s175, 4
      %s177 = scalar_lea.vmem %s3, %s176
      %s178 = smul.u32 4, %s14
      %v179 = vld [vmem:[%s1] sm:$0xff]
      %v180 = vld [vmem:[%s1 + $0x8] sm:$0xff]
      %v181 = vld [vmem:[%s1 + $0x10] sm:$0xff]
      %v182 = vld [vmem:[%s1 + $0x18] sm:$0xff]
      %v183 = vld [vmem:[%s2] sm:$0xff]
      %v184 = vld [vmem:[%s2 + $0x8] sm:$0xff]
      %v185 = vld [vmem:[%s2 + $0x10] sm:$0xff]
      %v186 = vld [vmem:[%s2 + $0x18] sm:$0xff]
      %v187 = vld [vmem:[%s170] sm:$0xff]
      %v188 = vld [vmem:[%s170 + $0x8] sm:$0xff]
      %v189 = vld [vmem:[%s170 + $0x10] sm:$0xff]
      %v190 = vld [vmem:[%s170 + $0x18] sm:$0xff]
      %v191 = vld [vmem:[%s170 + $0x20] sm:$0xff]
      %v192 = vld [vmem:[%s170 + $0x28] sm:$0xff]
      %v193 = vld [vmem:[%s170 + $0x30] sm:$0xff]
      %v194 = vld [vmem:[%s170 + $0x38] sm:$0xff]
      %v195 = vld [vmem:[%s170 + $0x40] sm:$0xff]
      %v196 = vld [vmem:[%s170 + $0x48] sm:$0xff]
      %v197 = vld [vmem:[%s170 + $0x50] sm:$0xff]
      %v198 = vld [vmem:[%s170 + $0x58] sm:$0xff]
      %v199 = vld [vmem:[%s170 + $0x60] sm:$0xff]
      %v200 = vld [vmem:[%s170 + $0x68] sm:$0xff]
      %v201 = vld [vmem:[%s170 + $0x70] sm:$0xff]
      %v202 = vld [vmem:[%s170 + $0x78] sm:$0xff]
      %204 = vset.pattern.permute.xlu0 0
      %205 = vperm.xlu0 %204, %v183
      %v206 = vpop.permute.xlu0 %205
      %209 = vset.pattern.permute.xlu0 0
      %210 = vperm.xlu0 %209, %v184
      %v211 = vpop.permute.xlu0 %210
      %214 = vset.pattern.permute.xlu0 0
      %215 = vperm.xlu0 %214, %v185
      %v216 = vpop.permute.xlu0 %215
      %219 = vset.pattern.permute.xlu0 0
      %220 = vperm.xlu0 %219, %v186
      %v221 = vpop.permute.xlu0 %220
      %vm223 = vcmask 261120
      %v225 = vsel %vm223, %v179, 0
      %v228 = vsel %vm223, %v180, 0
      %v231 = vsel %vm223, %v181, 0
      %v234 = vsel %vm223, %v182, 0
      %v237 = vsel %vm223, %v187, 0
      %v240 = vsel %vm223, %v188, 0
      %v243 = vsel %vm223, %v189, 0
      %v246 = vsel %vm223, %v190, 0
      %v249 = vsel %vm223, %v191, 0
      %v252 = vsel %vm223, %v192, 0
      %v255 = vsel %vm223, %v193, 0
      %v258 = vsel %vm223, %v194, 0
      %v261 = vsel %vm223, %v195, 0
      %v264 = vsel %vm223, %v196, 0
      %v267 = vsel %vm223, %v197, 0
      %v270 = vsel %vm223, %v198, 0
      %v273 = vsel %vm223, %v199, 0
      %v276 = vsel %vm223, %v200, 0
      %v279 = vsel %vm223, %v201, 0
      %v282 = vsel %vm223, %v202, 0
      %284 = vmatprep.subr.mxu0 0.0
      %285 = vmatpush1.xpose.msra.mxu0 %v237
      %286 = vmatprep.subr.mxu0 0.0
      %287 = vmatpush1.xpose.msra.mxu0 %v240
      %288 = vmatprep.subr.mxu0 0.0
      %289 = vmatpush1.xpose.msra.mxu0 %v243
      %290 = vmatprep.subr.mxu0 0.0
      %291 = vmatpush1.xpose.msra.mxu0 %v246
      %292 = vmatprep.subr.mxu0 0.0
      %293 = vmatpush1.xpose.msra.mxu0 %v249
      %294 = vmatprep.subr.mxu0 0.0
      %295 = vmatpush1.xpose.msra.mxu0 %v252
      %296 = vmatprep.subr.mxu0 0.0
      %297 = vmatpush1.xpose.msra.mxu0 %v255
      %298 = vmatprep.subr.mxu0 0.0
      %299 = vmatpush1.xpose.msra.mxu0 %v258
      %300 = vmatprep.subr.mxu0 0.0
      %301 = vmatpush1.xpose.msra.mxu0 %v261
      %302 = vmatprep.subr.mxu0 0.0
      %303 = vmatpush1.xpose.msra.mxu0 %v264
      %304 = vmatprep.subr.mxu0 0.0
      %305 = vmatpush1.xpose.msra.mxu0 %v267
      %306 = vmatprep.subr.mxu0 0.0
      %307 = vmatpush1.xpose.msra.mxu0 %v270
      %308 = vmatprep.subr.mxu0 0.0
      %309 = vmatpush1.xpose.msra.mxu0 %v273
      %310 = vmatprep.subr.mxu0 0.0
      %311 = vmatpush1.xpose.msra.mxu0 %v276
      %312 = vmatprep.subr.mxu0 0.0
      %313 = vmatpush1.xpose.msra.mxu0 %v279
      %314 = vmatprep.subr.mxu0 0.0
      %315 = vmatpush1.xpose.msra.mxu0 %v282
      %316 = vmatprep.subr.mxu0 0.0
      %317 = vmatpush1.xpose.msra.mxu0 0.0
      %318 = vmatprep.subr.mxu0 0.0
      %319 = vmatpush1.xpose.msra.mxu0 0.0
      %320 = vmatprep.subr.mxu0 0.0
      %321 = vmatpush1.xpose.msra.mxu0 0.0
      %322 = vmatprep.subr.mxu0 0.0
      %323 = vmatpush1.xpose.msra.mxu0 0.0
      %324 = vmatprep.subr.mxu0 0.0
      %325 = vmatpush1.xpose.msra.mxu0 0.0
      %326 = vmatprep.subr.mxu0 0.0
      %327 = vmatpush1.xpose.msra.mxu0 0.0
      %328 = vmatprep.subr.mxu0 0.0
      %329 = vmatpush1.xpose.msra.mxu0 0.0
      %330 = vmatprep.subr.mxu0 0.0
      %331 = vmatpush1.xpose.msra.mxu0 0.0
      %332 = vmatprep.subr.mxu0 0.0
      %333 = vmatpush1.xpose.msra.mxu0 0.0
      %334 = vmatprep.subr.mxu0 0.0
      %335 = vmatpush1.xpose.msra.mxu0 0.0
      %336 = vmatprep.subr.mxu0 0.0
      %337 = vmatpush1.xpose.msra.mxu0 0.0
      %338 = vmatprep.subr.mxu0 0.0
      %339 = vmatpush1.xpose.msra.mxu0 0.0
      %340 = vmatprep.subr.mxu0 0.0
      %341 = vmatpush1.xpose.msra.mxu0 0.0
      %342 = vmatprep.subr.mxu0 0.0
      %343 = vmatpush1.xpose.msra.mxu0 0.0
      %344 = vmatprep.subr.mxu0 0.0
      %345 = vmatpush1.xpose.msra.mxu0 0.0
      %346 = vmatprep.subr.mxu0 0.0
      %347 = vmatpush1.xpose.msra.mxu0 0.0
      %348 = vmatprep.mubr.f32.mxu0 0.0
      %349 = vmatmul.mubr.f32.gmra.mrb[0].mxu0 %v225
      %v350 = vpop.f32.mrb[0].mxu0
      %v351 = vadd.f32 %v206, %v350
      %v352 = vpop.f32.mrb[0].mxu0
      %353 = vmatprep.mubr.f32.mxu0 0.0
      %354 = vmatmul.mubr.f32.gmra.mrb[0].mxu0 %v228
      %v355 = vpop.f32.mrb[0].mxu0
      %v356 = vadd.f32 %v211, %v355
      %v357 = vpop.f32.mrb[0].mxu0
      %358 = vmatprep.mubr.f32.mxu0 0.0
      %359 = vmatmul.mubr.f32.gmra.mrb[0].mxu0 %v231
      %v360 = vpop.f32.mrb[0].mxu0
      %v361 = vadd.f32 %v216, %v360
      %v362 = vpop.f32.mrb[0].mxu0
      %363 = vmatprep.mubr.f32.mxu0 0.0
      %364 = vmatmul.mubr.f32.gmra.mrb[0].mxu0 %v234
      %v365 = vpop.f32.mrb[0].mxu0
      %v366 = vadd.f32 %v221, %v365
      %v367 = vpop.f32.mrb[0].mxu0
      %368 = vdwg.mxu0
      %v369 = vmax.f32 %v351, 0.0
      %v370 = vmax.f32 %v356, 0.0
      %v371 = vmax.f32 %v361, 0.0
      %v372 = vmax.f32 %v366, 0.0
      %v373 = vpack.c.bf16 %v370, %v369
      %v374 = vpack.c.bf16 %v372, %v371
      %v377 = vunpack.c.l.b16 %v373
      %v378 = vunpack.c.h.b16 %v373
      %v379 = vunpack.c.l.b16 %v374
      %v380 = vunpack.c.h.b16 %v374
      %v381 = vpack.c.b16 %v377, %v377
      %v382 = vpack.c.b16 %v378, %v378
      %v383 = vpack.c.b16 %v379, %v379
      %v384 = vpack.c.b16 %v380, %v380
      %389 = vst [vmem:[%s177] sm:$0xf] %v381
      %390 = vst [vmem:[%s177 + $0x4] sm:$0xf] %v382
      %391 = vst [vmem:[%s177 + $0x8] sm:$0xf] %v383
      %392 = vst [vmem:[%s177 + $0xc] sm:$0xf] %v384
      %s393 = scalar_lea.vmem %s170, 128
      %v394 = vld [vmem:[%s393] sm:$0xff]
      %v395 = vld [vmem:[%s393 + $0x8] sm:$0xff]
      %v396 = vld [vmem:[%s393 + $0x10] sm:$0xff]
      %v397 = vld [vmem:[%s393 + $0x18] sm:$0xff]
      %v398 = vld [vmem:[%s393 + $0x20] sm:$0xff]
      %v399 = vld [vmem:[%s393 + $0x28] sm:$0xff]
      %v400 = vld [vmem:[%s393 + $0x30] sm:$0xff]
      %v401 = vld [vmem:[%s393 + $0x38] sm:$0xff]
      %v402 = vld [vmem:[%s393 + $0x40] sm:$0xff]
      %v403 = vld [vmem:[%s393 + $0x48] sm:$0xff]
      %v404 = vld [vmem:[%s393 + $0x50] sm:$0xff]
      %v405 = vld [vmem:[%s393 + $0x58] sm:$0xff]
      %v406 = vld [vmem:[%s393 + $0x60] sm:$0xff]
      %v407 = vld [vmem:[%s393 + $0x68] sm:$0xff]
      %v408 = vld [vmem:[%s393 + $0x70] sm:$0xff]
      %v409 = vld [vmem:[%s393 + $0x78] sm:$0xff]
      %v411 = vsel %vm223, %v394, 0
      %v414 = vsel %vm223, %v395, 0
      %v417 = vsel %vm223, %v396, 0
      %v420 = vsel %vm223, %v397, 0
      %v423 = vsel %vm223, %v398, 0
      %v426 = vsel %vm223, %v399, 0
      %v429 = vsel %vm223, %v400, 0
      %v432 = vsel %vm223, %v401, 0
      %v435 = vsel %vm223, %v402, 0
      %v438 = vsel %vm223, %v403, 0
      %v441 = vsel %vm223, %v404, 0
      %v444 = vsel %vm223, %v405, 0
      %v447 = vsel %vm223, %v406, 0
      %v450 = vsel %vm223, %v407, 0
      %v453 = vsel %vm223, %v408, 0
      %v456 = vsel %vm223, %v409, 0
      %458 = vmatprep.subr.mxu0 0.0
      %459 = vmatpush1.xpose.msra.mxu0 %v411
      %460 = vmatprep.subr.mxu0 0.0
      %461 = vmatpush1.xpose.msra.mxu0 %v414
      %462 = vmatprep.subr.mxu0 0.0
      %463 = vmatpush1.xpose.msra.mxu0 %v417
      %464 = vmatprep.subr.mxu0 0.0
      %465 = vmatpush1.xpose.msra.mxu0 %v420
      %466 = vmatprep.subr.mxu0 0.0
      %467 = vmatpush1.xpose.msra.mxu0 %v423
      %468 = vmatprep.subr.mxu0 0.0
      %469 = vmatpush1.xpose.msra.mxu0 %v426
      %470 = vmatprep.subr.mxu0 0.0
      %471 = vmatpush1.xpose.msra.mxu0 %v429
      %472 = vmatprep.subr.mxu0 0.0
      %473 = vmatpush1.xpose.msra.mxu0 %v432
      %474 = vmatprep.subr.mxu0 0.0
      %475 = vmatpush1.xpose.msra.mxu0 %v435
      %476 = vmatprep.subr.mxu0 0.0
      %477 = vmatpush1.xpose.msra.mxu0 %v438
      %478 = vmatprep.subr.mxu0 0.0
      %479 = vmatpush1.xpose.msra.mxu0 %v441
      %480 = vmatprep.subr.mxu0 0.0
      %481 = vmatpush1.xpose.msra.mxu0 %v444
      %482 = vmatprep.subr.mxu0 0.0
      %483 = vmatpush1.xpose.msra.mxu0 %v447
      %484 = vmatprep.subr.mxu0 0.0
      %485 = vmatpush1.xpose.msra.mxu0 %v450
      %486 = vmatprep.subr.mxu0 0.0
      %487 = vmatpush1.xpose.msra.mxu0 %v453
      %488 = vmatprep.subr.mxu0 0.0
      %489 = vmatpush1.xpose.msra.mxu0 %v456
      %490 = vmatprep.subr.mxu0 0.0
      %491 = vmatpush1.xpose.msra.mxu0 0.0
      %492 = vmatprep.subr.mxu0 0.0
      %493 = vmatpush1.xpose.msra.mxu0 0.0
      %494 = vmatprep.subr.mxu0 0.0
      %495 = vmatpush1.xpose.msra.mxu0 0.0
      %496 = vmatprep.subr.mxu0 0.0
      %497 = vmatpush1.xpose.msra.mxu0 0.0
      %498 = vmatprep.subr.mxu0 0.0
      %499 = vmatpush1.xpose.msra.mxu0 0.0
      %500 = vmatprep.subr.mxu0 0.0
      %501 = vmatpush1.xpose.msra.mxu0 0.0
      %502 = vmatprep.subr.mxu0 0.0
      %503 = vmatpush1.xpose.msra.mxu0 0.0
      %504 = vmatprep.subr.mxu0 0.0
      %505 = vmatpush1.xpose.msra.mxu0 0.0
      %506 = vmatprep.subr.mxu0 0.0
      %507 = vmatpush1.xpose.msra.mxu0 0.0
      %508 = vmatprep.subr.mxu0 0.0
      %509 = vmatpush1.xpose.msra.mxu0 0.0
      %510 = vmatprep.subr.mxu0 0.0
      %511 = vmatpush1.xpose.msra.mxu0 0.0
      %512 = vmatprep.subr.mxu0 0.0
      %513 = vmatpush1.xpose.msra.mxu0 0.0
      %514 = vmatprep.subr.mxu0 0.0
      %515 = vmatpush1.xpose.msra.mxu0 0.0
      %516 = vmatprep.subr.mxu0 0.0
      %517 = vmatpush1.xpose.msra.mxu0 0.0
      %518 = vmatprep.subr.mxu0 0.0
      %519 = vmatpush1.xpose.msra.mxu0 0.0
      %520 = vmatprep.subr.mxu0 0.0
      %521 = vmatpush1.xpose.msra.mxu0 0.0
      %522 = vmatprep.mubr.f32.mxu0 0.0
      %523 = vmatmul.mubr.f32.gmra.mrb[0].mxu0 %v225
      %v524 = vpop.f32.mrb[0].mxu0
      %v525 = vadd.f32 %v206, %v524
      %v526 = vpop.f32.mrb[0].mxu0
      %527 = vmatprep.mubr.f32.mxu0 0.0
      %528 = vmatmul.mubr.f32.gmra.mrb[0].mxu0 %v228
      %v529 = vpop.f32.mrb[0].mxu0
      %v530 = vadd.f32 %v211, %v529
      %v531 = vpop.f32.mrb[0].mxu0
      %532 = vmatprep.mubr.f32.mxu0 0.0
      %533 = vmatmul.mubr.f32.gmra.mrb[0].mxu0 %v231
      %v534 = vpop.f32.mrb[0].mxu0
      %v535 = vadd.f32 %v216, %v534
      %v536 = vpop.f32.mrb[0].mxu0
      %537 = vmatprep.mubr.f32.mxu0 0.0
      %538 = vmatmul.mubr.f32.gmra.mrb[0].mxu0 %v234
      %v539 = vpop.f32.mrb[0].mxu0
      %v540 = vadd.f32 %v221, %v539
      %v541 = vpop.f32.mrb[0].mxu0
      %542 = vdwg.mxu0
      %v543 = vmax.f32 %v525, 0.0
      %v544 = vmax.f32 %v530, 0.0
      %v545 = vmax.f32 %v535, 0.0
      %v546 = vmax.f32 %v540, 0.0
      %v547 = vpack.c.bf16 %v544, %v543
      %v548 = vpack.c.bf16 %v546, %v545
      %v551 = vunpack.c.l.b16 %v547
      %v552 = vunpack.c.h.b16 %v547
      %v553 = vunpack.c.l.b16 %v548
      %v554 = vunpack.c.h.b16 %v548
      %v555 = vpack.c.b16 %v551, %v551
      %v556 = vpack.c.b16 %v552, %v552
      %v557 = vpack.c.b16 %v553, %v553
      %v558 = vpack.c.b16 %v554, %v554
      %s563 = scalar_lea.vmem %s177, 16
      %564 = vst [vmem:[%s563] sm:$0xf] %v555
      %565 = vst [vmem:[%s563 + $0x4] sm:$0xf] %v556
      %566 = vst [vmem:[%s563 + $0x8] sm:$0xf] %v557
      %567 = vst [vmem:[%s563 + $0xc] sm:$0xf] %v558
      %s568 = scalar_lea.vmem %s170, 256
      %v569 = vld [vmem:[%s568] sm:$0xff]
      %v570 = vld [vmem:[%s568 + $0x8] sm:$0xff]
      %v571 = vld [vmem:[%s568 + $0x10] sm:$0xff]
      %v572 = vld [vmem:[%s568 + $0x18] sm:$0xff]
      %v573 = vld [vmem:[%s568 + $0x20] sm:$0xff]
      %v574 = vld [vmem:[%s568 + $0x28] sm:$0xff]
      %v575 = vld [vmem:[%s568 + $0x30] sm:$0xff]
      %v576 = vld [vmem:[%s568 + $0x38] sm:$0xff]
      %v577 = vld [vmem:[%s568 + $0x40] sm:$0xff]
      %v578 = vld [vmem:[%s568 + $0x48] sm:$0xff]
      %v579 = vld [vmem:[%s568 + $0x50] sm:$0xff]
      %v580 = vld [vmem:[%s568 + $0x58] sm:$0xff]
      %v581 = vld [vmem:[%s568 + $0x60] sm:$0xff]
      %v582 = vld [vmem:[%s568 + $0x68] sm:$0xff]
      %v583 = vld [vmem:[%s568 + $0x70] sm:$0xff]
      %v584 = vld [vmem:[%s568 + $0x78] sm:$0xff]
      %v586 = vsel %vm223, %v569, 0
      %v589 = vsel %vm223, %v570, 0
      %v592 = vsel %vm223, %v571, 0
      %v595 = vsel %vm223, %v572, 0
      %v598 = vsel %vm223, %v573, 0
      %v601 = vsel %vm223, %v574, 0
      %v604 = vsel %vm223, %v575, 0
      %v607 = vsel %vm223, %v576, 0
      %v610 = vsel %vm223, %v577, 0
      %v613 = vsel %vm223, %v578, 0
      %v616 = vsel %vm223, %v579, 0
      %v619 = vsel %vm223, %v580, 0
      %v622 = vsel %vm223, %v581, 0
      %v625 = vsel %vm223, %v582, 0
      %v628 = vsel %vm223, %v583, 0
      %v631 = vsel %vm223, %v584, 0
      %633 = vmatprep.subr.mxu0 0.0
      %634 = vmatpush1.xpose.msra.mxu0 %v586
      %635 = vmatprep.subr.mxu0 0.0
      %636 = vmatpush1.xpose.msra.mxu0 %v589
      %637 = vmatprep.subr.mxu0 0.0
      %638 = vmatpush1.xpose.msra.mxu0 %v592
      %639 = vmatprep.subr.mxu0 0.0
      %640 = vmatpush1.xpose.msra.mxu0 %v595
      %641 = vmatprep.subr.mxu0 0.0
      %642 = vmatpush1.xpose.msra.mxu0 %v598
      %643 = vmatprep.subr.mxu0 0.0
      %644 = vmatpush1.xpose.msra.mxu0 %v601
      %645 = vmatprep.subr.mxu0 0.0
      %646 = vmatpush1.xpose.msra.mxu0 %v604
      %647 = vmatprep.subr.mxu0 0.0
      %648 = vmatpush1.xpose.msra.mxu0 %v607
      %649 = vmatprep.subr.mxu0 0.0
      %650 = vmatpush1.xpose.msra.mxu0 %v610
      %651 = vmatprep.subr.mxu0 0.0
      %652 = vmatpush1.xpose.msra.mxu0 %v613
      %653 = vmatprep.subr.mxu0 0.0
      %654 = vmatpush1.xpose.msra.mxu0 %v616
      %655 = vmatprep.subr.mxu0 0.0
      %656 = vmatpush1.xpose.msra.mxu0 %v619
      %657 = vmatprep.subr.mxu0 0.0
      %658 = vmatpush1.xpose.msra.mxu0 %v622
      %659 = vmatprep.subr.mxu0 0.0
      %660 = vmatpush1.xpose.msra.mxu0 %v625
      %661 = vmatprep.subr.mxu0 0.0
      %662 = vmatpush1.xpose.msra.mxu0 %v628
      %663 = vmatprep.subr.mxu0 0.0
      %664 = vmatpush1.xpose.msra.mxu0 %v631
      %665 = vmatprep.subr.mxu0 0.0
      %666 = vmatpush1.xpose.msra.mxu0 0.0
      %667 = vmatprep.subr.mxu0 0.0
      %668 = vmatpush1.xpose.msra.mxu0 0.0
      %669 = vmatprep.subr.mxu0 0.0
      %670 = vmatpush1.xpose.msra.mxu0 0.0
      %671 = vmatprep.subr.mxu0 0.0
      %672 = vmatpush1.xpose.msra.mxu0 0.0
      %673 = vmatprep.subr.mxu0 0.0
      %674 = vmatpush1.xpose.msra.mxu0 0.0
      %675 = vmatprep.subr.mxu0 0.0
      %676 = vmatpush1.xpose.msra.mxu0 0.0
      %677 = vmatprep.subr.mxu0 0.0
      %678 = vmatpush1.xpose.msra.mxu0 0.0
      %679 = vmatprep.subr.mxu0 0.0
      %680 = vmatpush1.xpose.msra.mxu0 0.0
      %681 = vmatprep.subr.mxu0 0.0
      %682 = vmatpush1.xpose.msra.mxu0 0.0
      %683 = vmatprep.subr.mxu0 0.0
      %684 = vmatpush1.xpose.msra.mxu0 0.0
      %685 = vmatprep.subr.mxu0 0.0
      %686 = vmatpush1.xpose.msra.mxu0 0.0
      %687 = vmatprep.subr.mxu0 0.0
      %688 = vmatpush1.xpose.msra.mxu0 0.0
      %689 = vmatprep.subr.mxu0 0.0
      %690 = vmatpush1.xpose.msra.mxu0 0.0
      %691 = vmatprep.subr.mxu0 0.0
      %692 = vmatpush1.xpose.msra.mxu0 0.0
      %693 = vmatprep.subr.mxu0 0.0
      %694 = vmatpush1.xpose.msra.mxu0 0.0
      %695 = vmatprep.subr.mxu0 0.0
      %696 = vmatpush1.xpose.msra.mxu0 0.0
      %697 = vmatprep.mubr.f32.mxu0 0.0
      %698 = vmatmul.mubr.f32.gmra.mrb[0].mxu0 %v225
      %v699 = vpop.f32.mrb[0].mxu0
      %v700 = vadd.f32 %v206, %v699
      %v701 = vpop.f32.mrb[0].mxu0
      %702 = vmatprep.mubr.f32.mxu0 0.0
      %703 = vmatmul.mubr.f32.gmra.mrb[0].mxu0 %v228
      %v704 = vpop.f32.mrb[0].mxu0
      %v705 = vadd.f32 %v211, %v704
      %v706 = vpop.f32.mrb[0].mxu0
      %707 = vmatprep.mubr.f32.mxu0 0.0
      %708 = vmatmul.mubr.f32.gmra.mrb[0].mxu0 %v231
      %v709 = vpop.f32.mrb[0].mxu0
      %v710 = vadd.f32 %v216, %v709
      %v711 = vpop.f32.mrb[0].mxu0
      %712 = vmatprep.mubr.f32.mxu0 0.0
      %713 = vmatmul.mubr.f32.gmra.mrb[0].mxu0 %v234
      %v714 = vpop.f32.mrb[0].mxu0
      %v715 = vadd.f32 %v221, %v714
      %v716 = vpop.f32.mrb[0].mxu0
      %717 = vdwg.mxu0
      %v718 = vmax.f32 %v700, 0.0
      %v719 = vmax.f32 %v705, 0.0
      %v720 = vmax.f32 %v710, 0.0
      %v721 = vmax.f32 %v715, 0.0
      %v722 = vpack.c.bf16 %v719, %v718
      %v723 = vpack.c.bf16 %v721, %v720
      %v726 = vunpack.c.l.b16 %v722
      %v727 = vunpack.c.h.b16 %v722
      %v728 = vunpack.c.l.b16 %v723
      %v729 = vunpack.c.h.b16 %v723
      %v730 = vpack.c.b16 %v726, %v726
      %v731 = vpack.c.b16 %v727, %v727
      %v732 = vpack.c.b16 %v728, %v728
      %v733 = vpack.c.b16 %v729, %v729
      %s738 = scalar_lea.vmem %s177, 32
      %739 = vst [vmem:[%s738] sm:$0xf] %v730
      %740 = vst [vmem:[%s738 + $0x4] sm:$0xf] %v731
      %741 = vst [vmem:[%s738 + $0x8] sm:$0xf] %v732
      %742 = vst [vmem:[%s738 + $0xc] sm:$0xf] %v733
      %s743 = scalar_lea.vmem %s170, 384
      %v744 = vld [vmem:[%s743] sm:$0xff]
      %v745 = vld [vmem:[%s743 + $0x8] sm:$0xff]
      %v746 = vld [vmem:[%s743 + $0x10] sm:$0xff]
      %v747 = vld [vmem:[%s743 + $0x18] sm:$0xff]
      %v748 = vld [vmem:[%s743 + $0x20] sm:$0xff]
      %v749 = vld [vmem:[%s743 + $0x28] sm:$0xff]
      %v750 = vld [vmem:[%s743 + $0x30] sm:$0xff]
      %v751 = vld [vmem:[%s743 + $0x38] sm:$0xff]
      %v752 = vld [vmem:[%s743 + $0x40] sm:$0xff]
      %v753 = vld [vmem:[%s743 + $0x48] sm:$0xff]
      %v754 = vld [vmem:[%s743 + $0x50] sm:$0xff]
      %v755 = vld [vmem:[%s743 + $0x58] sm:$0xff]
      %v756 = vld [vmem:[%s743 + $0x60] sm:$0xff]
      %v757 = vld [vmem:[%s743 + $0x68] sm:$0xff]
      %v758 = vld [vmem:[%s743 + $0x70] sm:$0xff]
      %v759 = vld [vmem:[%s743 + $0x78] sm:$0xff]
      %v761 = vsel %vm223, %v744, 0
      %v764 = vsel %vm223, %v745, 0
      %v767 = vsel %vm223, %v746, 0
      %v770 = vsel %vm223, %v747, 0
      %v773 = vsel %vm223, %v748, 0
      %v776 = vsel %vm223, %v749, 0
      %v779 = vsel %vm223, %v750, 0
      %v782 = vsel %vm223, %v751, 0
      %v785 = vsel %vm223, %v752, 0
      %v788 = vsel %vm223, %v753, 0
      %v791 = vsel %vm223, %v754, 0
      %v794 = vsel %vm223, %v755, 0
      %v797 = vsel %vm223, %v756, 0
      %v800 = vsel %vm223, %v757, 0
      %v803 = vsel %vm223, %v758, 0
      %v806 = vsel %vm223, %v759, 0
      %808 = vmatprep.subr.mxu0 0.0
      %809 = vmatpush1.xpose.msra.mxu0 %v761
      %810 = vmatprep.subr.mxu0 0.0
      %811 = vmatpush1.xpose.msra.mxu0 %v764
      %812 = vmatprep.subr.mxu0 0.0
      %813 = vmatpush1.xpose.msra.mxu0 %v767
      %814 = vmatprep.subr.mxu0 0.0
      %815 = vmatpush1.xpose.msra.mxu0 %v770
      %816 = vmatprep.subr.mxu0 0.0
      %817 = vmatpush1.xpose.msra.mxu0 %v773
      %818 = vmatprep.subr.mxu0 0.0
      %819 = vmatpush1.xpose.msra.mxu0 %v776
      %820 = vmatprep.subr.mxu0 0.0
      %821 = vmatpush1.xpose.msra.mxu0 %v779
      %822 = vmatprep.subr.mxu0 0.0
      %823 = vmatpush1.xpose.msra.mxu0 %v782
      %824 = vmatprep.subr.mxu0 0.0
      %825 = vmatpush1.xpose.msra.mxu0 %v785
      %826 = vmatprep.subr.mxu0 0.0
      %827 = vmatpush1.xpose.msra.mxu0 %v788
      %828 = vmatprep.subr.mxu0 0.0
      %829 = vmatpush1.xpose.msra.mxu0 %v791
      %830 = vmatprep.subr.mxu0 0.0
      %831 = vmatpush1.xpose.msra.mxu0 %v794
      %832 = vmatprep.subr.mxu0 0.0
      %833 = vmatpush1.xpose.msra.mxu0 %v797
      %834 = vmatprep.subr.mxu0 0.0
      %835 = vmatpush1.xpose.msra.mxu0 %v800
      %836 = vmatprep.subr.mxu0 0.0
      %837 = vmatpush1.xpose.msra.mxu0 %v803
      %838 = vmatprep.subr.mxu0 0.0
      %839 = vmatpush1.xpose.msra.mxu0 %v806
      %840 = vmatprep.subr.mxu0 0.0
      %841 = vmatpush1.xpose.msra.mxu0 0.0
      %842 = vmatprep.subr.mxu0 0.0
      %843 = vmatpush1.xpose.msra.mxu0 0.0
      %844 = vmatprep.subr.mxu0 0.0
      %845 = vmatpush1.xpose.msra.mxu0 0.0
      %846 = vmatprep.subr.mxu0 0.0
      %847 = vmatpush1.xpose.msra.mxu0 0.0
      %848 = vmatprep.subr.mxu0 0.0
      %849 = vmatpush1.xpose.msra.mxu0 0.0
      %850 = vmatprep.subr.mxu0 0.0
      %851 = vmatpush1.xpose.msra.mxu0 0.0
      %852 = vmatprep.subr.mxu0 0.0
      %853 = vmatpush1.xpose.msra.mxu0 0.0
      %854 = vmatprep.subr.mxu0 0.0
      %855 = vmatpush1.xpose.msra.mxu0 0.0
      %856 = vmatprep.subr.mxu0 0.0
      %857 = vmatpush1.xpose.msra.mxu0 0.0
      %858 = vmatprep.subr.mxu0 0.0
      %859 = vmatpush1.xpose.msra.mxu0 0.0
      %860 = vmatprep.subr.mxu0 0.0
      %861 = vmatpush1.xpose.msra.mxu0 0.0
      %862 = vmatprep.subr.mxu0 0.0
      %863 = vmatpush1.xpose.msra.mxu0 0.0
      %864 = vmatprep.subr.mxu0 0.0
      %865 = vmatpush1.xpose.msra.mxu0 0.0
      %866 = vmatprep.subr.mxu0 0.0
      %867 = vmatpush1.xpose.msra.mxu0 0.0
      %868 = vmatprep.subr.mxu0 0.0
      %869 = vmatpush1.xpose.msra.mxu0 0.0
      %870 = vmatprep.subr.mxu0 0.0
      %871 = vmatpush1.xpose.msra.mxu0 0.0
      %872 = vmatprep.mubr.f32.mxu0 0.0
      %873 = vmatmul.mubr.f32.gmra.mrb[0].mxu0 %v225
      %v874 = vpop.f32.mrb[0].mxu0
      %v875 = vadd.f32 %v206, %v874
      %v876 = vpop.f32.mrb[0].mxu0
      %877 = vmatprep.mubr.f32.mxu0 0.0
      %878 = vmatmul.mubr.f32.gmra.mrb[0].mxu0 %v228
      %v879 = vpop.f32.mrb[0].mxu0
      %v880 = vadd.f32 %v211, %v879
      %v881 = vpop.f32.mrb[0].mxu0
      %882 = vmatprep.mubr.f32.mxu0 0.0
      %883 = vmatmul.mubr.f32.gmra.mrb[0].mxu0 %v231
      %v884 = vpop.f32.mrb[0].mxu0
      %v885 = vadd.f32 %v216, %v884
      %v886 = vpop.f32.mrb[0].mxu0
      %887 = vmatprep.mubr.f32.mxu0 0.0
      %888 = vmatmul.mubr.f32.gmra.mrb[0].mxu0 %v234
      %v889 = vpop.f32.mrb[0].mxu0
      %v890 = vadd.f32 %v221, %v889
      %v891 = vpop.f32.mrb[0].mxu0
      %892 = vdwg.mxu0
      %v893 = vmax.f32 %v875, 0.0
      %v894 = vmax.f32 %v880, 0.0
      %v895 = vmax.f32 %v885, 0.0
      %v896 = vmax.f32 %v890, 0.0
      %v897 = vpack.c.bf16 %v894, %v893
      %v898 = vpack.c.bf16 %v896, %v895
      %v901 = vunpack.c.l.b16 %v897
      %v902 = vunpack.c.h.b16 %v897
      %v903 = vunpack.c.l.b16 %v898
      %v904 = vunpack.c.h.b16 %v898
      %v905 = vpack.c.b16 %v901, %v901
      %v906 = vpack.c.b16 %v902, %v902
      %v907 = vpack.c.b16 %v903, %v903
      %v908 = vpack.c.b16 %v904, %v904
      %s913 = scalar_lea.vmem %s177, 48
      %914 = vst [vmem:[%s913] sm:$0xf] %v905
      %915 = vst [vmem:[%s913 + $0x4] sm:$0xf] %v906
      %916 = vst [vmem:[%s913 + $0x8] sm:$0xf] %v907
      %917 = vst [vmem:[%s913 + $0xc] sm:$0xf] %v908
      %s918 = smul.u32 4, %s14
      %p919 = scmp.lt.s32.totalorder %s918, 15
      %s920 = scalar_select %p919, %s918, 15
      %s921 = smul.addr %s920, 4
      %s922 = smul.addr %s921, 4
      %s923 = scalar_lea.vmem %s3, %s922
      // Predicated region
      $region33: #{transform_attention.7} parent=31 // pred_check
        %p924 = pneg %p100
      $region34: #{transform_attention.7} parent=31 // pred_check_branch
        %926 = sbr.rel (%p924) target = $region36
      $region35: #{transform_attention.7} parent=31 // pred_region
        %s927 = smul.u32 4, %s14
      $region36: #{transform_attention.7} parent=31 // pred_fallthru
        _
    $region32: #{transform_attention.7} parent=5 // pred_fallthru
      _
    %p928 = scmp.le.s32.totalorder 2, %s9
    // Predicated region
    $region37: #{transform_attention.7} parent=5 // pred_check
      %p929 = pneg %p928
    $region38: #{transform_attention.7} parent=5 // pred_check_branch
      %931 = sbr.rel (%p929) target = $region40
    $region39: #{transform_attention.7} parent=5 // pred_region
      %s932 = ssub.s32 %s9, 2
      // Predicated region
      $region41: #{transform_attention.7} parent=39 // pred_check
        %p933 = pneg %p106
      $region42: #{transform_attention.7} parent=39 // pred_check_branch
        %935 = sbr.rel (%p933) target = $region44
      $region43: #{transform_attention.7} parent=39 // pred_region
        %s936 = smul.u32 4, %s15
        %p937 = scmp.lt.s32.totalorder %s936, 15
        %s938 = scalar_select %p937, %s936, 15
        %s939 = smul.addr %s938, 4
        %s940 = smul.addr %s939, 4
        %s941 = scalar_lea.vmem %s3, %s940
      $region44: #{transform_attention.7} parent=39 // pred_fallthru
        _
    $region40: #{transform_attention.7} parent=5 // pred_fallthru
      _
  $region6: #{transform_attention.7} parent=0 // loop_footer
    %s13 = sadd.s32 1, %s9
  $region7: #{transform_attention.7} parent=0 // loop_footer_branch
    %8 = sbr.rel target = $region3
  $region8: #{transform_attention.7} parent=0 // loop_exit
    _

// kernel: transform_attention.9
$region0: #{transform_attention.9}
  #allocation0 [shape = 'u32[]', space=smem, size = 0x4, offset = 0x4, fixed_abs, tag = 'smem constant byte address 0x4 - core index']
  #allocation1 [shape = 'u32[144,128]{1,0:T(1,128)}', space=vmem, size = 0x12000, scoped, tag = 'internal scratch']
  %s0 = inlined_call_operand.vmem [shape: bf16[16,32,128], index: 0, kind: input, shape index: {}]
  %s1 = inlined_call_operand.vmem [shape: f32[32,32], index: 1, kind: input, shape index: {}]
  %s2 = inlined_call_operand.vmem [shape: f32[32,1], index: 2, kind: input, shape index: {}]
  %s3 = inlined_call_operand.vmem [shape: f32[16,128,32], index: 3, kind: output, shape index: {}]
  %s4 = sld [smem:[#allocation0]]
  $region45: #{transform_attention.9} parent=0
    _
  %s6 = ssub.s32 1, %s4
  %s7 = scalar_select 0, %s6, %s4
  loop: start=0, step=1, limit=6
  $region2: #{transform_attention.9} parent=0 // loop_pre_header
    _
  $region3: #{transform_attention.9} parent=0 // loop_header
    %s9 = sphi 0, %s13
    %p10 = scmp.ge.s32.totalorder %s9, 6
    %s19 = sphi 0, %s21
    %s22 = sphi 0, %s19
    %s23 = sphi 0, %s22
    %s39 = sphi 0, %s23
    %s43 = sphi 0, %s43
    %s45 = sphi 0, %s43
    %s46 = sphi 0, %s45
    %s60 = sphi 0, %s46
    %s64 = sphi 0, %s64
    %s66 = sphi 0, %s64
    %s67 = sphi 0, %s66
    %s81 = sphi 0, %s67
    %s87 = sphi 0, %s89
    %s90 = sphi 0, %s87
    %s91 = sphi 0, %s90
    %s107 = sphi 0, %s91
  $region4: #{transform_attention.9} parent=0 // loop_header_branch
    %12 = sbr.rel (%p10) target = $region8
  $region5: #{transform_attention.9} parent=0 // loop_body
    %s14 = ssub.s32 %s9, 1
    %s15 = ssub.s32 %s9, 2
    %s16 = sadd.s32 %s9, 1
    %s17 = ssub.s32 %s9, %s16
    %p18 = scmp.eq.s32.totalorder %s17, 0
    %s20 = sadd.s32 %s19, 1
    %s21 = scalar_select %p18, %s19, %s20
    %p24 = pneg %p18
    %p25 = scmp.eq.s32.totalorder %s9, 3
    %p26 = por %p24, %p25
    %p27 = scmp.ne.s32.totalorder %s19, %s22
    %p28 = scmp.eq.s32.totalorder %s9, 0
    %p29 = por %p27, %p28
    %p30 = scmp.ne.s32.totalorder %s19, %s22
    %p31 = scmp.eq.s32.totalorder %s14, 3
    %p32 = por %p30, %p31
    %p33 = scmp.ne.s32.totalorder %s22, %s23
    %p34 = scmp.eq.s32.totalorder %s14, 0
    %p35 = por %p33, %p34
    %p36 = scmp.ne.s32.totalorder %s22, %s23
    %p37 = scmp.eq.s32.totalorder %s15, 3
    %p38 = por %p36, %p37
    %p40 = scmp.ne.s32.totalorder %s23, %s39
    %p41 = scmp.eq.s32.totalorder %s15, 0
    %p42 = por %p40, %p41
    %s44 = sadd.s32 %s43, 1
    %p47 = scmp.eq.s32.totalorder %s9, 3
    %p48 = scmp.ne.s32.totalorder %s43, %s45
    %p49 = scmp.eq.s32.totalorder %s9, 0
    %p50 = por %p48, %p49
    %p51 = scmp.ne.s32.totalorder %s43, %s45
    %p52 = scmp.eq.s32.totalorder %s14, 3
    %p53 = por %p51, %p52
    %p54 = scmp.ne.s32.totalorder %s45, %s46
    %p55 = scmp.eq.s32.totalorder %s14, 0
    %p56 = por %p54, %p55
    %p57 = scmp.ne.s32.totalorder %s45, %s46
    %p58 = scmp.eq.s32.totalorder %s15, 3
    %p59 = por %p57, %p58
    %p61 = scmp.ne.s32.totalorder %s46, %s60
    %p62 = scmp.eq.s32.totalorder %s15, 0
    %p63 = por %p61, %p62
    %s65 = sadd.s32 %s64, 1
    %p68 = scmp.eq.s32.totalorder %s9, 3
    %p69 = scmp.ne.s32.totalorder %s64, %s66
    %p70 = scmp.eq.s32.totalorder %s9, 0
    %p71 = por %p69, %p70
    %p72 = scmp.ne.s32.totalorder %s64, %s66
    %p73 = scmp.eq.s32.totalorder %s14, 3
    %p74 = por %p72, %p73
    %p75 = scmp.ne.s32.totalorder %s66, %s67
    %p76 = scmp.eq.s32.totalorder %s14, 0
    %p77 = por %p75, %p76
    %p78 = scmp.ne.s32.totalorder %s66, %s67
    %p79 = scmp.eq.s32.totalorder %s15, 3
    %p80 = por %p78, %p79
    %p82 = scmp.ne.s32.totalorder %s67, %s81
    %p83 = scmp.eq.s32.totalorder %s15, 0
    %p84 = por %p82, %p83
    %s85 = ssub.s32 %s9, %s16
    %p86 = scmp.eq.s32.totalorder %s85, 0
    %s88 = sadd.s32 %s87, 1
    %s89 = scalar_select %p86, %s87, %s88
    %p92 = pneg %p86
    %p93 = scmp.eq.s32.totalorder %s9, 3
    %p94 = por %p92, %p93
    %p95 = scmp.ne.s32.totalorder %s87, %s90
    %p96 = scmp.eq.s32.totalorder %s9, 0
    %p97 = por %p95, %p96
    %p98 = scmp.ne.s32.totalorder %s87, %s90
    %p99 = scmp.eq.s32.totalorder %s14, 3
    %p100 = por %p98, %p99
    %p101 = scmp.ne.s32.totalorder %s90, %s91
    %p102 = scmp.eq.s32.totalorder %s14, 0
    %p103 = por %p101, %p102
    %p104 = scmp.ne.s32.totalorder %s90, %s91
    %p105 = scmp.eq.s32.totalorder %s15, 3
    %p106 = por %p104, %p105
    %p108 = scmp.ne.s32.totalorder %s91, %s107
    %p109 = scmp.eq.s32.totalorder %s15, 0
    %p110 = por %p108, %p109
    %p111 = scmp.le.s32.totalorder 1, %s9
    %p112 = scmp.lt.s32.totalorder %s9, 5
    %p113 = pnand %p111, %p112
    %p114 = pneg %p113
    // Predicated region
    $region9: #{transform_attention.9} parent=5 // pred_check
      _
    $region10: #{transform_attention.9} parent=5 // pred_check_branch
      %116 = sbr.rel (%p113) target = $region12
    $region11: #{transform_attention.9} parent=5 // pred_region
      %s117 = ssub.s32 %s9, 1
      // Predicated region
      $region13: #{transform_attention.9} parent=11 // pred_check
        %p118 = pneg %p56
      $region14: #{transform_attention.9} parent=11 // pred_check_branch
        %120 = sbr.rel (%p118) target = $region16
      $region15: #{transform_attention.9} parent=11 // pred_region
        _
      $region16: #{transform_attention.9} parent=11 // pred_fallthru
        _
      // Predicated region
      $region17: #{transform_attention.9} parent=11 // pred_check
        %p121 = pneg %p77
      $region18: #{transform_attention.9} parent=11 // pred_check_branch
        %123 = sbr.rel (%p121) target = $region20
      $region19: #{transform_attention.9} parent=11 // pred_region
        _
      $region20: #{transform_attention.9} parent=11 // pred_fallthru
        _
    $region12: #{transform_attention.9} parent=5 // pred_fallthru
      _
    %p124 = scmp.lt.s32.totalorder %s9, 4
    // Predicated region
    $region21: #{transform_attention.9} parent=5 // pred_check
      %p125 = pneg %p124
    $region22: #{transform_attention.9} parent=5 // pred_check_branch
      %127 = sbr.rel (%p125) target = $region24
    $region23: #{transform_attention.9} parent=5 // pred_region
      // Predicated region
      $region25: #{transform_attention.9} parent=23 // pred_check
        %p128 = pneg %p29
      $region26: #{transform_attention.9} parent=23 // pred_check_branch
        %130 = sbr.rel (%p128) target = $region28
      $region27: #{transform_attention.9} parent=23 // pred_region
        %s131 = smul.u32 4, %s9
        %p132 = scmp.lt.s32.totalorder %s131, 15
        %s133 = scalar_select %p132, %s131, 15
        %s134 = smul.addr %s133, 4
        %s135 = smul.addr %s134, 4
        %s136 = scalar_lea.vmem %s0, %s135
        %s137 = smul.u32 4, %s9
      $region28: #{transform_attention.9} parent=23 // pred_fallthru
        _
    $region24: #{transform_attention.9} parent=5 // pred_fallthru
      _
    %p138 = scmp.le.s32.totalorder 1, %s9
    %p139 = scmp.lt.s32.totalorder %s9, 5
    %p140 = pnand %p138, %p139
    %p141 = pneg %p140
    // Predicated region
    $region29: #{transform_attention.9} parent=5 // pred_check
      _
    $region30: #{transform_attention.9} parent=5 // pred_check_branch
      %143 = sbr.rel (%p140) target = $region32
    $region31: #{transform_attention.9} parent=5 // pred_region
      %s144 = ssub.s32 %s9, 1
      %s145 = smul.u32 4, %s14
      %p146 = scmp.lt.s32.totalorder %s145, 15
      %s147 = scalar_select %p146, %s145, 15
      %s148 = smul.addr %s147, 4
      %s149 = smul.addr %s148, 4
      %s150 = scalar_lea.vmem %s0, %s149
      %p151 = pneg %p35
      %p152 = pneg %p32
      %p153 = pneg %p56
      %p154 = pneg %p53
      %p155 = pneg %p77
      %p156 = pneg %p74
      %p157 = pneg %p103
      %p158 = pneg %p100
      %s159 = smul.u32 4, %s14
      %p160 = scmp.lt.s32.totalorder %s159, 15
      %s161 = scalar_select %p160, %s159, 15
      %s162 = smul.addr %s161, 16
      %s163 = smul.addr %s162, 8
      %s164 = scalar_lea.vmem %s3, %s163
      %s165 = smul.u32 4, %s14
      %p166 = scmp.lt.s32.totalorder %s165, 15
      %s167 = scalar_select %p166, %s165, 15
      %s168 = smul.addr %s167, 4
      %s169 = smul.addr %s168, 4
      %s170 = scalar_lea.vmem %s0, %s169
      %s171 = smul.u32 4, %s14
      %s172 = smul.u32 4, %s14
      %p173 = scmp.lt.s32.totalorder %s172, 15
      %s174 = scalar_select %p173, %s172, 15
      %s175 = smul.addr %s174, 16
      %s176 = smul.addr %s175, 8
      %s177 = scalar_lea.vmem %s3, %s176
      %s178 = smul.u32 4, %s14
      %v179 = vld [vmem:[%s1] sm:$0xff]
      %v180 = vld [vmem:[%s1 + $0x8] sm:$0xff]
      %v181 = vld [vmem:[%s1 + $0x10] sm:$0xff]
      %v182 = vld [vmem:[%s1 + $0x18] sm:$0xff]
      %v183 = vld [vmem:[%s2] sm:$0xff]
      %v184 = vld [vmem:[%s2 + $0x8] sm:$0xff]
      %v185 = vld [vmem:[%s2 + $0x10] sm:$0xff]
      %v186 = vld [vmem:[%s2 + $0x18] sm:$0xff]
      %v187 = vld [vmem:[%s170] sm:$0xf]
      %v188 = vld [vmem:[%s170 + $0x4] sm:$0xf]
      %v189 = vld [vmem:[%s170 + $0x8] sm:$0xf]
      %v190 = vld [vmem:[%s170 + $0xc] sm:$0xf]
      %v191 = vunpack.c.l.bf16 %v187
      %v192 = vunpack.c.l.bf16 %v188
      %v193 = vunpack.c.l.bf16 %v189
      %v194 = vunpack.c.l.bf16 %v190
      %196 = vset.pattern.permute.xlu0 0
      %197 = vperm.xlu0 %196, %v183
      %v198 = vpop.permute.xlu0 %197
      %201 = vset.pattern.permute.xlu0 0
      %202 = vperm.xlu0 %201, %v184
      %v203 = vpop.permute.xlu0 %202
      %206 = vset.pattern.permute.xlu0 0
      %207 = vperm.xlu0 %206, %v185
      %v208 = vpop.permute.xlu0 %207
      %211 = vset.pattern.permute.xlu0 0
      %212 = vperm.xlu0 %211, %v186
      %v213 = vpop.permute.xlu0 %212
      %vm215 = vcmask 261120
      %v217 = vsel %vm215, %v179, 0
      %v220 = vsel %vm215, %v180, 0
      %v223 = vsel %vm215, %v181, 0
      %v226 = vsel %vm215, %v182, 0
      %228 = vmatprep.subr.mxu0 0.0
      %229 = vmatpush1.msra.mxu0 %v191
      %230 = vmatprep.subr.mxu0 0.0
      %231 = vmatpush1.msra.mxu0 %v192
      %232 = vmatprep.subr.mxu0 0.0
      %233 = vmatpush1.msra.mxu0 %v193
      %234 = vmatprep.subr.mxu0 0.0
      %235 = vmatpush1.msra.mxu0 %v194
      %236 = vmatprep.subr.mxu0 0.0
      %237 = vmatpush1.msra.mxu0 0.0
      %238 = vmatprep.subr.mxu0 0.0
      %239 = vmatpush1.msra.mxu0 0.0
      %240 = vmatprep.subr.mxu0 0.0
      %241 = vmatpush1.msra.mxu0 0.0
      %242 = vmatprep.subr.mxu0 0.0
      %243 = vmatpush1.msra.mxu0 0.0
      %244 = vmatprep.subr.mxu0 0.0
      %245 = vmatpush1.msra.mxu0 0.0
      %246 = vmatprep.subr.mxu0 0.0
      %247 = vmatpush1.msra.mxu0 0.0
      %248 = vmatprep.subr.mxu0 0.0
      %249 = vmatpush1.msra.mxu0 0.0
      %250 = vmatprep.subr.mxu0 0.0
      %251 = vmatpush1.msra.mxu0 0.0
      %252 = vmatprep.subr.mxu0 0.0
      %253 = vmatpush1.msra.mxu0 0.0
      %254 = vmatprep.subr.mxu0 0.0
      %255 = vmatpush1.msra.mxu0 0.0
      %256 = vmatprep.subr.mxu0 0.0
      %257 = vmatpush1.msra.mxu0 0.0
      %258 = vmatprep.subr.mxu0 0.0
      %259 = vmatpush1.msra.mxu0 0.0
      %260 = vmatprep.subr.mxu0 0.0
      %261 = vmatpush1.msra.mxu0 0.0
      %262 = vmatprep.subr.mxu0 0.0
      %263 = vmatpush1.msra.mxu0 0.0
      %264 = vmatprep.subr.mxu0 0.0
      %265 = vmatpush1.msra.mxu0 0.0
      %266 = vmatprep.subr.mxu0 0.0
      %267 = vmatpush1.msra.mxu0 0.0
      %268 = vmatprep.subr.mxu0 0.0
      %269 = vmatpush1.msra.mxu0 0.0
      %270 = vmatprep.subr.mxu0 0.0
      %271 = vmatpush1.msra.mxu0 0.0
      %272 = vmatprep.subr.mxu0 0.0
      %273 = vmatpush1.msra.mxu0 0.0
      %274 = vmatprep.subr.mxu0 0.0
      %275 = vmatpush1.msra.mxu0 0.0
      %276 = vmatprep.subr.mxu0 0.0
      %277 = vmatpush1.msra.mxu0 0.0
      %278 = vmatprep.subr.mxu0 0.0
      %279 = vmatpush1.msra.mxu0 0.0
      %280 = vmatprep.subr.mxu0 0.0
      %281 = vmatpush1.msra.mxu0 0.0
      %282 = vmatprep.subr.mxu0 0.0
      %283 = vmatpush1.msra.mxu0 0.0
      %284 = vmatprep.subr.mxu0 0.0
      %285 = vmatpush1.msra.mxu0 0.0
      %286 = vmatprep.subr.mxu0 0.0
      %287 = vmatpush1.msra.mxu0 0.0
      %288 = vmatprep.subr.mxu0 0.0
      %289 = vmatpush1.msra.mxu0 0.0
      %290 = vmatprep.subr.mxu0 0.0
      %291 = vmatpush1.msra.mxu0 0.0
      %292 = vmatprep.mubr.f32.mxu0 0.0
      %293 = vmatmul.mubr.f32.gmra.mrb[0].mxu0 %v217
      %v294 = vpop.f32.mrb[0].mxu0
      %v295 = vadd.f32 %v198, %v294
      %v296 = vpop.f32.mrb[0].mxu0
      %297 = vmatprep.mubr.f32.mxu0 0.0
      %298 = vmatmul.mubr.f32.gmra.mrb[0].mxu0 %v220
      %v299 = vpop.f32.mrb[0].mxu0
      %v300 = vadd.f32 %v203, %v299
      %v301 = vpop.f32.mrb[0].mxu0
      %302 = vmatprep.mubr.f32.mxu0 0.0
      %303 = vmatmul.mubr.f32.gmra.mrb[0].mxu0 %v223
      %v304 = vpop.f32.mrb[0].mxu0
      %v305 = vadd.f32 %v208, %v304
      %v306 = vpop.f32.mrb[0].mxu0
      %307 = vmatprep.mubr.f32.mxu0 0.0
      %308 = vmatmul.mubr.f32.gmra.mrb[0].mxu0 %v226
      %v309 = vpop.f32.mrb[0].mxu0
      %v310 = vadd.f32 %v213, %v309
      %v311 = vpop.f32.mrb[0].mxu0
      %312 = vdwg.mxu0
      %v313 = vmax.f32 %v295, 0.0
      %v314 = vmax.f32 %v300, 0.0
      %v315 = vmax.f32 %v305, 0.0
      %v316 = vmax.f32 %v310, 0.0
      %317 = vxpose.xlu0.b32.start [1/16] %v313, 128
      %318 = vxpose.xlu0.b32.cont [2/16] %v314, 128
      %319 = vxpose.xlu0.b32.cont [3/16] %v315, 128
      %320 = vxpose.xlu0.b32.cont [4/16] %v316, 128
      %321 = vxpose.xlu0.b32.cont [5/16] 0.0, 128
      %322 = vxpose.xlu0.b32.cont [6/16] 0.0, 128
      %323 = vxpose.xlu0.b32.cont [7/16] 0.0, 128
      %324 = vxpose.xlu0.b32.cont [8/16] 0.0, 128
      %325 = vxpose.xlu0.b32.cont [9/16] 0.0, 128
      %326 = vxpose.xlu0.b32.cont [10/16] 0.0, 128
      %327 = vxpose.xlu0.b32.cont [11/16] 0.0, 128
      %328 = vxpose.xlu0.b32.cont [12/16] 0.0, 128
      %329 = vxpose.xlu0.b32.cont [13/16] 0.0, 128
      %330 = vxpose.xlu0.b32.cont [14/16] 0.0, 128
      %331 = vxpose.xlu0.b32.cont [15/16] 0.0, 128
      %332 = vxpose.xlu0.b32.end [16/16] 0.0, 128
      %v333 = vpop.trf.xlu0
      %v334 = vpop.trf.xlu0
      %v335 = vpop.trf.xlu0
      %v336 = vpop.trf.xlu0
      %v337 = vpop.trf.xlu0
      %v338 = vpop.trf.xlu0
      %v339 = vpop.trf.xlu0
      %v340 = vpop.trf.xlu0
      %v341 = vpop.trf.xlu0
      %v342 = vpop.trf.xlu0
      %v343 = vpop.trf.xlu0
      %v344 = vpop.trf.xlu0
      %v345 = vpop.trf.xlu0
      %v346 = vpop.trf.xlu0
      %v347 = vpop.trf.xlu0
      %v348 = vpop.trf.xlu0
      %349 = vst.msk [vmem:[%s177] sm:$0xff] %vm215, %v333
      %350 = vst.msk [vmem:[%s177 + $0x8] sm:$0xff] %vm215, %v334
      %351 = vst.msk [vmem:[%s177 + $0x10] sm:$0xff] %vm215, %v335
      %352 = vst.msk [vmem:[%s177 + $0x18] sm:$0xff] %vm215, %v336
      %353 = vst.msk [vmem:[%s177 + $0x20] sm:$0xff] %vm215, %v337
      %354 = vst.msk [vmem:[%s177 + $0x28] sm:$0xff] %vm215, %v338
      %355 = vst.msk [vmem:[%s177 + $0x30] sm:$0xff] %vm215, %v339
      %356 = vst.msk [vmem:[%s177 + $0x38] sm:$0xff] %vm215, %v340
      %357 = vst.msk [vmem:[%s177 + $0x40] sm:$0xff] %vm215, %v341
      %358 = vst.msk [vmem:[%s177 + $0x48] sm:$0xff] %vm215, %v342
      %359 = vst.msk [vmem:[%s177 + $0x50] sm:$0xff] %vm215, %v343
      %360 = vst.msk [vmem:[%s177 + $0x58] sm:$0xff] %vm215, %v344
      %361 = vst.msk [vmem:[%s177 + $0x60] sm:$0xff] %vm215, %v345
      %362 = vst.msk [vmem:[%s177 + $0x68] sm:$0xff] %vm215, %v346
      %363 = vst.msk [vmem:[%s177 + $0x70] sm:$0xff] %vm215, %v347
      %364 = vst.msk [vmem:[%s177 + $0x78] sm:$0xff] %vm215, %v348
      %s365 = scalar_lea.vmem %s170, 16
      %v366 = vld [vmem:[%s365] sm:$0xf]
      %v367 = vld [vmem:[%s365 + $0x4] sm:$0xf]
      %v368 = vld [vmem:[%s365 + $0x8] sm:$0xf]
      %v369 = vld [vmem:[%s365 + $0xc] sm:$0xf]
      %v370 = vunpack.c.l.bf16 %v366
      %v371 = vunpack.c.l.bf16 %v367
      %v372 = vunpack.c.l.bf16 %v368
      %v373 = vunpack.c.l.bf16 %v369
      %374 = vmatprep.subr.mxu0 0.0
      %375 = vmatpush1.msra.mxu0 %v370
      %376 = vmatprep.subr.mxu0 0.0
      %377 = vmatpush1.msra.mxu0 %v371
      %378 = vmatprep.subr.mxu0 0.0
      %379 = vmatpush1.msra.mxu0 %v372
      %380 = vmatprep.subr.mxu0 0.0
      %381 = vmatpush1.msra.mxu0 %v373
      %382 = vmatprep.subr.mxu0 0.0
      %383 = vmatpush1.msra.mxu0 0.0
      %384 = vmatprep.subr.mxu0 0.0
      %385 = vmatpush1.msra.mxu0 0.0
      %386 = vmatprep.subr.mxu0 0.0
      %387 = vmatpush1.msra.mxu0 0.0
      %388 = vmatprep.subr.mxu0 0.0
      %389 = vmatpush1.msra.mxu0 0.0
      %390 = vmatprep.subr.mxu0 0.0
      %391 = vmatpush1.msra.mxu0 0.0
      %392 = vmatprep.subr.mxu0 0.0
      %393 = vmatpush1.msra.mxu0 0.0
      %394 = vmatprep.subr.mxu0 0.0
      %395 = vmatpush1.msra.mxu0 0.0
      %396 = vmatprep.subr.mxu0 0.0
      %397 = vmatpush1.msra.mxu0 0.0
      %398 = vmatprep.subr.mxu0 0.0
      %399 = vmatpush1.msra.mxu0 0.0
      %400 = vmatprep.subr.mxu0 0.0
      %401 = vmatpush1.msra.mxu0 0.0
      %402 = vmatprep.subr.mxu0 0.0
      %403 = vmatpush1.msra.mxu0 0.0
      %404 = vmatprep.subr.mxu0 0.0
      %405 = vmatpush1.msra.mxu0 0.0
      %406 = vmatprep.subr.mxu0 0.0
      %407 = vmatpush1.msra.mxu0 0.0
      %408 = vmatprep.subr.mxu0 0.0
      %409 = vmatpush1.msra.mxu0 0.0
      %410 = vmatprep.subr.mxu0 0.0
      %411 = vmatpush1.msra.mxu0 0.0
      %412 = vmatprep.subr.mxu0 0.0
      %413 = vmatpush1.msra.mxu0 0.0
      %414 = vmatprep.subr.mxu0 0.0
      %415 = vmatpush1.msra.mxu0 0.0
      %416 = vmatprep.subr.mxu0 0.0
      %417 = vmatpush1.msra.mxu0 0.0
      %418 = vmatprep.subr.mxu0 0.0
      %419 = vmatpush1.msra.mxu0 0.0
      %420 = vmatprep.subr.mxu0 0.0
      %421 = vmatpush1.msra.mxu0 0.0
      %422 = vmatprep.subr.mxu0 0.0
      %423 = vmatpush1.msra.mxu0 0.0
      %424 = vmatprep.subr.mxu0 0.0
      %425 = vmatpush1.msra.mxu0 0.0
      %426 = vmatprep.subr.mxu0 0.0
      %427 = vmatpush1.msra.mxu0 0.0
      %428 = vmatprep.subr.mxu0 0.0
      %429 = vmatpush1.msra.mxu0 0.0
      %430 = vmatprep.subr.mxu0 0.0
      %431 = vmatpush1.msra.mxu0 0.0
      %432 = vmatprep.subr.mxu0 0.0
      %433 = vmatpush1.msra.mxu0 0.0
      %434 = vmatprep.subr.mxu0 0.0
      %435 = vmatpush1.msra.mxu0 0.0
      %436 = vmatprep.subr.mxu0 0.0
      %437 = vmatpush1.msra.mxu0 0.0
      %438 = vmatprep.mubr.f32.mxu0 0.0
      %439 = vmatmul.mubr.f32.gmra.mrb[0].mxu0 %v217
      %v440 = vpop.f32.mrb[0].mxu0
      %v441 = vadd.f32 %v198, %v440
      %v442 = vpop.f32.mrb[0].mxu0
      %443 = vmatprep.mubr.f32.mxu0 0.0
      %444 = vmatmul.mubr.f32.gmra.mrb[0].mxu0 %v220
      %v445 = vpop.f32.mrb[0].mxu0
      %v446 = vadd.f32 %v203, %v445
      %v447 = vpop.f32.mrb[0].mxu0
      %448 = vmatprep.mubr.f32.mxu0 0.0
      %449 = vmatmul.mubr.f32.gmra.mrb[0].mxu0 %v223
      %v450 = vpop.f32.mrb[0].mxu0
      %v451 = vadd.f32 %v208, %v450
      %v452 = vpop.f32.mrb[0].mxu0
      %453 = vmatprep.mubr.f32.mxu0 0.0
      %454 = vmatmul.mubr.f32.gmra.mrb[0].mxu0 %v226
      %v455 = vpop.f32.mrb[0].mxu0
      %v456 = vadd.f32 %v213, %v455
      %v457 = vpop.f32.mrb[0].mxu0
      %458 = vdwg.mxu0
      %v459 = vmax.f32 %v441, 0.0
      %v460 = vmax.f32 %v446, 0.0
      %v461 = vmax.f32 %v451, 0.0
      %v462 = vmax.f32 %v456, 0.0
      %463 = vxpose.xlu0.b32.start [1/16] %v459, 128
      %464 = vxpose.xlu0.b32.cont [2/16] %v460, 128
      %465 = vxpose.xlu0.b32.cont [3/16] %v461, 128
      %466 = vxpose.xlu0.b32.cont [4/16] %v462, 128
      %467 = vxpose.xlu0.b32.cont [5/16] 0.0, 128
      %468 = vxpose.xlu0.b32.cont [6/16] 0.0, 128
      %469 = vxpose.xlu0.b32.cont [7/16] 0.0, 128
      %470 = vxpose.xlu0.b32.cont [8/16] 0.0, 128
      %471 = vxpose.xlu0.b32.cont [9/16] 0.0, 128
      %472 = vxpose.xlu0.b32.cont [10/16] 0.0, 128
      %473 = vxpose.xlu0.b32.cont [11/16] 0.0, 128
      %474 = vxpose.xlu0.b32.cont [12/16] 0.0, 128
      %475 = vxpose.xlu0.b32.cont [13/16] 0.0, 128
      %476 = vxpose.xlu0.b32.cont [14/16] 0.0, 128
      %477 = vxpose.xlu0.b32.cont [15/16] 0.0, 128
      %478 = vxpose.xlu0.b32.end [16/16] 0.0, 128
      %v479 = vpop.trf.xlu0
      %v480 = vpop.trf.xlu0
      %v481 = vpop.trf.xlu0
      %v482 = vpop.trf.xlu0
      %v483 = vpop.trf.xlu0
      %v484 = vpop.trf.xlu0
      %v485 = vpop.trf.xlu0
      %v486 = vpop.trf.xlu0
      %v487 = vpop.trf.xlu0
      %v488 = vpop.trf.xlu0
      %v489 = vpop.trf.xlu0
      %v490 = vpop.trf.xlu0
      %v491 = vpop.trf.xlu0
      %v492 = vpop.trf.xlu0
      %v493 = vpop.trf.xlu0
      %v494 = vpop.trf.xlu0
      %s495 = scalar_lea.vmem %s177, 128
      %496 = vst.msk [vmem:[%s495] sm:$0xff] %vm215, %v479
      %497 = vst.msk [vmem:[%s495 + $0x8] sm:$0xff] %vm215, %v480
      %498 = vst.msk [vmem:[%s495 + $0x10] sm:$0xff] %vm215, %v481
      %499 = vst.msk [vmem:[%s495 + $0x18] sm:$0xff] %vm215, %v482
      %500 = vst.msk [vmem:[%s495 + $0x20] sm:$0xff] %vm215, %v483
      %501 = vst.msk [vmem:[%s495 + $0x28] sm:$0xff] %vm215, %v484
      %502 = vst.msk [vmem:[%s495 + $0x30] sm:$0xff] %vm215, %v485
      %503 = vst.msk [vmem:[%s495 + $0x38] sm:$0xff] %vm215, %v486
      %504 = vst.msk [vmem:[%s495 + $0x40] sm:$0xff] %vm215, %v487
      %505 = vst.msk [vmem:[%s495 + $0x48] sm:$0xff] %vm215, %v488
      %506 = vst.msk [vmem:[%s495 + $0x50] sm:$0xff] %vm215, %v489
      %507 = vst.msk [vmem:[%s495 + $0x58] sm:$0xff] %vm215, %v490
      %508 = vst.msk [vmem:[%s495 + $0x60] sm:$0xff] %vm215, %v491
      %509 = vst.msk [vmem:[%s495 + $0x68] sm:$0xff] %vm215, %v492
      %510 = vst.msk [vmem:[%s495 + $0x70] sm:$0xff] %vm215, %v493
      %511 = vst.msk [vmem:[%s495 + $0x78] sm:$0xff] %vm215, %v494
      %s512 = scalar_lea.vmem %s170, 32
      %v513 = vld [vmem:[%s512] sm:$0xf]
      %v514 = vld [vmem:[%s512 + $0x4] sm:$0xf]
      %v515 = vld [vmem:[%s512 + $0x8] sm:$0xf]
      %v516 = vld [vmem:[%s512 + $0xc] sm:$0xf]
      %v517 = vunpack.c.l.bf16 %v513
      %v518 = vunpack.c.l.bf16 %v514
      %v519 = vunpack.c.l.bf16 %v515
      %v520 = vunpack.c.l.bf16 %v516
      %521 = vmatprep.subr.mxu0 0.0
      %522 = vmatpush1.msra.mxu0 %v517
      %523 = vmatprep.subr.mxu0 0.0
      %524 = vmatpush1.msra.mxu0 %v518
      %525 = vmatprep.subr.mxu0 0.0
      %526 = vmatpush1.msra.mxu0 %v519
      %527 = vmatprep.subr.mxu0 0.0
      %528 = vmatpush1.msra.mxu0 %v520
      %529 = vmatprep.subr.mxu0 0.0
      %530 = vmatpush1.msra.mxu0 0.0
      %531 = vmatprep.subr.mxu0 0.0
      %532 = vmatpush1.msra.mxu0 0.0
      %533 = vmatprep.subr.mxu0 0.0
      %534 = vmatpush1.msra.mxu0 0.0
      %535 = vmatprep.subr.mxu0 0.0
      %536 = vmatpush1.msra.mxu0 0.0
      %537 = vmatprep.subr.mxu0 0.0
      %538 = vmatpush1.msra.mxu0 0.0
      %539 = vmatprep.subr.mxu0 0.0
      %540 = vmatpush1.msra.mxu0 0.0
      %541 = vmatprep.subr.mxu0 0.0
      %542 = vmatpush1.msra.mxu0 0.0
      %543 = vmatprep.subr.mxu0 0.0
      %544 = vmatpush1.msra.mxu0 0.0
      %545 = vmatprep.subr.mxu0 0.0
      %546 = vmatpush1.msra.mxu0 0.0
      %547 = vmatprep.subr.mxu0 0.0
      %548 = vmatpush1.msra.mxu0 0.0
      %549 = vmatprep.subr.mxu0 0.0
      %550 = vmatpush1.msra.mxu0 0.0
      %551 = vmatprep.subr.mxu0 0.0
      %552 = vmatpush1.msra.mxu0 0.0
      %553 = vmatprep.subr.mxu0 0.0
      %554 = vmatpush1.msra.mxu0 0.0
      %555 = vmatprep.subr.mxu0 0.0
      %556 = vmatpush1.msra.mxu0 0.0
      %557 = vmatprep.subr.mxu0 0.0
      %558 = vmatpush1.msra.mxu0 0.0
      %559 = vmatprep.subr.mxu0 0.0
      %560 = vmatpush1.msra.mxu0 0.0
      %561 = vmatprep.subr.mxu0 0.0
      %562 = vmatpush1.msra.mxu0 0.0
      %563 = vmatprep.subr.mxu0 0.0
      %564 = vmatpush1.msra.mxu0 0.0
      %565 = vmatprep.subr.mxu0 0.0
      %566 = vmatpush1.msra.mxu0 0.0
      %567 = vmatprep.subr.mxu0 0.0
      %568 = vmatpush1.msra.mxu0 0.0
      %569 = vmatprep.subr.mxu0 0.0
      %570 = vmatpush1.msra.mxu0 0.0
      %571 = vmatprep.subr.mxu0 0.0
      %572 = vmatpush1.msra.mxu0 0.0
      %573 = vmatprep.subr.mxu0 0.0
      %574 = vmatpush1.msra.mxu0 0.0
      %575 = vmatprep.subr.mxu0 0.0
      %576 = vmatpush1.msra.mxu0 0.0
      %577 = vmatprep.subr.mxu0 0.0
      %578 = vmatpush1.msra.mxu0 0.0
      %579 = vmatprep.subr.mxu0 0.0
      %580 = vmatpush1.msra.mxu0 0.0
      %581 = vmatprep.subr.mxu0 0.0
      %582 = vmatpush1.msra.mxu0 0.0
      %583 = vmatprep.subr.mxu0 0.0
      %584 = vmatpush1.msra.mxu0 0.0
      %585 = vmatprep.mubr.f32.mxu0 0.0
      %586 = vmatmul.mubr.f32.gmra.mrb[0].mxu0 %v217
      %v587 = vpop.f32.mrb[0].mxu0
      %v588 = vadd.f32 %v198, %v587
      %v589 = vpop.f32.mrb[0].mxu0
      %590 = vmatprep.mubr.f32.mxu0 0.0
      %591 = vmatmul.mubr.f32.gmra.mrb[0].mxu0 %v220
      %v592 = vpop.f32.mrb[0].mxu0
      %v593 = vadd.f32 %v203, %v592
      %v594 = vpop.f32.mrb[0].mxu0
      %595 = vmatprep.mubr.f32.mxu0 0.0
      %596 = vmatmul.mubr.f32.gmra.mrb[0].mxu0 %v223
      %v597 = vpop.f32.mrb[0].mxu0
      %v598 = vadd.f32 %v208, %v597
      %v599 = vpop.f32.mrb[0].mxu0
      %600 = vmatprep.mubr.f32.mxu0 0.0
      %601 = vmatmul.mubr.f32.gmra.mrb[0].mxu0 %v226
      %v602 = vpop.f32.mrb[0].mxu0
      %v603 = vadd.f32 %v213, %v602
      %v604 = vpop.f32.mrb[0].mxu0
      %605 = vdwg.mxu0
      %v606 = vmax.f32 %v588, 0.0
      %v607 = vmax.f32 %v593, 0.0
      %v608 = vmax.f32 %v598, 0.0
      %v609 = vmax.f32 %v603, 0.0
      %610 = vxpose.xlu0.b32.start [1/16] %v606, 128
      %611 = vxpose.xlu0.b32.cont [2/16] %v607, 128
      %612 = vxpose.xlu0.b32.cont [3/16] %v608, 128
      %613 = vxpose.xlu0.b32.cont [4/16] %v609, 128
      %614 = vxpose.xlu0.b32.cont [5/16] 0.0, 128
      %615 = vxpose.xlu0.b32.cont [6/16] 0.0, 128
      %616 = vxpose.xlu0.b32.cont [7/16] 0.0, 128
      %617 = vxpose.xlu0.b32.cont [8/16] 0.0, 128
      %618 = vxpose.xlu0.b32.cont [9/16] 0.0, 128
      %619 = vxpose.xlu0.b32.cont [10/16] 0.0, 128
      %620 = vxpose.xlu0.b32.cont [11/16] 0.0, 128
      %621 = vxpose.xlu0.b32.cont [12/16] 0.0, 128
      %622 = vxpose.xlu0.b32.cont [13/16] 0.0, 128
      %623 = vxpose.xlu0.b32.cont [14/16] 0.0, 128
      %624 = vxpose.xlu0.b32.cont [15/16] 0.0, 128
      %625 = vxpose.xlu0.b32.end [16/16] 0.0, 128
      %v626 = vpop.trf.xlu0
      %v627 = vpop.trf.xlu0
      %v628 = vpop.trf.xlu0
      %v629 = vpop.trf.xlu0
      %v630 = vpop.trf.xlu0
      %v631 = vpop.trf.xlu0
      %v632 = vpop.trf.xlu0
      %v633 = vpop.trf.xlu0
      %v634 = vpop.trf.xlu0
      %v635 = vpop.trf.xlu0
      %v636 = vpop.trf.xlu0
      %v637 = vpop.trf.xlu0
      %v638 = vpop.trf.xlu0
      %v639 = vpop.trf.xlu0
      %v640 = vpop.trf.xlu0
      %v641 = vpop.trf.xlu0
      %s642 = scalar_lea.vmem %s177, 256
      %643 = vst.msk [vmem:[%s642] sm:$0xff] %vm215, %v626
      %644 = vst.msk [vmem:[%s642 + $0x8] sm:$0xff] %vm215, %v627
      %645 = vst.msk [vmem:[%s642 + $0x10] sm:$0xff] %vm215, %v628
      %646 = vst.msk [vmem:[%s642 + $0x18] sm:$0xff] %vm215, %v629
      %647 = vst.msk [vmem:[%s642 + $0x20] sm:$0xff] %vm215, %v630
      %648 = vst.msk [vmem:[%s642 + $0x28] sm:$0xff] %vm215, %v631
      %649 = vst.msk [vmem:[%s642 + $0x30] sm:$0xff] %vm215, %v632
      %650 = vst.msk [vmem:[%s642 + $0x38] sm:$0xff] %vm215, %v633
      %651 = vst.msk [vmem:[%s642 + $0x40] sm:$0xff] %vm215, %v634
      %652 = vst.msk [vmem:[%s642 + $0x48] sm:$0xff] %vm215, %v635
      %653 = vst.msk [vmem:[%s642 + $0x50] sm:$0xff] %vm215, %v636
      %654 = vst.msk [vmem:[%s642 + $0x58] sm:$0xff] %vm215, %v637
      %655 = vst.msk [vmem:[%s642 + $0x60] sm:$0xff] %vm215, %v638
      %656 = vst.msk [vmem:[%s642 + $0x68] sm:$0xff] %vm215, %v639
      %657 = vst.msk [vmem:[%s642 + $0x70] sm:$0xff] %vm215, %v640
      %658 = vst.msk [vmem:[%s642 + $0x78] sm:$0xff] %vm215, %v641
      %s659 = scalar_lea.vmem %s170, 48
      %v660 = vld [vmem:[%s659] sm:$0xf]
      %v661 = vld [vmem:[%s659 + $0x4] sm:$0xf]
      %v662 = vld [vmem:[%s659 + $0x8] sm:$0xf]
      %v663 = vld [vmem:[%s659 + $0xc] sm:$0xf]
      %v664 = vunpack.c.l.bf16 %v660
      %v665 = vunpack.c.l.bf16 %v661
      %v666 = vunpack.c.l.bf16 %v662
      %v667 = vunpack.c.l.bf16 %v663
      %668 = vmatprep.subr.mxu0 0.0
      %669 = vmatpush1.msra.mxu0 %v664
      %670 = vmatprep.subr.mxu0 0.0
      %671 = vmatpush1.msra.mxu0 %v665
      %672 = vmatprep.subr.mxu0 0.0
      %673 = vmatpush1.msra.mxu0 %v666
      %674 = vmatprep.subr.mxu0 0.0
      %675 = vmatpush1.msra.mxu0 %v667
      %676 = vmatprep.subr.mxu0 0.0
      %677 = vmatpush1.msra.mxu0 0.0
      %678 = vmatprep.subr.mxu0 0.0
      %679 = vmatpush1.msra.mxu0 0.0
      %680 = vmatprep.subr.mxu0 0.0
      %681 = vmatpush1.msra.mxu0 0.0
      %682 = vmatprep.subr.mxu0 0.0
      %683 = vmatpush1.msra.mxu0 0.0
      %684 = vmatprep.subr.mxu0 0.0
      %685 = vmatpush1.msra.mxu0 0.0
      %686 = vmatprep.subr.mxu0 0.0
      %687 = vmatpush1.msra.mxu0 0.0
      %688 = vmatprep.subr.mxu0 0.0
      %689 = vmatpush1.msra.mxu0 0.0
      %690 = vmatprep.subr.mxu0 0.0
      %691 = vmatpush1.msra.mxu0 0.0
      %692 = vmatprep.subr.mxu0 0.0
      %693 = vmatpush1.msra.mxu0 0.0
      %694 = vmatprep.subr.mxu0 0.0
      %695 = vmatpush1.msra.mxu0 0.0
      %696 = vmatprep.subr.mxu0 0.0
      %697 = vmatpush1.msra.mxu0 0.0
      %698 = vmatprep.subr.mxu0 0.0
      %699 = vmatpush1.msra.mxu0 0.0
      %700 = vmatprep.subr.mxu0 0.0
      %701 = vmatpush1.msra.mxu0 0.0
      %702 = vmatprep.subr.mxu0 0.0
      %703 = vmatpush1.msra.mxu0 0.0
      %704 = vmatprep.subr.mxu0 0.0
      %705 = vmatpush1.msra.mxu0 0.0
      %706 = vmatprep.subr.mxu0 0.0
      %707 = vmatpush1.msra.mxu0 0.0
      %708 = vmatprep.subr.mxu0 0.0
      %709 = vmatpush1.msra.mxu0 0.0
      %710 = vmatprep.subr.mxu0 0.0
      %711 = vmatpush1.msra.mxu0 0.0
      %712 = vmatprep.subr.mxu0 0.0
      %713 = vmatpush1.msra.mxu0 0.0
      %714 = vmatprep.subr.mxu0 0.0
      %715 = vmatpush1.msra.mxu0 0.0
      %716 = vmatprep.subr.mxu0 0.0
      %717 = vmatpush1.msra.mxu0 0.0
      %718 = vmatprep.subr.mxu0 0.0
      %719 = vmatpush1.msra.mxu0 0.0
      %720 = vmatprep.subr.mxu0 0.0
      %721 = vmatpush1.msra.mxu0 0.0
      %722 = vmatprep.subr.mxu0 0.0
      %723 = vmatpush1.msra.mxu0 0.0
      %724 = vmatprep.subr.mxu0 0.0
      %725 = vmatpush1.msra.mxu0 0.0
      %726 = vmatprep.subr.mxu0 0.0
      %727 = vmatpush1.msra.mxu0 0.0
      %728 = vmatprep.subr.mxu0 0.0
      %729 = vmatpush1.msra.mxu0 0.0
      %730 = vmatprep.subr.mxu0 0.0
      %731 = vmatpush1.msra.mxu0 0.0
      %732 = vmatprep.mubr.f32.mxu0 0.0
      %733 = vmatmul.mubr.f32.gmra.mrb[0].mxu0 %v217
      %v734 = vpop.f32.mrb[0].mxu0
      %v735 = vadd.f32 %v198, %v734
      %v736 = vpop.f32.mrb[0].mxu0
      %737 = vmatprep.mubr.f32.mxu0 0.0
      %738 = vmatmul.mubr.f32.gmra.mrb[0].mxu0 %v220
      %v739 = vpop.f32.mrb[0].mxu0
      %v740 = vadd.f32 %v203, %v739
      %v741 = vpop.f32.mrb[0].mxu0
      %742 = vmatprep.mubr.f32.mxu0 0.0
      %743 = vmatmul.mubr.f32.gmra.mrb[0].mxu0 %v223
      %v744 = vpop.f32.mrb[0].mxu0
      %v745 = vadd.f32 %v208, %v744
      %v746 = vpop.f32.mrb[0].mxu0
      %747 = vmatprep.mubr.f32.mxu0 0.0
      %748 = vmatmul.mubr.f32.gmra.mrb[0].mxu0 %v226
      %v749 = vpop.f32.mrb[0].mxu0
      %v750 = vadd.f32 %v213, %v749
      %v751 = vpop.f32.mrb[0].mxu0
      %752 = vdwg.mxu0
      %v753 = vmax.f32 %v735, 0.0
      %v754 = vmax.f32 %v740, 0.0
      %v755 = vmax.f32 %v745, 0.0
      %v756 = vmax.f32 %v750, 0.0
      %757 = vxpose.xlu0.b32.start [1/16] %v753, 128
      %758 = vxpose.xlu0.b32.cont [2/16] %v754, 128
      %759 = vxpose.xlu0.b32.cont [3/16] %v755, 128
      %760 = vxpose.xlu0.b32.cont [4/16] %v756, 128
      %761 = vxpose.xlu0.b32.cont [5/16] 0.0, 128
      %762 = vxpose.xlu0.b32.cont [6/16] 0.0, 128
      %763 = vxpose.xlu0.b32.cont [7/16] 0.0, 128
      %764 = vxpose.xlu0.b32.cont [8/16] 0.0, 128
      %765 = vxpose.xlu0.b32.cont [9/16] 0.0, 128
      %766 = vxpose.xlu0.b32.cont [10/16] 0.0, 128
      %767 = vxpose.xlu0.b32.cont [11/16] 0.0, 128
      %768 = vxpose.xlu0.b32.cont [12/16] 0.0, 128
      %769 = vxpose.xlu0.b32.cont [13/16] 0.0, 128
      %770 = vxpose.xlu0.b32.cont [14/16] 0.0, 128
      %771 = vxpose.xlu0.b32.cont [15/16] 0.0, 128
      %772 = vxpose.xlu0.b32.end [16/16] 0.0, 128
      %v773 = vpop.trf.xlu0
      %v774 = vpop.trf.xlu0
      %v775 = vpop.trf.xlu0
      %v776 = vpop.trf.xlu0
      %v777 = vpop.trf.xlu0
      %v778 = vpop.trf.xlu0
      %v779 = vpop.trf.xlu0
      %v780 = vpop.trf.xlu0
      %v781 = vpop.trf.xlu0
      %v782 = vpop.trf.xlu0
      %v783 = vpop.trf.xlu0
      %v784 = vpop.trf.xlu0
      %v785 = vpop.trf.xlu0
      %v786 = vpop.trf.xlu0
      %v787 = vpop.trf.xlu0
      %v788 = vpop.trf.xlu0
      %s789 = scalar_lea.vmem %s177, 384
      %790 = vst.msk [vmem:[%s789] sm:$0xff] %vm215, %v773
      %791 = vst.msk [vmem:[%s789 + $0x8] sm:$0xff] %vm215, %v774
      %792 = vst.msk [vmem:[%s789 + $0x10] sm:$0xff] %vm215, %v775
      %793 = vst.msk [vmem:[%s789 + $0x18] sm:$0xff] %vm215, %v776
      %794 = vst.msk [vmem:[%s789 + $0x20] sm:$0xff] %vm215, %v777
      %795 = vst.msk [vmem:[%s789 + $0x28] sm:$0xff] %vm215, %v778
      %796 = vst.msk [vmem:[%s789 + $0x30] sm:$0xff] %vm215, %v779
      %797 = vst.msk [vmem:[%s789 + $0x38] sm:$0xff] %vm215, %v780
      %798 = vst.msk [vmem:[%s789 + $0x40] sm:$0xff] %vm215, %v781
      %799 = vst.msk [vmem:[%s789 + $0x48] sm:$0xff] %vm215, %v782
      %800 = vst.msk [vmem:[%s789 + $0x50] sm:$0xff] %vm215, %v783
      %801 = vst.msk [vmem:[%s789 + $0x58] sm:$0xff] %vm215, %v784
      %802 = vst.msk [vmem:[%s789 + $0x60] sm:$0xff] %vm215, %v785
      %803 = vst.msk [vmem:[%s789 + $0x68] sm:$0xff] %vm215, %v786
      %804 = vst.msk [vmem:[%s789 + $0x70] sm:$0xff] %vm215, %v787
      %805 = vst.msk [vmem:[%s789 + $0x78] sm:$0xff] %vm215, %v788
      %s806 = smul.u32 4, %s14
      %p807 = scmp.lt.s32.totalorder %s806, 15
      %s808 = scalar_select %p807, %s806, 15
      %s809 = smul.addr %s808, 16
      %s810 = smul.addr %s809, 8
      %s811 = scalar_lea.vmem %s3, %s810
      // Predicated region
      $region33: #{transform_attention.9} parent=31 // pred_check
        %p812 = pneg %p100
      $region34: #{transform_attention.9} parent=31 // pred_check_branch
        %814 = sbr.rel (%p812) target = $region36
      $region35: #{transform_attention.9} parent=31 // pred_region
        %s815 = smul.u32 4, %s14
      $region36: #{transform_attention.9} parent=31 // pred_fallthru
        _
    $region32: #{transform_attention.9} parent=5 // pred_fallthru
      _
    %p816 = scmp.le.s32.totalorder 2, %s9
    // Predicated region
    $region37: #{transform_attention.9} parent=5 // pred_check
      %p817 = pneg %p816
    $region38: #{transform_attention.9} parent=5 // pred_check_branch
      %819 = sbr.rel (%p817) target = $region40
    $region39: #{transform_attention.9} parent=5 // pred_region
      %s820 = ssub.s32 %s9, 2
      // Predicated region
      $region41: #{transform_attention.9} parent=39 // pred_check
        %p821 = pneg %p106
      $region42: #{transform_attention.9} parent=39 // pred_check_branch
        %823 = sbr.rel (%p821) target = $region44
      $region43: #{transform_attention.9} parent=39 // pred_region
        %s824 = smul.u32 4, %s15
        %p825 = scmp.lt.s32.totalorder %s824, 15
        %s826 = scalar_select %p825, %s824, 15
        %s827 = smul.addr %s826, 16
        %s828 = smul.addr %s827, 8
        %s829 = scalar_lea.vmem %s3, %s828
      $region44: #{transform_attention.9} parent=39 // pred_fallthru
        _
    $region40: #{transform_attention.9} parent=5 // pred_fallthru
      _
  $region6: #{transform_attention.9} parent=0 // loop_footer
    %s13 = sadd.s32 1, %s9
  $region7: #{transform_attention.9} parent=0 // loop_footer_branch
    %8 = sbr.rel target = $region3
  $region8: #{transform_attention.9} parent=0 // loop_exit
    _

</llo_original>
